<compile_context>
chip_gen: v7x
topology: tpu7x:2x2x1
jax: 0.10.0
libtpu: 0.0.40
codegen_flags: <defaults>
</compile_context>

<pallas_src>
import jax
import jax.numpy as jnp
from jax.experimental import pallas as pl
from jax.experimental.pallas import tpu as pltpu

LANE = 128  # lane pad for every hidden-layer / matmul N dimension


def _round_up(n, m):
    return ((n + m - 1) // m) * m


def _make_mert_mlp_kernel(num_layers, num_outputs, batch):
    """Kernel for a fixed (static) number of hidden layers.

    refs layout:
      x_ref (TB, 25*F) bf16, y_ref (TB, O) bf16,
      aggw_ref (25*F, LANE) bf16, aggb_ref (1, LANE) f32,
      [w_i (LANE, LANE) bf16, b_i (1, LANE) f32] * num_layers,
      wout_ref (LANE, LANE) bf16, bout_ref (1, LANE) f32,
      logits_ref (TB, O) f32, bce_ref (TB, 1) f32
    """

    def kernel(*refs):
        x_ref, y_ref, aggw_ref, aggb_ref = refs[0:4]
        layer_refs = refs[4:4 + 2 * num_layers]
        wout_ref, bout_ref = refs[4 + 2 * num_layers: 6 + 2 * num_layers]
        logits_ref, bce_ref = refs[6 + 2 * num_layers: 8 + 2 * num_layers]

        # aggregator: Conv1d(25->1, k=1).squeeze() == x2d @ W_agg + b  (one MXU pass)
        x = x_ref[...]                                               # (TB, 25*F) bf16
        h = jnp.dot(x, aggw_ref[...],
                    preferred_element_type=jnp.float32) + aggb_ref[...]

        # nn.Dropout is identity at inference time.
        # TODO(synk): training-mode dropout (pltpu.prng_*) not implemented.

        for i in range(num_layers):
            w = layer_refs[2 * i][...]                               # (LANE, LANE) bf16
            b = layer_refs[2 * i + 1][...]                           # (1, LANE) f32
            h = jnp.dot(h.astype(w.dtype), w,
                        preferred_element_type=jnp.float32) + b
            h = jnp.maximum(h, 0.0)                                  # ReLU

        z = (jnp.dot(h.astype(wout_ref.dtype), wout_ref[...],
                     preferred_element_type=jnp.float32)
             + bout_ref[...])                                        # (TB, LANE) f32

        z_o = z[:, :num_outputs]                                     # real output cols
        logits_ref[...] = z_o                                        # narrow f32 store

        # BCE with logits, elementwise stable form, per-row partial sums.
        y = y_ref[...].astype(jnp.float32)                           # (TB, O)
        elt = jnp.maximum(z_o, 0.0) - z_o * y + jnp.log1p(jnp.exp(-jnp.abs(z_o)))

        # Mask ragged rows beyond the true batch (defensive: keeps partial sums
        # clean even when B % TB != 0 and the last x tile reads padding).
        tb = elt.shape[0]
        row = jax.lax.broadcasted_iota(jnp.int32, elt.shape, 0) + pl.program_id(0) * tb
        elt = jnp.where(row < batch, elt, 0.0)

        bce_ref[...] = jnp.sum(elt, axis=1, keepdims=True)           # (TB, 1)

    return kernel


def mert_mlp_forward(x, y, params, *, tb=256):
    """Aggregator + MLP + BCE loss in one batch-tiled pallas_call."""
    B, C, F = x.shape
    num_outputs = params["wout"].shape[1]
    num_layers = len(params["hidden"])
    CF = C * F
    P = LANE

    # Batch tile: multiple of 8 sublanes, no larger than the (rounded-up) batch.
    tb = _round_up(max(8, min(tb, _round_up(B, 8))), 8)
    n_tiles = pl.cdiv(B, tb)

    # ---- wrapper-side layout prep (cheap / one-time) ------------------------
    x2d = x.reshape(B, CF).astype(jnp.bfloat16)   # free reshape; bf16 halves HBM read
    y_in = y.astype(jnp.bfloat16)                 # 0/1 labels exact in bf16

    # structured aggregator weight: W_agg[c*F + f, f] = agg_w[c]
    # NOTE: W_agg is mostly structural zeros; fine at small F (MXU has slack),
    # but for large F restructure the aggregator as C VPU multiply-accumulates
    # to keep this resident block out of v7x's 64 MiB VMEM.
    agg_w = params["agg_w"][:, 0].astype(jnp.float32)                # (C,)
    eye_fp = jnp.eye(F, P, dtype=jnp.float32)                        # (F, P)
    w_agg = (agg_w[:, None, None] * eye_fp[None, :, :]).reshape(CF, P)
    w_agg = w_agg.astype(jnp.bfloat16)
    agg_b = jnp.zeros((1, P), jnp.float32).at[0, :F].set(
        params["agg_b"][0, 0].astype(jnp.float32))

    def pad_w(w):  # (din, dout) -> (P, P) bf16
        din, dout = w.shape
        return jnp.pad(w.astype(jnp.float32),
                       ((0, P - din), (0, P - dout))).astype(jnp.bfloat16)

    def pad_b(b):  # (1, d) -> (1, P) f32
        b = b.astype(jnp.float32).reshape(1, -1)
        return jnp.pad(b, ((0, 0), (0, P - b.shape[1])))

    args = [x2d, y_in, w_agg, agg_b]
    for w, b in params["hidden"]:
        args += [pad_w(w), pad_b(b)]
    args += [pad_w(params["wout"]), pad_b(params["bout"])]

    # ---- specs --------------------------------------------------------------
    def resident(shape):  # constant index map -> stays VMEM-resident across steps
        return pl.BlockSpec(shape, lambda i: (0, 0))

    in_specs = [
        pl.BlockSpec((tb, CF), lambda i: (i, 0)),            # x tile (bf16)
        pl.BlockSpec((tb, num_outputs), lambda i: (i, 0)),   # y tile (bf16, unpadded)
        resident((CF, P)),                                   # W_agg
        resident((1, P)),                                    # agg bias row
    ]
    for _ in range(num_layers):
        in_specs += [resident((P, P)), resident((1, P))]
    in_specs += [resident((P, P)), resident((1, P))]

    out_specs = (
        pl.BlockSpec((tb, num_outputs), lambda i: (i, 0)),   # logits (narrow f32)
        pl.BlockSpec((tb, 1), lambda i: (i, 0)),             # per-row BCE partial sums
    )
    out_shape = (
        jax.ShapeDtypeStruct((B, num_outputs), jnp.float32),
        jax.ShapeDtypeStruct((B, 1), jnp.float32),
    )

    # ---- VMEM budget + cost estimate ----------------------------------------
    weights_bytes = sum(int(a.size) * a.dtype.itemsize for a in args[2:])
    in_bytes = sum(int(a.size) * a.dtype.itemsize for a in args)
    out_bytes = B * num_outputs * 4 + B * 4
    vmem_need = (2 * (tb * CF * 2 + tb * num_outputs * 2          # x/y double buffers
                      + tb * num_outputs * 4 + tb * 4)            # output double buffers
                 + 2 * weights_bytes)                             # resident weights (x2 margin)
    vmem_limit = int(min(64 * 2**20, max(2 * vmem_need, 16 * 2**20)))

    matmul_flops = 2 * B * (CF * P + (num_layers + 1) * P * P)
    cost = pl.CostEstimate(
        flops=int(matmul_flops + 8 * B * P),
        transcendentals=int(2 * B * num_outputs),
        bytes_accessed=int(in_bytes + out_bytes),
    )

    kernel = _make_mert_mlp_kernel(num_layers, num_outputs, B)
    logits, bce_rows = pl.pallas_call(
        kernel,
        out_shape=out_shape,
        grid=(n_tiles,),
        in_specs=in_specs,
        out_specs=out_specs,
        compiler_params=pltpu.CompilerParams(
            dimension_semantics=("parallel",),
            vmem_limit_bytes=vmem_limit),
        cost_estimate=cost,
    )(*args)

    # global mean over the real B*num_outputs elements
    loss = jnp.sum(bce_rows[:, 0]) / (B * num_outputs)
    return logits, loss


def init_params(key, num_features, hidden_layer_sizes, num_outputs):
    """Deterministic synthetic parameters matching the PyTorch module's shapes."""
    n = len(hidden_layer_sizes)
    keys = jax.random.split(key, 4 + 2 * n)

    # Conv1d(25, 1, 1): weight (1, 25, 1) -> stored as (25, 1); bias (1,) -> (1, 1)
    agg_w = jax.random.normal(keys[0], (25, 1), jnp.float32) * 0.2
    agg_b = jax.random.normal(keys[1], (1, 1), jnp.float32) * 0.1

    hidden = []
    d = num_features
    for i, ld in enumerate(hidden_layer_sizes):
        # nn.Linear(d, ld): weight (ld, d) -> stored transposed as (d, ld)
        w = jax.random.normal(keys[2 + 2 * i], (d, ld), jnp.float32) * (1.0 / (d ** 0.5))
        b = jax.random.normal(keys[3 + 2 * i], (1, ld), jnp.float32) * 0.1
        hidden.append((w, b))
        d = ld

    wout = jax.random.normal(keys[2 + 2 * n], (d, num_outputs), jnp.float32) * (1.0 / (d ** 0.5))
    bout = jax.random.normal(keys[3 + 2 * n], (1, num_outputs), jnp.float32) * 0.1
    return {"agg_w": agg_w, "agg_b": agg_b, "hidden": hidden, "wout": wout, "bout": bout}


def reference_forward(x, y, params):
    """Pure-JAX f32 reference mirroring the PyTorch forward (eval mode)."""
    h = jnp.einsum("bcf,c->bf", x, params["agg_w"][:, 0],
                   precision=jax.lax.Precision.HIGHEST) + params["agg_b"][0, 0]
    for w, b in params["hidden"]:
        h = jnp.maximum(jnp.dot(h, w, precision=jax.lax.Precision.HIGHEST) + b, 0.0)
    z = jnp.dot(h, params["wout"], precision=jax.lax.Precision.HIGHEST) + params["bout"]
    loss = jnp.mean(jnp.maximum(z, 0.0) - z * y + jnp.log1p(jnp.exp(-jnp.abs(z))))
    return z, loss


if __name__ == "__main__":
    B = 512                      # 2 grid steps at tb=256 -> feeds both v7x TCs
    num_features = 32
    hidden_layer_sizes = (32, 16)
    num_outputs = 8

    key = jax.random.PRNGKey(0)
    kx, ky, kp = jax.random.split(key, 3)

    x = jax.random.normal(kx, (B, 25, num_features), dtype=jnp.float32)
    y = (jax.random.uniform(ky, (B, num_outputs)) > 0.5).astype(jnp.float32)

    params = init_params(kp, num_features, hidden_layer_sizes, num_outputs)

    logits, loss = mert_mlp_forward(x, y, params, tb=256)
    (logits, loss) = jax.block_until_ready((logits, loss))

    ref_logits, ref_loss = reference_forward(x, y, params)
    assert logits.shape == (B, num_outputs) and loss.shape == ()
    assert jnp.allclose(logits, ref_logits, atol=2.5e-2, rtol=2.5e-2), "logits mismatch"
    assert jnp.allclose(loss, ref_loss, atol=2.5e-2, rtol=2.5e-2), "loss mismatch"

    print("KERNEL_OK")
</pallas_src>

<mosaic_0001>
module attributes {stable_mosaic.version = 11 : i64} {
  func.func @kernel(%arg0: i32, %arg1: memref<256x800xbf16, #tpu.memory_space<vmem>>, %arg2: memref<256x8xbf16, #tpu.memory_space<vmem>>, %arg3: memref<800x128xbf16, #tpu.memory_space<vmem>>, %arg4: memref<1x128xf32, #tpu.memory_space<vmem>>, %arg5: memref<128x128xbf16, #tpu.memory_space<vmem>>, %arg6: memref<1x128xf32, #tpu.memory_space<vmem>>, %arg7: memref<128x128xbf16, #tpu.memory_space<vmem>>, %arg8: memref<1x128xf32, #tpu.memory_space<vmem>>, %arg9: memref<128x128xbf16, #tpu.memory_space<vmem>>, %arg10: memref<1x128xf32, #tpu.memory_space<vmem>>, %arg11: memref<256x8xf32, #tpu.memory_space<vmem>>, %arg12: memref<256x1xf32, #tpu.memory_space<vmem>>) attributes {dimension_semantics = [#tpu.dimension_semantics<parallel>], iteration_bounds = array<i64: 2>, scalar_prefetch = 0 : i64, scratch_operands = 0 : i64, tpu.core_type = #tpu.core_type<tc>, window_params = [{transform_indices = @transform_0, window_bounds = array<i64: 256, 800>}, {transform_indices = @transform_1, window_bounds = array<i64: 256, 8>}, {pipeline_mode = #tpu.pipeline_mode<synchronous>, transform_indices = @transform_2, window_bounds = array<i64: 800, 128>}, {pipeline_mode = #tpu.pipeline_mode<synchronous>, transform_indices = @transform_3, window_bounds = array<i64: 1, 128>}, {pipeline_mode = #tpu.pipeline_mode<synchronous>, transform_indices = @transform_4, window_bounds = array<i64: 128, 128>}, {pipeline_mode = #tpu.pipeline_mode<synchronous>, transform_indices = @transform_5, window_bounds = array<i64: 1, 128>}, {pipeline_mode = #tpu.pipeline_mode<synchronous>, transform_indices = @transform_6, window_bounds = array<i64: 128, 128>}, {pipeline_mode = #tpu.pipeline_mode<synchronous>, transform_indices = @transform_7, window_bounds = array<i64: 1, 128>}, {pipeline_mode = #tpu.pipeline_mode<synchronous>, transform_indices = @transform_8, window_bounds = array<i64: 128, 128>}, {pipeline_mode = #tpu.pipeline_mode<synchronous>, transform_indices = @transform_9, window_bounds = array<i64: 1, 128>}, {transform_indices = @transform_10, window_bounds = array<i64: 256, 8>}, {transform_indices = @transform_11, window_bounds = array<i64: 256, 1>}]} {
    %c0 = arith.constant 0 : index
    %c0_0 = arith.constant 0 : index
    %0 = vector.load %arg1[%c0, %c0_0] : memref<256x800xbf16, #tpu.memory_space<vmem>>, vector<256x800xbf16>
    %c0_1 = arith.constant 0 : index
    %c0_2 = arith.constant 0 : index
    %1 = vector.load %arg3[%c0_1, %c0_2] : memref<800x128xbf16, #tpu.memory_space<vmem>>, vector<800x128xbf16>
    %cst = arith.constant dense<0.000000e+00> : vector<256x128xf32>
    %2 = tpu.matmul %0, %1, %cst {dimension_numbers = #tpu.dot_dimension_numbers<[1], [0], [0], [1], [0, 0, 1, 1], [], []>} : vector<256x800xbf16>, vector<800x128xbf16>, vector<256x128xf32> -> vector<256x128xf32>
    %c0_3 = arith.constant 0 : index
    %c0_4 = arith.constant 0 : index
    %3 = vector.load %arg4[%c0_3, %c0_4] : memref<1x128xf32, #tpu.memory_space<vmem>>, vector<1x128xf32>
    %4 = vector.broadcast %3 : vector<1x128xf32> to vector<256x128xf32>
    %5 = arith.addf %2, %4 : vector<256x128xf32>
    %c0_5 = arith.constant 0 : index
    %c0_6 = arith.constant 0 : index
    %6 = vector.load %arg5[%c0_5, %c0_6] : memref<128x128xbf16, #tpu.memory_space<vmem>>, vector<128x128xbf16>
    %c0_7 = arith.constant 0 : index
    %c0_8 = arith.constant 0 : index
    %7 = vector.load %arg6[%c0_7, %c0_8] : memref<1x128xf32, #tpu.memory_space<vmem>>, vector<1x128xf32>
    %8 = arith.truncf %5 : vector<256x128xf32> to vector<256x128xbf16>
    %cst_9 = arith.constant dense<0.000000e+00> : vector<256x128xf32>
    %9 = tpu.matmul %8, %6, %cst_9 {dimension_numbers = #tpu.dot_dimension_numbers<[1], [0], [0], [1], [0, 0, 1, 1], [], []>} : vector<256x128xbf16>, vector<128x128xbf16>, vector<256x128xf32> -> vector<256x128xf32>
    %10 = vector.broadcast %7 : vector<1x128xf32> to vector<256x128xf32>
    %11 = arith.addf %9, %10 : vector<256x128xf32>
    %cst_10 = arith.constant 0.000000e+00 : f32
    %12 = vector.broadcast %cst_10 : f32 to vector<256x128xf32>
    %13 = arith.maximumf %11, %12 : vector<256x128xf32>
    %c0_11 = arith.constant 0 : index
    %c0_12 = arith.constant 0 : index
    %14 = vector.load %arg7[%c0_11, %c0_12] : memref<128x128xbf16, #tpu.memory_space<vmem>>, vector<128x128xbf16>
    %c0_13 = arith.constant 0 : index
    %c0_14 = arith.constant 0 : index
    %15 = vector.load %arg8[%c0_13, %c0_14] : memref<1x128xf32, #tpu.memory_space<vmem>>, vector<1x128xf32>
    %16 = arith.truncf %13 : vector<256x128xf32> to vector<256x128xbf16>
    %cst_15 = arith.constant dense<0.000000e+00> : vector<256x128xf32>
    %17 = tpu.matmul %16, %14, %cst_15 {dimension_numbers = #tpu.dot_dimension_numbers<[1], [0], [0], [1], [0, 0, 1, 1], [], []>} : vector<256x128xbf16>, vector<128x128xbf16>, vector<256x128xf32> -> vector<256x128xf32>
    %18 = vector.broadcast %15 : vector<1x128xf32> to vector<256x128xf32>
    %19 = arith.addf %17, %18 : vector<256x128xf32>
    %cst_16 = arith.constant 0.000000e+00 : f32
    %20 = vector.broadcast %cst_16 : f32 to vector<256x128xf32>
    %21 = arith.maximumf %19, %20 : vector<256x128xf32>
    %22 = arith.truncf %21 : vector<256x128xf32> to vector<256x128xbf16>
    %c0_17 = arith.constant 0 : index
    %c0_18 = arith.constant 0 : index
    %23 = vector.load %arg9[%c0_17, %c0_18] : memref<128x128xbf16, #tpu.memory_space<vmem>>, vector<128x128xbf16>
    %cst_19 = arith.constant dense<0.000000e+00> : vector<256x128xf32>
    %24 = tpu.matmul %22, %23, %cst_19 {dimension_numbers = #tpu.dot_dimension_numbers<[1], [0], [0], [1], [0, 0, 1, 1], [], []>} : vector<256x128xbf16>, vector<128x128xbf16>, vector<256x128xf32> -> vector<256x128xf32>
    %c0_20 = arith.constant 0 : index
    %c0_21 = arith.constant 0 : index
    %25 = vector.load %arg10[%c0_20, %c0_21] : memref<1x128xf32, #tpu.memory_space<vmem>>, vector<1x128xf32>
    %26 = vector.broadcast %25 : vector<1x128xf32> to vector<256x128xf32>
    %27 = arith.addf %24, %26 : vector<256x128xf32>
    %28 = vector.extract_strided_slice %27 {offsets = [0, 0], sizes = [256, 8], strides = [1, 1]} : vector<256x128xf32> to vector<256x8xf32>
    %c0_22 = arith.constant 0 : index
    %c0_23 = arith.constant 0 : index
    %29 = vector.load %arg11[%c0_22, %c0_23] : memref<256x8xf32, #tpu.memory_space<vmem>>, vector<256x8xf32>
    tpu.vector_store %arg11[%c0_22, %c0_23], %28 {strides = array<i32>} : memref<256x8xf32, #tpu.memory_space<vmem>>, vector<256x8xf32>,
    %c0_24 = arith.constant 0 : index
    %c0_25 = arith.constant 0 : index
    %30 = vector.load %arg2[%c0_24, %c0_25] : memref<256x8xbf16, #tpu.memory_space<vmem>>, vector<256x8xbf16>
    %31 = arith.extf %30 : vector<256x8xbf16> to vector<256x8xf32>
    %cst_26 = arith.constant 0.000000e+00 : f32
    %32 = vector.broadcast %cst_26 : f32 to vector<256x8xf32>
    %33 = arith.maximumf %28, %32 : vector<256x8xf32>
    %34 = arith.mulf %28, %31 : vector<256x8xf32>
    %35 = arith.subf %33, %34 : vector<256x8xf32>
    %36 = math.absf %28 : vector<256x8xf32>
    %cst_27 = arith.constant 0.000000e+00 : f32
    %37 = vector.broadcast %cst_27 : f32 to vector<256x8xf32>
    %38 = arith.subf %37, %36 : vector<256x8xf32>
    %39 = math.exp %38 : vector<256x8xf32>
    %40 = math.log1p %39 : vector<256x8xf32>
    %41 = arith.addf %35, %40 : vector<256x8xf32>
    %42 = tpu.iota {dimensions = array<i32: 0>} : vector<256x8xi32>
    %c256_i32 = arith.constant 256 : i32
    %43 = arith.muli %arg0, %c256_i32 : i32
    %44 = vector.broadcast %43 : i32 to vector<256x8xi32>
    %45 = arith.addi %42, %44 : vector<256x8xi32>
    %c512_i32 = arith.constant 512 : i32
    %46 = vector.broadcast %c512_i32 : i32 to vector<256x8xi32>
    %47 = arith.cmpi slt, %45, %46 : vector<256x8xi32>
    %cst_28 = arith.constant 0.000000e+00 : f32
    %48 = vector.broadcast %cst_28 : f32 to vector<256x8xf32>
    %49 = arith.select %47, %41, %48 : vector<256x8xi1>, vector<256x8xf32>
    %cst_29 = arith.constant dense<0.000000e+00> : vector<256xf32>
    %50 = vector.multi_reduction <add>, %49, %cst_29 [1] : vector<256x8xf32> to vector<256xf32>
    %51 = vector.shape_cast %50 : vector<256xf32> to vector<256x1xf32>
    %c0_30 = arith.constant 0 : index
    %c0_31 = arith.constant 0 : index
    %52 = vector.load %arg12[%c0_30, %c0_31] : memref<256x1xf32, #tpu.memory_space<vmem>>, vector<256x1xf32>
    tpu.vector_store %arg12[%c0_30, %c0_31], %51 {strides = array<i32>} : memref<256x1xf32, #tpu.memory_space<vmem>>, vector<256x1xf32>,
    return
  }
  func.func @transform_0(%arg0: i32) -> (i32, i32) {
    %c0_i32 = arith.constant 0 : i32
    %c0_i32_0 = arith.constant 0 : i32
    return %arg0, %c0_i32 : i32, i32
  }
  func.func @transform_1(%arg0: i32) -> (i32, i32) {
    %c0_i32 = arith.constant 0 : i32
    %c0_i32_0 = arith.constant 0 : i32
    return %arg0, %c0_i32 : i32, i32
  }
  func.func @transform_2(%arg0: i32) -> (i32, i32) {
    %c0_i32 = arith.constant 0 : i32
    %c0_i32_0 = arith.constant 0 : i32
    %c0_i32_1 = arith.constant 0 : i32
    return %c0_i32, %c0_i32_0 : i32, i32
  }
  func.func @transform_3(%arg0: i32) -> (i32, i32) {
    %c0_i32 = arith.constant 0 : i32
    %c0_i32_0 = arith.constant 0 : i32
    %c0_i32_1 = arith.constant 0 : i32
    return %c0_i32, %c0_i32_0 : i32, i32
  }
  func.func @transform_4(%arg0: i32) -> (i32, i32) {
    %c0_i32 = arith.constant 0 : i32
    %c0_i32_0 = arith.constant 0 : i32
    %c0_i32_1 = arith.constant 0 : i32
    return %c0_i32, %c0_i32_0 : i32, i32
  }
  func.func @transform_5(%arg0: i32) -> (i32, i32) {
    %c0_i32 = arith.constant 0 : i32
    %c0_i32_0 = arith.constant 0 : i32
    %c0_i32_1 = arith.constant 0 : i32
    return %c0_i32, %c0_i32_0 : i32, i32
  }
  func.func @transform_6(%arg0: i32) -> (i32, i32) {
    %c0_i32 = arith.constant 0 : i32
    %c0_i32_0 = arith.constant 0 : i32
    %c0_i32_1 = arith.constant 0 : i32
    return %c0_i32, %c0_i32_0 : i32, i32
  }
  func.func @transform_7(%arg0: i32) -> (i32, i32) {
    %c0_i32 = arith.constant 0 : i32
    %c0_i32_0 = arith.constant 0 : i32
    %c0_i32_1 = arith.constant 0 : i32
    return %c0_i32, %c0_i32_0 : i32, i32
  }
  func.func @transform_8(%arg0: i32) -> (i32, i32) {
    %c0_i32 = arith.constant 0 : i32
    %c0_i32_0 = arith.constant 0 : i32
    %c0_i32_1 = arith.constant 0 : i32
    return %c0_i32, %c0_i32_0 : i32, i32
  }
  func.func @transform_9(%arg0: i32) -> (i32, i32) {
    %c0_i32 = arith.constant 0 : i32
    %c0_i32_0 = arith.constant 0 : i32
    %c0_i32_1 = arith.constant 0 : i32
    return %c0_i32, %c0_i32_0 : i32, i32
  }
  func.func @transform_10(%arg0: i32) -> (i32, i32) {
    %c0_i32 = arith.constant 0 : i32
    %c0_i32_0 = arith.constant 0 : i32
    return %arg0, %c0_i32 : i32, i32
  }
  func.func @transform_11(%arg0: i32) -> (i32, i32) {
    %c0_i32 = arith.constant 0 : i32
    %c0_i32_0 = arith.constant 0 : i32
    return %arg0, %c0_i32 : i32, i32
  }
}

</mosaic_0001>

<llo_original>
// kernel: tpu_custom_call.1
$region0: #{tpu_custom_call.1}
  #allocation0 [shape = 'u32[]', space=smem, size = 0x4, offset = 0x4, fixed_abs, tag = 'smem constant byte address 0x4 - core index']
  #allocation1 [shape = 'u32[144,128]{1,0:T(1,128)}', space=vmem, size = 0x12000, scoped, tag = 'internal scratch']
  %s0 = inlined_call_operand.vmem [shape: bf16[512,800], index: 0, kind: input, shape index: {}]
  %s1 = inlined_call_operand.vmem [shape: bf16[512,8], index: 1, kind: input, shape index: {}]
  %s2 = inlined_call_operand.vmem [shape: bf16[800,128], index: 2, kind: input, shape index: {}]
  %s3 = inlined_call_operand.vmem [shape: f32[1,128], index: 3, kind: input, shape index: {}]
  %s4 = inlined_call_operand.vmem [shape: bf16[128,128], index: 4, kind: input, shape index: {}]
  %s5 = inlined_call_operand.vmem [shape: f32[1,128], index: 5, kind: input, shape index: {}]
  %s6 = inlined_call_operand.vmem [shape: bf16[128,128], index: 6, kind: input, shape index: {}]
  %s7 = inlined_call_operand.vmem [shape: f32[1,128], index: 7, kind: input, shape index: {}]
  %s8 = inlined_call_operand.vmem [shape: bf16[128,128], index: 8, kind: input, shape index: {}]
  %s9 = inlined_call_operand.vmem [shape: f32[1,128], index: 9, kind: input, shape index: {}]
  %s10 = inlined_call_operand.vmem [shape: f32[512,8], index: 10, kind: output, shape index: {0}]
  %s11 = inlined_call_operand.vmem [shape: f32[512,1], index: 11, kind: output, shape index: {1}]
  %12 = xla_tuple %s10, %s11
  %s13 = sld [smem:[#allocation0]]
  $region81: #{tpu_custom_call.1} parent=0
    _
  %s15 = ssub.s32 1, %s13
  %s16 = scalar_select 0, %s15, %s13
  loop: start=0, step=1, limit=4
  $region2: #{tpu_custom_call.1} parent=0 // loop_pre_header
    _
  $region3: #{tpu_custom_call.1} parent=0 // loop_header
    %s18 = sphi 0, %s22
    %p19 = scmp.ge.s32.totalorder %s18, 4
    %s28 = sphi 0, %s30
    %s31 = sphi 0, %s28
    %s32 = sphi 0, %s31
    %s48 = sphi 0, %s32
    %s54 = sphi 0, %s56
    %s57 = sphi 0, %s54
    %s58 = sphi 0, %s57
    %s74 = sphi 0, %s58
    %s78 = sphi 0, %s78
    %s80 = sphi 0, %s78
    %s81 = sphi 0, %s80
    %s95 = sphi 0, %s81
    %s99 = sphi 0, %s99
    %s101 = sphi 0, %s99
    %s102 = sphi 0, %s101
    %s116 = sphi 0, %s102
    %s120 = sphi 0, %s120
    %s122 = sphi 0, %s120
    %s123 = sphi 0, %s122
    %s137 = sphi 0, %s123
    %s141 = sphi 0, %s141
    %s143 = sphi 0, %s141
    %s144 = sphi 0, %s143
    %s158 = sphi 0, %s144
    %s162 = sphi 0, %s162
    %s164 = sphi 0, %s162
    %s165 = sphi 0, %s164
    %s179 = sphi 0, %s165
    %s183 = sphi 0, %s183
    %s185 = sphi 0, %s183
    %s186 = sphi 0, %s185
    %s200 = sphi 0, %s186
    %s204 = sphi 0, %s204
    %s206 = sphi 0, %s204
    %s207 = sphi 0, %s206
    %s221 = sphi 0, %s207
    %s225 = sphi 0, %s225
    %s227 = sphi 0, %s225
    %s228 = sphi 0, %s227
    %s242 = sphi 0, %s228
    %s248 = sphi 0, %s250
    %s251 = sphi 0, %s248
    %s252 = sphi 0, %s251
    %s268 = sphi 0, %s252
    %s274 = sphi 0, %s276
    %s277 = sphi 0, %s274
    %s278 = sphi 0, %s277
    %s294 = sphi 0, %s278
  $region4: #{tpu_custom_call.1} parent=0 // loop_header_branch
    %21 = sbr.rel (%p19) target = $region8
  $region5: #{tpu_custom_call.1} parent=0 // loop_body
    %s23 = ssub.s32 %s18, 1
    %s24 = ssub.s32 %s18, 2
    %s25 = sadd.s32 %s18, 1
    %s26 = ssub.s32 %s18, %s25
    %p27 = scmp.eq.s32.totalorder %s26, 0
    %s29 = sadd.s32 %s28, 1
    %s30 = scalar_select %p27, %s28, %s29
    %p33 = pneg %p27
    %p34 = scmp.eq.s32.totalorder %s18, 1
    %p35 = por %p33, %p34
    %p36 = scmp.ne.s32.totalorder %s28, %s31
    %p37 = scmp.eq.s32.totalorder %s18, 0
    %p38 = por %p36, %p37
    %p39 = scmp.ne.s32.totalorder %s28, %s31
    %p40 = scmp.eq.s32.totalorder %s23, 1
    %p41 = por %p39, %p40
    %p42 = scmp.ne.s32.totalorder %s31, %s32
    %p43 = scmp.eq.s32.totalorder %s23, 0
    %p44 = por %p42, %p43
    %p45 = scmp.ne.s32.totalorder %s31, %s32
    %p46 = scmp.eq.s32.totalorder %s24, 1
    %p47 = por %p45, %p46
    %p49 = scmp.ne.s32.totalorder %s32, %s48
    %p50 = scmp.eq.s32.totalorder %s24, 0
    %p51 = por %p49, %p50
    %s52 = ssub.s32 %s18, %s25
    %p53 = scmp.eq.s32.totalorder %s52, 0
    %s55 = sadd.s32 %s54, 1
    %s56 = scalar_select %p53, %s54, %s55
    %p59 = pneg %p53
    %p60 = scmp.eq.s32.totalorder %s18, 1
    %p61 = por %p59, %p60
    %p62 = scmp.ne.s32.totalorder %s54, %s57
    %p63 = scmp.eq.s32.totalorder %s18, 0
    %p64 = por %p62, %p63
    %p65 = scmp.ne.s32.totalorder %s54, %s57
    %p66 = scmp.eq.s32.totalorder %s23, 1
    %p67 = por %p65, %p66
    %p68 = scmp.ne.s32.totalorder %s57, %s58
    %p69 = scmp.eq.s32.totalorder %s23, 0
    %p70 = por %p68, %p69
    %p71 = scmp.ne.s32.totalorder %s57, %s58
    %p72 = scmp.eq.s32.totalorder %s24, 1
    %p73 = por %p71, %p72
    %p75 = scmp.ne.s32.totalorder %s58, %s74
    %p76 = scmp.eq.s32.totalorder %s24, 0
    %p77 = por %p75, %p76
    %s79 = sadd.s32 %s78, 1
    %p82 = scmp.eq.s32.totalorder %s18, 1
    %p83 = scmp.ne.s32.totalorder %s78, %s80
    %p84 = scmp.eq.s32.totalorder %s18, 0
    %p85 = por %p83, %p84
    %p86 = scmp.ne.s32.totalorder %s78, %s80
    %p87 = scmp.eq.s32.totalorder %s23, 1
    %p88 = por %p86, %p87
    %p89 = scmp.ne.s32.totalorder %s80, %s81
    %p90 = scmp.eq.s32.totalorder %s23, 0
    %p91 = por %p89, %p90
    %p92 = scmp.ne.s32.totalorder %s80, %s81
    %p93 = scmp.eq.s32.totalorder %s24, 1
    %p94 = por %p92, %p93
    %p96 = scmp.ne.s32.totalorder %s81, %s95
    %p97 = scmp.eq.s32.totalorder %s24, 0
    %p98 = por %p96, %p97
    %s100 = sadd.s32 %s99, 1
    %p103 = scmp.eq.s32.totalorder %s18, 1
    %p104 = scmp.ne.s32.totalorder %s99, %s101
    %p105 = scmp.eq.s32.totalorder %s18, 0
    %p106 = por %p104, %p105
    %p107 = scmp.ne.s32.totalorder %s99, %s101
    %p108 = scmp.eq.s32.totalorder %s23, 1
    %p109 = por %p107, %p108
    %p110 = scmp.ne.s32.totalorder %s101, %s102
    %p111 = scmp.eq.s32.totalorder %s23, 0
    %p112 = por %p110, %p111
    %p113 = scmp.ne.s32.totalorder %s101, %s102
    %p114 = scmp.eq.s32.totalorder %s24, 1
    %p115 = por %p113, %p114
    %p117 = scmp.ne.s32.totalorder %s102, %s116
    %p118 = scmp.eq.s32.totalorder %s24, 0
    %p119 = por %p117, %p118
    %s121 = sadd.s32 %s120, 1
    %p124 = scmp.eq.s32.totalorder %s18, 1
    %p125 = scmp.ne.s32.totalorder %s120, %s122
    %p126 = scmp.eq.s32.totalorder %s18, 0
    %p127 = por %p125, %p126
    %p128 = scmp.ne.s32.totalorder %s120, %s122
    %p129 = scmp.eq.s32.totalorder %s23, 1
    %p130 = por %p128, %p129
    %p131 = scmp.ne.s32.totalorder %s122, %s123
    %p132 = scmp.eq.s32.totalorder %s23, 0
    %p133 = por %p131, %p132
    %p134 = scmp.ne.s32.totalorder %s122, %s123
    %p135 = scmp.eq.s32.totalorder %s24, 1
    %p136 = por %p134, %p135
    %p138 = scmp.ne.s32.totalorder %s123, %s137
    %p139 = scmp.eq.s32.totalorder %s24, 0
    %p140 = por %p138, %p139
    %s142 = sadd.s32 %s141, 1
    %p145 = scmp.eq.s32.totalorder %s18, 1
    %p146 = scmp.ne.s32.totalorder %s141, %s143
    %p147 = scmp.eq.s32.totalorder %s18, 0
    %p148 = por %p146, %p147
    %p149 = scmp.ne.s32.totalorder %s141, %s143
    %p150 = scmp.eq.s32.totalorder %s23, 1
    %p151 = por %p149, %p150
    %p152 = scmp.ne.s32.totalorder %s143, %s144
    %p153 = scmp.eq.s32.totalorder %s23, 0
    %p154 = por %p152, %p153
    %p155 = scmp.ne.s32.totalorder %s143, %s144
    %p156 = scmp.eq.s32.totalorder %s24, 1
    %p157 = por %p155, %p156
    %p159 = scmp.ne.s32.totalorder %s144, %s158
    %p160 = scmp.eq.s32.totalorder %s24, 0
    %p161 = por %p159, %p160
    %s163 = sadd.s32 %s162, 1
    %p166 = scmp.eq.s32.totalorder %s18, 1
    %p167 = scmp.ne.s32.totalorder %s162, %s164
    %p168 = scmp.eq.s32.totalorder %s18, 0
    %p169 = por %p167, %p168
    %p170 = scmp.ne.s32.totalorder %s162, %s164
    %p171 = scmp.eq.s32.totalorder %s23, 1
    %p172 = por %p170, %p171
    %p173 = scmp.ne.s32.totalorder %s164, %s165
    %p174 = scmp.eq.s32.totalorder %s23, 0
    %p175 = por %p173, %p174
    %p176 = scmp.ne.s32.totalorder %s164, %s165
    %p177 = scmp.eq.s32.totalorder %s24, 1
    %p178 = por %p176, %p177
    %p180 = scmp.ne.s32.totalorder %s165, %s179
    %p181 = scmp.eq.s32.totalorder %s24, 0
    %p182 = por %p180, %p181
    %s184 = sadd.s32 %s183, 1
    %p187 = scmp.eq.s32.totalorder %s18, 1
    %p188 = scmp.ne.s32.totalorder %s183, %s185
    %p189 = scmp.eq.s32.totalorder %s18, 0
    %p190 = por %p188, %p189
    %p191 = scmp.ne.s32.totalorder %s183, %s185
    %p192 = scmp.eq.s32.totalorder %s23, 1
    %p193 = por %p191, %p192
    %p194 = scmp.ne.s32.totalorder %s185, %s186
    %p195 = scmp.eq.s32.totalorder %s23, 0
    %p196 = por %p194, %p195
    %p197 = scmp.ne.s32.totalorder %s185, %s186
    %p198 = scmp.eq.s32.totalorder %s24, 1
    %p199 = por %p197, %p198
    %p201 = scmp.ne.s32.totalorder %s186, %s200
    %p202 = scmp.eq.s32.totalorder %s24, 0
    %p203 = por %p201, %p202
    %s205 = sadd.s32 %s204, 1
    %p208 = scmp.eq.s32.totalorder %s18, 1
    %p209 = scmp.ne.s32.totalorder %s204, %s206
    %p210 = scmp.eq.s32.totalorder %s18, 0
    %p211 = por %p209, %p210
    %p212 = scmp.ne.s32.totalorder %s204, %s206
    %p213 = scmp.eq.s32.totalorder %s23, 1
    %p214 = por %p212, %p213
    %p215 = scmp.ne.s32.totalorder %s206, %s207
    %p216 = scmp.eq.s32.totalorder %s23, 0
    %p217 = por %p215, %p216
    %p218 = scmp.ne.s32.totalorder %s206, %s207
    %p219 = scmp.eq.s32.totalorder %s24, 1
    %p220 = por %p218, %p219
    %p222 = scmp.ne.s32.totalorder %s207, %s221
    %p223 = scmp.eq.s32.totalorder %s24, 0
    %p224 = por %p222, %p223
    %s226 = sadd.s32 %s225, 1
    %p229 = scmp.eq.s32.totalorder %s18, 1
    %p230 = scmp.ne.s32.totalorder %s225, %s227
    %p231 = scmp.eq.s32.totalorder %s18, 0
    %p232 = por %p230, %p231
    %p233 = scmp.ne.s32.totalorder %s225, %s227
    %p234 = scmp.eq.s32.totalorder %s23, 1
    %p235 = por %p233, %p234
    %p236 = scmp.ne.s32.totalorder %s227, %s228
    %p237 = scmp.eq.s32.totalorder %s23, 0
    %p238 = por %p236, %p237
    %p239 = scmp.ne.s32.totalorder %s227, %s228
    %p240 = scmp.eq.s32.totalorder %s24, 1
    %p241 = por %p239, %p240
    %p243 = scmp.ne.s32.totalorder %s228, %s242
    %p244 = scmp.eq.s32.totalorder %s24, 0
    %p245 = por %p243, %p244
    %s246 = ssub.s32 %s18, %s25
    %p247 = scmp.eq.s32.totalorder %s246, 0
    %s249 = sadd.s32 %s248, 1
    %s250 = scalar_select %p247, %s248, %s249
    %p253 = pneg %p247
    %p254 = scmp.eq.s32.totalorder %s18, 1
    %p255 = por %p253, %p254
    %p256 = scmp.ne.s32.totalorder %s248, %s251
    %p257 = scmp.eq.s32.totalorder %s18, 0
    %p258 = por %p256, %p257
    %p259 = scmp.ne.s32.totalorder %s248, %s251
    %p260 = scmp.eq.s32.totalorder %s23, 1
    %p261 = por %p259, %p260
    %p262 = scmp.ne.s32.totalorder %s251, %s252
    %p263 = scmp.eq.s32.totalorder %s23, 0
    %p264 = por %p262, %p263
    %p265 = scmp.ne.s32.totalorder %s251, %s252
    %p266 = scmp.eq.s32.totalorder %s24, 1
    %p267 = por %p265, %p266
    %p269 = scmp.ne.s32.totalorder %s252, %s268
    %p270 = scmp.eq.s32.totalorder %s24, 0
    %p271 = por %p269, %p270
    %s272 = ssub.s32 %s18, %s25
    %p273 = scmp.eq.s32.totalorder %s272, 0
    %s275 = sadd.s32 %s274, 1
    %s276 = scalar_select %p273, %s274, %s275
    %p279 = pneg %p273
    %p280 = scmp.eq.s32.totalorder %s18, 1
    %p281 = por %p279, %p280
    %p282 = scmp.ne.s32.totalorder %s274, %s277
    %p283 = scmp.eq.s32.totalorder %s18, 0
    %p284 = por %p282, %p283
    %p285 = scmp.ne.s32.totalorder %s274, %s277
    %p286 = scmp.eq.s32.totalorder %s23, 1
    %p287 = por %p285, %p286
    %p288 = scmp.ne.s32.totalorder %s277, %s278
    %p289 = scmp.eq.s32.totalorder %s23, 0
    %p290 = por %p288, %p289
    %p291 = scmp.ne.s32.totalorder %s277, %s278
    %p292 = scmp.eq.s32.totalorder %s24, 1
    %p293 = por %p291, %p292
    %p295 = scmp.ne.s32.totalorder %s278, %s294
    %p296 = scmp.eq.s32.totalorder %s24, 0
    %p297 = por %p295, %p296
    %p298 = scmp.le.s32.totalorder 1, %s18
    %p299 = scmp.lt.s32.totalorder %s18, 3
    %p300 = pnand %p298, %p299
    %p301 = pneg %p300
    // Predicated region
    $region9: #{tpu_custom_call.1} parent=5 // pred_check
      _
    $region10: #{tpu_custom_call.1} parent=5 // pred_check_branch
      %303 = sbr.rel (%p300) target = $region12
    $region11: #{tpu_custom_call.1} parent=5 // pred_region
      %s304 = ssub.s32 %s18, 1
      // Predicated region
      $region13: #{tpu_custom_call.1} parent=11 // pred_check
        %p305 = pneg %p91
      $region14: #{tpu_custom_call.1} parent=11 // pred_check_branch
        %307 = sbr.rel (%p305) target = $region16
      $region15: #{tpu_custom_call.1} parent=11 // pred_region
        _
      $region16: #{tpu_custom_call.1} parent=11 // pred_fallthru
        _
      // Predicated region
      $region17: #{tpu_custom_call.1} parent=11 // pred_check
        %p308 = pneg %p112
      $region18: #{tpu_custom_call.1} parent=11 // pred_check_branch
        %310 = sbr.rel (%p308) target = $region20
      $region19: #{tpu_custom_call.1} parent=11 // pred_region
        _
      $region20: #{tpu_custom_call.1} parent=11 // pred_fallthru
        _
      // Predicated region
      $region21: #{tpu_custom_call.1} parent=11 // pred_check
        %p311 = pneg %p133
      $region22: #{tpu_custom_call.1} parent=11 // pred_check_branch
        %313 = sbr.rel (%p311) target = $region24
      $region23: #{tpu_custom_call.1} parent=11 // pred_region
        _
      $region24: #{tpu_custom_call.1} parent=11 // pred_fallthru
        _
      // Predicated region
      $region25: #{tpu_custom_call.1} parent=11 // pred_check
        %p314 = pneg %p154
      $region26: #{tpu_custom_call.1} parent=11 // pred_check_branch
        %316 = sbr.rel (%p314) target = $region28
      $region27: #{tpu_custom_call.1} parent=11 // pred_region
        _
      $region28: #{tpu_custom_call.1} parent=11 // pred_fallthru
        _
      // Predicated region
      $region29: #{tpu_custom_call.1} parent=11 // pred_check
        %p317 = pneg %p175
      $region30: #{tpu_custom_call.1} parent=11 // pred_check_branch
        %319 = sbr.rel (%p317) target = $region32
      $region31: #{tpu_custom_call.1} parent=11 // pred_region
        _
      $region32: #{tpu_custom_call.1} parent=11 // pred_fallthru
        _
      // Predicated region
      $region33: #{tpu_custom_call.1} parent=11 // pred_check
        %p320 = pneg %p196
      $region34: #{tpu_custom_call.1} parent=11 // pred_check_branch
        %322 = sbr.rel (%p320) target = $region36
      $region35: #{tpu_custom_call.1} parent=11 // pred_region
        _
      $region36: #{tpu_custom_call.1} parent=11 // pred_fallthru
        _
      // Predicated region
      $region37: #{tpu_custom_call.1} parent=11 // pred_check
        %p323 = pneg %p217
      $region38: #{tpu_custom_call.1} parent=11 // pred_check_branch
        %325 = sbr.rel (%p323) target = $region40
      $region39: #{tpu_custom_call.1} parent=11 // pred_region
        _
      $region40: #{tpu_custom_call.1} parent=11 // pred_fallthru
        _
      // Predicated region
      $region41: #{tpu_custom_call.1} parent=11 // pred_check
        %p326 = pneg %p238
      $region42: #{tpu_custom_call.1} parent=11 // pred_check_branch
        %328 = sbr.rel (%p326) target = $region44
      $region43: #{tpu_custom_call.1} parent=11 // pred_region
        _
      $region44: #{tpu_custom_call.1} parent=11 // pred_fallthru
        _
    $region12: #{tpu_custom_call.1} parent=5 // pred_fallthru
      _
    %p329 = scmp.lt.s32.totalorder %s18, 2
    // Predicated region
    $region45: #{tpu_custom_call.1} parent=5 // pred_check
      %p330 = pneg %p329
    $region46: #{tpu_custom_call.1} parent=5 // pred_check_branch
      %332 = sbr.rel (%p330) target = $region48
    $region47: #{tpu_custom_call.1} parent=5 // pred_region
      // Predicated region
      $region49: #{tpu_custom_call.1} parent=47 // pred_check
        %p333 = pneg %p38
      $region50: #{tpu_custom_call.1} parent=47 // pred_check_branch
        %335 = sbr.rel (%p333) target = $region52
      $region51: #{tpu_custom_call.1} parent=47 // pred_region
        %s336 = smul.u32 32, %s18
        %p337 = scmp.lt.s32.totalorder %s336, 63
        %s338 = scalar_select %p337, %s336, 63
        %s339 = smul.addr %s338, 7
        %s340 = smul.addr %s339, 4
        %s341 = scalar_lea.vmem %s0, %s340
        %s342 = smul.u32 32, %s18
      $region52: #{tpu_custom_call.1} parent=47 // pred_fallthru
        _
      // Predicated region
      $region53: #{tpu_custom_call.1} parent=47 // pred_check
        %p343 = pneg %p64
      $region54: #{tpu_custom_call.1} parent=47 // pred_check_branch
        %345 = sbr.rel (%p343) target = $region56
      $region55: #{tpu_custom_call.1} parent=47 // pred_region
        %s346 = smul.u32 32, %s18
        %p347 = scmp.lt.s32.totalorder %s346, 63
        %s348 = scalar_select %p347, %s346, 63
        %s349 = smul.addr %s348, 4
        %s350 = scalar_lea.vmem %s1, %s349
        %s351 = smul.u32 32, %s18
      $region56: #{tpu_custom_call.1} parent=47 // pred_fallthru
        _
    $region48: #{tpu_custom_call.1} parent=5 // pred_fallthru
      _
    %p352 = scmp.le.s32.totalorder 1, %s18
    %p353 = scmp.lt.s32.totalorder %s18, 3
    %p354 = pnand %p352, %p353
    %p355 = pneg %p354
    // Predicated region
    $region57: #{tpu_custom_call.1} parent=5 // pred_check
      _
    $region58: #{tpu_custom_call.1} parent=5 // pred_check_branch
      %357 = sbr.rel (%p354) target = $region60
    $region59: #{tpu_custom_call.1} parent=5 // pred_region
      %s358 = ssub.s32 %s18, 1
      %s359 = smul.u32 32, %s23
      %p360 = scmp.lt.s32.totalorder %s359, 63
      %s361 = scalar_select %p360, %s359, 63
      %s362 = smul.addr %s361, 7
      %s363 = smul.addr %s362, 4
      %s364 = scalar_lea.vmem %s0, %s363
      %p365 = pneg %p44
      %p366 = pneg %p41
      %s367 = smul.u32 32, %s23
      %p368 = scmp.lt.s32.totalorder %s367, 63
      %s369 = scalar_select %p368, %s367, 63
      %s370 = smul.addr %s369, 4
      %s371 = scalar_lea.vmem %s1, %s370
      %p372 = pneg %p70
      %p373 = pneg %p67
      %p374 = pneg %p91
      %p375 = pneg %p88
      %p376 = pneg %p112
      %p377 = pneg %p109
      %p378 = pneg %p133
      %p379 = pneg %p130
      %p380 = pneg %p154
      %p381 = pneg %p151
      %p382 = pneg %p175
      %p383 = pneg %p172
      %p384 = pneg %p196
      %p385 = pneg %p193
      %p386 = pneg %p217
      %p387 = pneg %p214
      %p388 = pneg %p238
      %p389 = pneg %p235
      %p390 = pneg %p264
      %p391 = pneg %p261
      %s392 = smul.u32 32, %s23
      %p393 = scmp.lt.s32.totalorder %s392, 63
      %s394 = scalar_select %p393, %s392, 63
      %s395 = smul.addr %s394, 8
      %s396 = scalar_lea.vmem %s10, %s395
      %p397 = pneg %p290
      %p398 = pneg %p287
      %s399 = smul.u32 32, %s23
      %p400 = scmp.lt.s32.totalorder %s399, 63
      %s401 = scalar_select %p400, %s399, 63
      %s402 = smul.addr %s401, 8
      %s403 = scalar_lea.vmem %s11, %s402
      %s404 = smul.u32 32, %s23
      %p405 = scmp.lt.s32.totalorder %s404, 63
      %s406 = scalar_select %p405, %s404, 63
      %s407 = smul.addr %s406, 7
      %s408 = smul.addr %s407, 4
      %s409 = scalar_lea.vmem %s0, %s408
      %s410 = smul.u32 32, %s23
      %s411 = smul.u32 32, %s23
      %p412 = scmp.lt.s32.totalorder %s411, 63
      %s413 = scalar_select %p412, %s411, 63
      %s414 = smul.addr %s413, 4
      %s415 = scalar_lea.vmem %s1, %s414
      %s416 = smul.u32 32, %s23
      %s417 = smul.u32 32, %s23
      %p418 = scmp.lt.s32.totalorder %s417, 63
      %s419 = scalar_select %p418, %s417, 63
      %s420 = smul.addr %s419, 8
      %s421 = scalar_lea.vmem %s10, %s420
      %s422 = smul.u32 32, %s23
      %s423 = smul.u32 32, %s23
      %p424 = scmp.lt.s32.totalorder %s423, 63
      %s425 = scalar_select %p424, %s423, 63
      %s426 = smul.addr %s425, 8
      %s427 = scalar_lea.vmem %s11, %s426
      %s428 = smul.u32 32, %s23
      %v430 = vld [vmem:[%s409] sm:$0xff]
      %v431 = vld [vmem:[%s409 + $0x8] sm:$0xff]
      %v432 = vld [vmem:[%s409 + $0x10] sm:$0xff]
      %v433 = vld [vmem:[%s409 + $0x18] sm:$0xf]
      %v434 = vld [vmem:[%s409 + $0x1c] sm:$0xff]
      %v435 = vld [vmem:[%s409 + $0x24] sm:$0xff]
      %v436 = vld [vmem:[%s409 + $0x2c] sm:$0xff]
      %v437 = vld [vmem:[%s409 + $0x34] sm:$0xf]
      %v438 = vld [vmem:[%s409 + $0x38] sm:$0xff]
      %v439 = vld [vmem:[%s409 + $0x40] sm:$0xff]
      %v440 = vld [vmem:[%s409 + $0x48] sm:$0xff]
      %v441 = vld [vmem:[%s409 + $0x50] sm:$0xf]
      %v442 = vld [vmem:[%s409 + $0x54] sm:$0xff]
      %v443 = vld [vmem:[%s409 + $0x5c] sm:$0xff]
      %v444 = vld [vmem:[%s409 + $0x64] sm:$0xff]
      %v445 = vld [vmem:[%s409 + $0x6c] sm:$0xf]
      %v446 = vld [vmem:[%s409 + $0x70] sm:$0xff]
      %v447 = vld [vmem:[%s409 + $0x78] sm:$0xff]
      %v448 = vld [vmem:[%s409 + $0x80] sm:$0xff]
      %v449 = vld [vmem:[%s409 + $0x88] sm:$0xf]
      %v450 = vld [vmem:[%s409 + $0x8c] sm:$0xff]
      %v451 = vld [vmem:[%s409 + $0x94] sm:$0xff]
      %v452 = vld [vmem:[%s409 + $0x9c] sm:$0xff]
      %v453 = vld [vmem:[%s409 + $0xa4] sm:$0xf]
      %v454 = vld [vmem:[%s409 + $0xa8] sm:$0xff]
      %v455 = vld [vmem:[%s409 + $0xb0] sm:$0xff]
      %v456 = vld [vmem:[%s409 + $0xb8] sm:$0xff]
      %v457 = vld [vmem:[%s409 + $0xc0] sm:$0xf]
      %v458 = vld [vmem:[%s409 + $0xc4] sm:$0xff]
      %v459 = vld [vmem:[%s409 + $0xcc] sm:$0xff]
      %v460 = vld [vmem:[%s409 + $0xd4] sm:$0xff]
      %v461 = vld [vmem:[%s409 + $0xdc] sm:$0xf]
      %v462 = vld [vmem:[%s409 + $0xe0] sm:$0xff]
      %v463 = vld [vmem:[%s409 + $0xe8] sm:$0xff]
      %v464 = vld [vmem:[%s409 + $0xf0] sm:$0xff]
      %v465 = vld [vmem:[%s409 + $0xf8] sm:$0xf]
      %v466 = vld [vmem:[%s409 + $0xfc] sm:$0xff]
      %v467 = vld [vmem:[%s409 + $0x104] sm:$0xff]
      %v468 = vld [vmem:[%s409 + $0x10c] sm:$0xff]
      %v469 = vld [vmem:[%s409 + $0x114] sm:$0xf]
      %v470 = vld [vmem:[%s409 + $0x118] sm:$0xff]
      %v471 = vld [vmem:[%s409 + $0x120] sm:$0xff]
      %v472 = vld [vmem:[%s409 + $0x128] sm:$0xff]
      %v473 = vld [vmem:[%s409 + $0x130] sm:$0xf]
      %v474 = vld [vmem:[%s409 + $0x134] sm:$0xff]
      %v475 = vld [vmem:[%s409 + $0x13c] sm:$0xff]
      %v476 = vld [vmem:[%s409 + $0x144] sm:$0xff]
      %v477 = vld [vmem:[%s409 + $0x14c] sm:$0xf]
      %v478 = vld [vmem:[%s409 + $0x150] sm:$0xff]
      %v479 = vld [vmem:[%s409 + $0x158] sm:$0xff]
      %v480 = vld [vmem:[%s409 + $0x160] sm:$0xff]
      %v481 = vld [vmem:[%s409 + $0x168] sm:$0xf]
      %v482 = vld [vmem:[%s409 + $0x16c] sm:$0xff]
      %v483 = vld [vmem:[%s409 + $0x174] sm:$0xff]
      %v484 = vld [vmem:[%s409 + $0x17c] sm:$0xff]
      %v485 = vld [vmem:[%s409 + $0x184] sm:$0xf]
      %v486 = vld [vmem:[%s409 + $0x188] sm:$0xff]
      %v487 = vld [vmem:[%s409 + $0x190] sm:$0xff]
      %v488 = vld [vmem:[%s409 + $0x198] sm:$0xff]
      %v489 = vld [vmem:[%s409 + $0x1a0] sm:$0xf]
      %v490 = vld [vmem:[%s409 + $0x1a4] sm:$0xff]
      %v491 = vld [vmem:[%s409 + $0x1ac] sm:$0xff]
      %v492 = vld [vmem:[%s409 + $0x1b4] sm:$0xff]
      %v493 = vld [vmem:[%s409 + $0x1bc] sm:$0xf]
      %v494 = vld [vmem:[%s409 + $0x1c0] sm:$0xff]
      %v495 = vld [vmem:[%s409 + $0x1c8] sm:$0xff]
      %v496 = vld [vmem:[%s409 + $0x1d0] sm:$0xff]
      %v497 = vld [vmem:[%s409 + $0x1d8] sm:$0xf]
      %v498 = vld [vmem:[%s409 + $0x1dc] sm:$0xff]
      %v499 = vld [vmem:[%s409 + $0x1e4] sm:$0xff]
      %v500 = vld [vmem:[%s409 + $0x1ec] sm:$0xff]
      %v501 = vld [vmem:[%s409 + $0x1f4] sm:$0xf]
      %v502 = vld [vmem:[%s409 + $0x1f8] sm:$0xff]
      %v503 = vld [vmem:[%s409 + $0x200] sm:$0xff]
      %v504 = vld [vmem:[%s409 + $0x208] sm:$0xff]
      %v505 = vld [vmem:[%s409 + $0x210] sm:$0xf]
      %v506 = vld [vmem:[%s409 + $0x214] sm:$0xff]
      %v507 = vld [vmem:[%s409 + $0x21c] sm:$0xff]
      %v508 = vld [vmem:[%s409 + $0x224] sm:$0xff]
      %v509 = vld [vmem:[%s409 + $0x22c] sm:$0xf]
      %v510 = vld [vmem:[%s409 + $0x230] sm:$0xff]
      %v511 = vld [vmem:[%s409 + $0x238] sm:$0xff]
      %v512 = vld [vmem:[%s409 + $0x240] sm:$0xff]
      %v513 = vld [vmem:[%s409 + $0x248] sm:$0xf]
      %v514 = vld [vmem:[%s409 + $0x24c] sm:$0xff]
      %v515 = vld [vmem:[%s409 + $0x254] sm:$0xff]
      %v516 = vld [vmem:[%s409 + $0x25c] sm:$0xff]
      %v517 = vld [vmem:[%s409 + $0x264] sm:$0xf]
      %v518 = vld [vmem:[%s409 + $0x268] sm:$0xff]
      %v519 = vld [vmem:[%s409 + $0x270] sm:$0xff]
      %v520 = vld [vmem:[%s409 + $0x278] sm:$0xff]
      %v521 = vld [vmem:[%s409 + $0x280] sm:$0xf]
      %v522 = vld [vmem:[%s409 + $0x284] sm:$0xff]
      %v523 = vld [vmem:[%s409 + $0x28c] sm:$0xff]
      %v524 = vld [vmem:[%s409 + $0x294] sm:$0xff]
      %v525 = vld [vmem:[%s409 + $0x29c] sm:$0xf]
      %v526 = vld [vmem:[%s409 + $0x2a0] sm:$0xff]
      %v527 = vld [vmem:[%s409 + $0x2a8] sm:$0xff]
      %v528 = vld [vmem:[%s409 + $0x2b0] sm:$0xff]
      %v529 = vld [vmem:[%s409 + $0x2b8] sm:$0xf]
      %v530 = vld [vmem:[%s409 + $0x2bc] sm:$0xff]
      %v531 = vld [vmem:[%s409 + $0x2c4] sm:$0xff]
      %v532 = vld [vmem:[%s409 + $0x2cc] sm:$0xff]
      %v533 = vld [vmem:[%s409 + $0x2d4] sm:$0xf]
      %v534 = vld [vmem:[%s409 + $0x2d8] sm:$0xff]
      %v535 = vld [vmem:[%s409 + $0x2e0] sm:$0xff]
      %v536 = vld [vmem:[%s409 + $0x2e8] sm:$0xff]
      %v537 = vld [vmem:[%s409 + $0x2f0] sm:$0xf]
      %v538 = vld [vmem:[%s409 + $0x2f4] sm:$0xff]
      %v539 = vld [vmem:[%s409 + $0x2fc] sm:$0xff]
      %v540 = vld [vmem:[%s409 + $0x304] sm:$0xff]
      %v541 = vld [vmem:[%s409 + $0x30c] sm:$0xf]
      %v542 = vld [vmem:[%s409 + $0x310] sm:$0xff]
      %v543 = vld [vmem:[%s409 + $0x318] sm:$0xff]
      %v544 = vld [vmem:[%s409 + $0x320] sm:$0xff]
      %v545 = vld [vmem:[%s409 + $0x328] sm:$0xf]
      %v546 = vld [vmem:[%s409 + $0x32c] sm:$0xff]
      %v547 = vld [vmem:[%s409 + $0x334] sm:$0xff]
      %v548 = vld [vmem:[%s409 + $0x33c] sm:$0xff]
      %v549 = vld [vmem:[%s409 + $0x344] sm:$0xf]
      %v550 = vld [vmem:[%s409 + $0x348] sm:$0xff]
      %v551 = vld [vmem:[%s409 + $0x350] sm:$0xff]
      %v552 = vld [vmem:[%s409 + $0x358] sm:$0xff]
      %v553 = vld [vmem:[%s409 + $0x360] sm:$0xf]
      %v554 = vld [vmem:[%s409 + $0x364] sm:$0xff]
      %v555 = vld [vmem:[%s409 + $0x36c] sm:$0xff]
      %v556 = vld [vmem:[%s409 + $0x374] sm:$0xff]
      %v557 = vld [vmem:[%s409 + $0x37c] sm:$0xf]
      %v558 = vld [vmem:[%s2] sm:$0xf]
      %v559 = vld [vmem:[%s2 + $0x4] sm:$0xf]
      %v560 = vld [vmem:[%s2 + $0x8] sm:$0xf]
      %v561 = vld [vmem:[%s2 + $0xc] sm:$0xf]
      %v562 = vld [vmem:[%s2 + $0x10] sm:$0xf]
      %v563 = vld [vmem:[%s2 + $0x14] sm:$0xf]
      %v564 = vld [vmem:[%s2 + $0x18] sm:$0xf]
      %v565 = vld [vmem:[%s2 + $0x1c] sm:$0xf]
      %v566 = vld [vmem:[%s2 + $0x20] sm:$0xf]
      %v567 = vld [vmem:[%s2 + $0x24] sm:$0xf]
      %v568 = vld [vmem:[%s2 + $0x28] sm:$0xf]
      %v569 = vld [vmem:[%s2 + $0x2c] sm:$0xf]
      %v570 = vld [vmem:[%s2 + $0x30] sm:$0xf]
      %v571 = vld [vmem:[%s2 + $0x34] sm:$0xf]
      %v572 = vld [vmem:[%s2 + $0x38] sm:$0xf]
      %v573 = vld [vmem:[%s2 + $0x3c] sm:$0xf]
      %v574 = vld [vmem:[%s2 + $0x40] sm:$0xf]
      %v575 = vld [vmem:[%s2 + $0x44] sm:$0xf]
      %v576 = vld [vmem:[%s2 + $0x48] sm:$0xf]
      %v577 = vld [vmem:[%s2 + $0x4c] sm:$0xf]
      %v578 = vld [vmem:[%s2 + $0x50] sm:$0xf]
      %v579 = vld [vmem:[%s2 + $0x54] sm:$0xf]
      %v580 = vld [vmem:[%s2 + $0x58] sm:$0xf]
      %v581 = vld [vmem:[%s2 + $0x5c] sm:$0xf]
      %v582 = vld [vmem:[%s2 + $0x60] sm:$0xf]
      %v583 = vld [vmem:[%s2 + $0x64] sm:$0xf]
      %v584 = vld [vmem:[%s2 + $0x68] sm:$0xf]
      %v585 = vld [vmem:[%s2 + $0x6c] sm:$0xf]
      %v586 = vld [vmem:[%s2 + $0x70] sm:$0xf]
      %v587 = vld [vmem:[%s2 + $0x74] sm:$0xf]
      %v588 = vld [vmem:[%s2 + $0x78] sm:$0xf]
      %v589 = vld [vmem:[%s2 + $0x7c] sm:$0xf]
      %v590 = vld [vmem:[%s2 + $0x80] sm:$0xf]
      %v591 = vld [vmem:[%s2 + $0x84] sm:$0xf]
      %v592 = vld [vmem:[%s2 + $0x88] sm:$0xf]
      %v593 = vld [vmem:[%s2 + $0x8c] sm:$0xf]
      %v594 = vld [vmem:[%s2 + $0x90] sm:$0xf]
      %v595 = vld [vmem:[%s2 + $0x94] sm:$0xf]
      %v596 = vld [vmem:[%s2 + $0x98] sm:$0xf]
      %v597 = vld [vmem:[%s2 + $0x9c] sm:$0xf]
      %v598 = vld [vmem:[%s2 + $0xa0] sm:$0xf]
      %v599 = vld [vmem:[%s2 + $0xa4] sm:$0xf]
      %v600 = vld [vmem:[%s2 + $0xa8] sm:$0xf]
      %v601 = vld [vmem:[%s2 + $0xac] sm:$0xf]
      %v602 = vld [vmem:[%s2 + $0xb0] sm:$0xf]
      %v603 = vld [vmem:[%s2 + $0xb4] sm:$0xf]
      %v604 = vld [vmem:[%s2 + $0xb8] sm:$0xf]
      %v605 = vld [vmem:[%s2 + $0xbc] sm:$0xf]
      %v606 = vld [vmem:[%s2 + $0xc0] sm:$0xf]
      %v607 = vld [vmem:[%s2 + $0xc4] sm:$0xf]
      %v608 = vld [vmem:[%s2 + $0xc8] sm:$0xf]
      %v609 = vld [vmem:[%s2 + $0xcc] sm:$0xf]
      %v610 = vld [vmem:[%s2 + $0xd0] sm:$0xf]
      %v611 = vld [vmem:[%s2 + $0xd4] sm:$0xf]
      %v612 = vld [vmem:[%s2 + $0xd8] sm:$0xf]
      %v613 = vld [vmem:[%s2 + $0xdc] sm:$0xf]
      %v614 = vld [vmem:[%s2 + $0xe0] sm:$0xf]
      %v615 = vld [vmem:[%s2 + $0xe4] sm:$0xf]
      %v616 = vld [vmem:[%s2 + $0xe8] sm:$0xf]
      %v617 = vld [vmem:[%s2 + $0xec] sm:$0xf]
      %v618 = vld [vmem:[%s2 + $0xf0] sm:$0xf]
      %v619 = vld [vmem:[%s2 + $0xf4] sm:$0xf]
      %v620 = vld [vmem:[%s2 + $0xf8] sm:$0xf]
      %v621 = vld [vmem:[%s2 + $0xfc] sm:$0xf]
      %v622 = vld [vmem:[%s2 + $0x100] sm:$0xf]
      %v623 = vld [vmem:[%s2 + $0x104] sm:$0xf]
      %v624 = vld [vmem:[%s2 + $0x108] sm:$0xf]
      %v625 = vld [vmem:[%s2 + $0x10c] sm:$0xf]
      %v626 = vld [vmem:[%s2 + $0x110] sm:$0xf]
      %v627 = vld [vmem:[%s2 + $0x114] sm:$0xf]
      %v628 = vld [vmem:[%s2 + $0x118] sm:$0xf]
      %v629 = vld [vmem:[%s2 + $0x11c] sm:$0xf]
      %v630 = vld [vmem:[%s2 + $0x120] sm:$0xf]
      %v631 = vld [vmem:[%s2 + $0x124] sm:$0xf]
      %v632 = vld [vmem:[%s2 + $0x128] sm:$0xf]
      %v633 = vld [vmem:[%s2 + $0x12c] sm:$0xf]
      %v634 = vld [vmem:[%s2 + $0x130] sm:$0xf]
      %v635 = vld [vmem:[%s2 + $0x134] sm:$0xf]
      %v636 = vld [vmem:[%s2 + $0x138] sm:$0xf]
      %v637 = vld [vmem:[%s2 + $0x13c] sm:$0xf]
      %v638 = vld [vmem:[%s2 + $0x140] sm:$0xf]
      %v639 = vld [vmem:[%s2 + $0x144] sm:$0xf]
      %v640 = vld [vmem:[%s2 + $0x148] sm:$0xf]
      %v641 = vld [vmem:[%s2 + $0x14c] sm:$0xf]
      %v642 = vld [vmem:[%s2 + $0x150] sm:$0xf]
      %v643 = vld [vmem:[%s2 + $0x154] sm:$0xf]
      %v644 = vld [vmem:[%s2 + $0x158] sm:$0xf]
      %v645 = vld [vmem:[%s2 + $0x15c] sm:$0xf]
      %v646 = vld [vmem:[%s2 + $0x160] sm:$0xf]
      %v647 = vld [vmem:[%s2 + $0x164] sm:$0xf]
      %v648 = vld [vmem:[%s2 + $0x168] sm:$0xf]
      %v649 = vld [vmem:[%s2 + $0x16c] sm:$0xf]
      %v650 = vld [vmem:[%s2 + $0x170] sm:$0xf]
      %v651 = vld [vmem:[%s2 + $0x174] sm:$0xf]
      %v652 = vld [vmem:[%s2 + $0x178] sm:$0xf]
      %v653 = vld [vmem:[%s2 + $0x17c] sm:$0xf]
      %v654 = vld [vmem:[%s2 + $0x180] sm:$0xf]
      %v655 = vld [vmem:[%s2 + $0x184] sm:$0xf]
      %v656 = vld [vmem:[%s2 + $0x188] sm:$0xf]
      %v657 = vld [vmem:[%s2 + $0x18c] sm:$0xf]
      %v658 = vld [vmem:[%s3] sm:$0x1]
      %v660 = vlaneseq
      %v661 = vshrl.u32 %v660, 7
      %v662 = vsub.s32 0, %v661
      %v663 = vrot.slane %v658, %v662
      %v793 = vunpack.c.l.b16 %v430
      %v794 = vunpack.c.h.b16 %v430
      %v795 = vunpack.c.l.b16 %v431
      %v796 = vunpack.c.h.b16 %v431
      %v797 = vunpack.c.l.b16 %v432
      %v798 = vunpack.c.h.b16 %v432
      %v799 = vunpack.c.l.b16 %v433
      %v800 = vunpack.c.l.b16 %v434
      %v801 = vunpack.c.h.b16 %v434
      %v802 = vunpack.c.l.b16 %v435
      %v803 = vunpack.c.h.b16 %v435
      %v804 = vunpack.c.l.b16 %v436
      %v805 = vunpack.c.h.b16 %v436
      %v806 = vunpack.c.l.b16 %v437
      %v807 = vunpack.c.l.b16 %v438
      %v808 = vunpack.c.h.b16 %v438
      %v809 = vunpack.c.l.b16 %v439
      %v810 = vunpack.c.h.b16 %v439
      %v811 = vunpack.c.l.b16 %v440
      %v812 = vunpack.c.h.b16 %v440
      %v813 = vunpack.c.l.b16 %v441
      %v814 = vunpack.c.l.b16 %v442
      %v815 = vunpack.c.h.b16 %v442
      %v816 = vunpack.c.l.b16 %v443
      %v817 = vunpack.c.h.b16 %v443
      %v818 = vunpack.c.l.b16 %v444
      %v819 = vunpack.c.h.b16 %v444
      %v820 = vunpack.c.l.b16 %v445
      %v821 = vunpack.c.l.b16 %v446
      %v822 = vunpack.c.h.b16 %v446
      %v823 = vunpack.c.l.b16 %v447
      %v824 = vunpack.c.h.b16 %v447
      %v825 = vunpack.c.l.b16 %v448
      %v826 = vunpack.c.h.b16 %v448
      %v827 = vunpack.c.l.b16 %v449
      %v828 = vunpack.c.l.b16 %v450
      %v829 = vunpack.c.h.b16 %v450
      %v830 = vunpack.c.l.b16 %v451
      %v831 = vunpack.c.h.b16 %v451
      %v832 = vunpack.c.l.b16 %v452
      %v833 = vunpack.c.h.b16 %v452
      %v834 = vunpack.c.l.b16 %v453
      %v835 = vunpack.c.l.b16 %v454
      %v836 = vunpack.c.h.b16 %v454
      %v837 = vunpack.c.l.b16 %v455
      %v838 = vunpack.c.h.b16 %v455
      %v839 = vunpack.c.l.b16 %v456
      %v840 = vunpack.c.h.b16 %v456
      %v841 = vunpack.c.l.b16 %v457
      %v842 = vunpack.c.l.b16 %v458
      %v843 = vunpack.c.h.b16 %v458
      %v844 = vunpack.c.l.b16 %v459
      %v845 = vunpack.c.h.b16 %v459
      %v846 = vunpack.c.l.b16 %v460
      %v847 = vunpack.c.h.b16 %v460
      %v848 = vunpack.c.l.b16 %v461
      %v849 = vunpack.c.l.b16 %v462
      %v850 = vunpack.c.h.b16 %v462
      %v851 = vunpack.c.l.b16 %v463
      %v852 = vunpack.c.h.b16 %v463
      %v853 = vunpack.c.l.b16 %v464
      %v854 = vunpack.c.h.b16 %v464
      %v855 = vunpack.c.l.b16 %v465
      %v856 = vunpack.c.l.b16 %v466
      %v857 = vunpack.c.h.b16 %v466
      %v858 = vunpack.c.l.b16 %v467
      %v859 = vunpack.c.h.b16 %v467
      %v860 = vunpack.c.l.b16 %v468
      %v861 = vunpack.c.h.b16 %v468
      %v862 = vunpack.c.l.b16 %v469
      %v863 = vunpack.c.l.b16 %v470
      %v864 = vunpack.c.h.b16 %v470
      %v865 = vunpack.c.l.b16 %v471
      %v866 = vunpack.c.h.b16 %v471
      %v867 = vunpack.c.l.b16 %v472
      %v868 = vunpack.c.h.b16 %v472
      %v869 = vunpack.c.l.b16 %v473
      %v870 = vunpack.c.l.b16 %v474
      %v871 = vunpack.c.h.b16 %v474
      %v872 = vunpack.c.l.b16 %v475
      %v873 = vunpack.c.h.b16 %v475
      %v874 = vunpack.c.l.b16 %v476
      %v875 = vunpack.c.h.b16 %v476
      %v876 = vunpack.c.l.b16 %v477
      %v877 = vunpack.c.l.b16 %v478
      %v878 = vunpack.c.h.b16 %v478
      %v879 = vunpack.c.l.b16 %v479
      %v880 = vunpack.c.h.b16 %v479
      %v881 = vunpack.c.l.b16 %v480
      %v882 = vunpack.c.h.b16 %v480
      %v883 = vunpack.c.l.b16 %v481
      %v884 = vunpack.c.l.b16 %v482
      %v885 = vunpack.c.h.b16 %v482
      %v886 = vunpack.c.l.b16 %v483
      %v887 = vunpack.c.h.b16 %v483
      %v888 = vunpack.c.l.b16 %v484
      %v889 = vunpack.c.h.b16 %v484
      %v890 = vunpack.c.l.b16 %v485
      %v891 = vunpack.c.l.b16 %v486
      %v892 = vunpack.c.h.b16 %v486
      %v893 = vunpack.c.l.b16 %v487
      %v894 = vunpack.c.h.b16 %v487
      %v895 = vunpack.c.l.b16 %v488
      %v896 = vunpack.c.h.b16 %v488
      %v897 = vunpack.c.l.b16 %v489
      %v898 = vunpack.c.l.b16 %v490
      %v899 = vunpack.c.h.b16 %v490
      %v900 = vunpack.c.l.b16 %v491
      %v901 = vunpack.c.h.b16 %v491
      %v902 = vunpack.c.l.b16 %v492
      %v903 = vunpack.c.h.b16 %v492
      %v904 = vunpack.c.l.b16 %v493
      %v905 = vunpack.c.l.b16 %v494
      %v906 = vunpack.c.h.b16 %v494
      %v907 = vunpack.c.l.b16 %v495
      %v908 = vunpack.c.h.b16 %v495
      %v909 = vunpack.c.l.b16 %v496
      %v910 = vunpack.c.h.b16 %v496
      %v911 = vunpack.c.l.b16 %v497
      %v912 = vunpack.c.l.b16 %v498
      %v913 = vunpack.c.h.b16 %v498
      %v914 = vunpack.c.l.b16 %v499
      %v915 = vunpack.c.h.b16 %v499
      %v916 = vunpack.c.l.b16 %v500
      %v917 = vunpack.c.h.b16 %v500
      %v918 = vunpack.c.l.b16 %v501
      %v919 = vunpack.c.l.b16 %v502
      %v920 = vunpack.c.h.b16 %v502
      %v921 = vunpack.c.l.b16 %v503
      %v922 = vunpack.c.h.b16 %v503
      %v923 = vunpack.c.l.b16 %v504
      %v924 = vunpack.c.h.b16 %v504
      %v925 = vunpack.c.l.b16 %v505
      %v926 = vunpack.c.l.b16 %v506
      %v927 = vunpack.c.h.b16 %v506
      %v928 = vunpack.c.l.b16 %v507
      %v929 = vunpack.c.h.b16 %v507
      %v930 = vunpack.c.l.b16 %v508
      %v931 = vunpack.c.h.b16 %v508
      %v932 = vunpack.c.l.b16 %v509
      %v933 = vunpack.c.l.b16 %v510
      %v934 = vunpack.c.h.b16 %v510
      %v935 = vunpack.c.l.b16 %v511
      %v936 = vunpack.c.h.b16 %v511
      %v937 = vunpack.c.l.b16 %v512
      %v938 = vunpack.c.h.b16 %v512
      %v939 = vunpack.c.l.b16 %v513
      %v940 = vunpack.c.l.b16 %v514
      %v941 = vunpack.c.h.b16 %v514
      %v942 = vunpack.c.l.b16 %v515
      %v943 = vunpack.c.h.b16 %v515
      %v944 = vunpack.c.l.b16 %v516
      %v945 = vunpack.c.h.b16 %v516
      %v946 = vunpack.c.l.b16 %v517
      %v947 = vunpack.c.l.b16 %v518
      %v948 = vunpack.c.h.b16 %v518
      %v949 = vunpack.c.l.b16 %v519
      %v950 = vunpack.c.h.b16 %v519
      %v951 = vunpack.c.l.b16 %v520
      %v952 = vunpack.c.h.b16 %v520
      %v953 = vunpack.c.l.b16 %v521
      %v954 = vunpack.c.l.b16 %v522
      %v955 = vunpack.c.h.b16 %v522
      %v956 = vunpack.c.l.b16 %v523
      %v957 = vunpack.c.h.b16 %v523
      %v958 = vunpack.c.l.b16 %v524
      %v959 = vunpack.c.h.b16 %v524
      %v960 = vunpack.c.l.b16 %v525
      %v961 = vunpack.c.l.b16 %v526
      %v962 = vunpack.c.h.b16 %v526
      %v963 = vunpack.c.l.b16 %v527
      %v964 = vunpack.c.h.b16 %v527
      %v965 = vunpack.c.l.b16 %v528
      %v966 = vunpack.c.h.b16 %v528
      %v967 = vunpack.c.l.b16 %v529
      %v968 = vunpack.c.l.b16 %v530
      %v969 = vunpack.c.h.b16 %v530
      %v970 = vunpack.c.l.b16 %v531
      %v971 = vunpack.c.h.b16 %v531
      %v972 = vunpack.c.l.b16 %v532
      %v973 = vunpack.c.h.b16 %v532
      %v974 = vunpack.c.l.b16 %v533
      %v975 = vunpack.c.l.b16 %v534
      %v976 = vunpack.c.h.b16 %v534
      %v977 = vunpack.c.l.b16 %v535
      %v978 = vunpack.c.h.b16 %v535
      %v979 = vunpack.c.l.b16 %v536
      %v980 = vunpack.c.h.b16 %v536
      %v981 = vunpack.c.l.b16 %v537
      %v982 = vunpack.c.l.b16 %v538
      %v983 = vunpack.c.h.b16 %v538
      %v984 = vunpack.c.l.b16 %v539
      %v985 = vunpack.c.h.b16 %v539
      %v986 = vunpack.c.l.b16 %v540
      %v987 = vunpack.c.h.b16 %v540
      %v988 = vunpack.c.l.b16 %v541
      %v989 = vunpack.c.l.b16 %v542
      %v990 = vunpack.c.h.b16 %v542
      %v991 = vunpack.c.l.b16 %v543
      %v992 = vunpack.c.h.b16 %v543
      %v993 = vunpack.c.l.b16 %v544
      %v994 = vunpack.c.h.b16 %v544
      %v995 = vunpack.c.l.b16 %v545
      %v996 = vunpack.c.l.b16 %v546
      %v997 = vunpack.c.h.b16 %v546
      %v998 = vunpack.c.l.b16 %v547
      %v999 = vunpack.c.h.b16 %v547
      %v1000 = vunpack.c.l.b16 %v548
      %v1001 = vunpack.c.h.b16 %v548
      %v1002 = vunpack.c.l.b16 %v549
      %v1003 = vunpack.c.l.b16 %v550
      %v1004 = vunpack.c.h.b16 %v550
      %v1005 = vunpack.c.l.b16 %v551
      %v1006 = vunpack.c.h.b16 %v551
      %v1007 = vunpack.c.l.b16 %v552
      %v1008 = vunpack.c.h.b16 %v552
      %v1009 = vunpack.c.l.b16 %v553
      %v1010 = vunpack.c.l.b16 %v554
      %v1011 = vunpack.c.h.b16 %v554
      %v1012 = vunpack.c.l.b16 %v555
      %v1013 = vunpack.c.h.b16 %v555
      %v1014 = vunpack.c.l.b16 %v556
      %v1015 = vunpack.c.h.b16 %v556
      %v1016 = vunpack.c.l.b16 %v557
      %v1017 = vpack.c.b16 %v800, %v793
      %v1018 = vpack.c.b16 %v801, %v794
      %v1019 = vpack.c.b16 %v802, %v795
      %v1020 = vpack.c.b16 %v803, %v796
      %v1021 = vpack.c.b16 %v804, %v797
      %v1022 = vpack.c.b16 %v805, %v798
      %v1023 = vpack.c.b16 %v806, %v799
      %v1024 = vpack.c.b16 %v814, %v807
      %v1025 = vpack.c.b16 %v815, %v808
      %v1026 = vpack.c.b16 %v816, %v809
      %v1027 = vpack.c.b16 %v817, %v810
      %v1028 = vpack.c.b16 %v818, %v811
      %v1029 = vpack.c.b16 %v819, %v812
      %v1030 = vpack.c.b16 %v820, %v813
      %v1031 = vpack.c.b16 %v828, %v821
      %v1032 = vpack.c.b16 %v829, %v822
      %v1033 = vpack.c.b16 %v830, %v823
      %v1034 = vpack.c.b16 %v831, %v824
      %v1035 = vpack.c.b16 %v832, %v825
      %v1036 = vpack.c.b16 %v833, %v826
      %v1037 = vpack.c.b16 %v834, %v827
      %v1038 = vpack.c.b16 %v842, %v835
      %v1039 = vpack.c.b16 %v843, %v836
      %v1040 = vpack.c.b16 %v844, %v837
      %v1041 = vpack.c.b16 %v845, %v838
      %v1042 = vpack.c.b16 %v846, %v839
      %v1043 = vpack.c.b16 %v847, %v840
      %v1044 = vpack.c.b16 %v848, %v841
      %v1045 = vpack.c.b16 %v856, %v849
      %v1046 = vpack.c.b16 %v857, %v850
      %v1047 = vpack.c.b16 %v858, %v851
      %v1048 = vpack.c.b16 %v859, %v852
      %v1049 = vpack.c.b16 %v860, %v853
      %v1050 = vpack.c.b16 %v861, %v854
      %v1051 = vpack.c.b16 %v862, %v855
      %v1052 = vpack.c.b16 %v870, %v863
      %v1053 = vpack.c.b16 %v871, %v864
      %v1054 = vpack.c.b16 %v872, %v865
      %v1055 = vpack.c.b16 %v873, %v866
      %v1056 = vpack.c.b16 %v874, %v867
      %v1057 = vpack.c.b16 %v875, %v868
      %v1058 = vpack.c.b16 %v876, %v869
      %v1059 = vpack.c.b16 %v884, %v877
      %v1060 = vpack.c.b16 %v885, %v878
      %v1061 = vpack.c.b16 %v886, %v879
      %v1062 = vpack.c.b16 %v887, %v880
      %v1063 = vpack.c.b16 %v888, %v881
      %v1064 = vpack.c.b16 %v889, %v882
      %v1065 = vpack.c.b16 %v890, %v883
      %v1066 = vpack.c.b16 %v898, %v891
      %v1067 = vpack.c.b16 %v899, %v892
      %v1068 = vpack.c.b16 %v900, %v893
      %v1069 = vpack.c.b16 %v901, %v894
      %v1070 = vpack.c.b16 %v902, %v895
      %v1071 = vpack.c.b16 %v903, %v896
      %v1072 = vpack.c.b16 %v904, %v897
      %v1073 = vpack.c.b16 %v912, %v905
      %v1074 = vpack.c.b16 %v913, %v906
      %v1075 = vpack.c.b16 %v914, %v907
      %v1076 = vpack.c.b16 %v915, %v908
      %v1077 = vpack.c.b16 %v916, %v909
      %v1078 = vpack.c.b16 %v917, %v910
      %v1079 = vpack.c.b16 %v918, %v911
      %v1080 = vpack.c.b16 %v926, %v919
      %v1081 = vpack.c.b16 %v927, %v920
      %v1082 = vpack.c.b16 %v928, %v921
      %v1083 = vpack.c.b16 %v929, %v922
      %v1084 = vpack.c.b16 %v930, %v923
      %v1085 = vpack.c.b16 %v931, %v924
      %v1086 = vpack.c.b16 %v932, %v925
      %v1087 = vpack.c.b16 %v940, %v933
      %v1088 = vpack.c.b16 %v941, %v934
      %v1089 = vpack.c.b16 %v942, %v935
      %v1090 = vpack.c.b16 %v943, %v936
      %v1091 = vpack.c.b16 %v944, %v937
      %v1092 = vpack.c.b16 %v945, %v938
      %v1093 = vpack.c.b16 %v946, %v939
      %v1094 = vpack.c.b16 %v954, %v947
      %v1095 = vpack.c.b16 %v955, %v948
      %v1096 = vpack.c.b16 %v956, %v949
      %v1097 = vpack.c.b16 %v957, %v950
      %v1098 = vpack.c.b16 %v958, %v951
      %v1099 = vpack.c.b16 %v959, %v952
      %v1100 = vpack.c.b16 %v960, %v953
      %v1101 = vpack.c.b16 %v968, %v961
      %v1102 = vpack.c.b16 %v969, %v962
      %v1103 = vpack.c.b16 %v970, %v963
      %v1104 = vpack.c.b16 %v971, %v964
      %v1105 = vpack.c.b16 %v972, %v965
      %v1106 = vpack.c.b16 %v973, %v966
      %v1107 = vpack.c.b16 %v974, %v967
      %v1108 = vpack.c.b16 %v982, %v975
      %v1109 = vpack.c.b16 %v983, %v976
      %v1110 = vpack.c.b16 %v984, %v977
      %v1111 = vpack.c.b16 %v985, %v978
      %v1112 = vpack.c.b16 %v986, %v979
      %v1113 = vpack.c.b16 %v987, %v980
      %v1114 = vpack.c.b16 %v988, %v981
      %v1115 = vpack.c.b16 %v996, %v989
      %v1116 = vpack.c.b16 %v997, %v990
      %v1117 = vpack.c.b16 %v998, %v991
      %v1118 = vpack.c.b16 %v999, %v992
      %v1119 = vpack.c.b16 %v1000, %v993
      %v1120 = vpack.c.b16 %v1001, %v994
      %v1121 = vpack.c.b16 %v1002, %v995
      %v1122 = vpack.c.b16 %v1010, %v1003
      %v1123 = vpack.c.b16 %v1011, %v1004
      %v1124 = vpack.c.b16 %v1012, %v1005
      %v1125 = vpack.c.b16 %v1013, %v1006
      %v1126 = vpack.c.b16 %v1014, %v1007
      %v1127 = vpack.c.b16 %v1015, %v1008
      %v1128 = vpack.c.b16 %v1016, %v1009
      %v1325 = vunpack.c.l.b16 %v558
      %v1326 = vunpack.c.l.b16 %v559
      %v1327 = vunpack.c.l.b16 %v560
      %v1328 = vunpack.c.l.b16 %v561
      %v1329 = vunpack.c.l.b16 %v562
      %v1330 = vunpack.c.l.b16 %v563
      %v1331 = vunpack.c.l.b16 %v564
      %v1332 = vunpack.c.l.b16 %v565
      %v1333 = vunpack.c.l.b16 %v566
      %v1334 = vunpack.c.l.b16 %v567
      %v1335 = vunpack.c.l.b16 %v568
      %v1336 = vunpack.c.l.b16 %v569
      %v1337 = vunpack.c.l.b16 %v570
      %v1338 = vunpack.c.l.b16 %v571
      %v1339 = vunpack.c.l.b16 %v572
      %v1340 = vunpack.c.l.b16 %v573
      %v1341 = vunpack.c.l.b16 %v574
      %v1342 = vunpack.c.l.b16 %v575
      %v1343 = vunpack.c.l.b16 %v576
      %v1344 = vunpack.c.l.b16 %v577
      %v1345 = vunpack.c.l.b16 %v578
      %v1346 = vunpack.c.l.b16 %v579
      %v1347 = vunpack.c.l.b16 %v580
      %v1348 = vunpack.c.l.b16 %v581
      %v1349 = vunpack.c.l.b16 %v582
      %v1350 = vunpack.c.l.b16 %v583
      %v1351 = vunpack.c.l.b16 %v584
      %v1352 = vunpack.c.l.b16 %v585
      %v1353 = vunpack.c.l.b16 %v586
      %v1354 = vunpack.c.l.b16 %v587
      %v1355 = vunpack.c.l.b16 %v588
      %v1356 = vunpack.c.l.b16 %v589
      %v1357 = vunpack.c.l.b16 %v590
      %v1358 = vunpack.c.l.b16 %v591
      %v1359 = vunpack.c.l.b16 %v592
      %v1360 = vunpack.c.l.b16 %v593
      %v1361 = vunpack.c.l.b16 %v594
      %v1362 = vunpack.c.l.b16 %v595
      %v1363 = vunpack.c.l.b16 %v596
      %v1364 = vunpack.c.l.b16 %v597
      %v1365 = vunpack.c.l.b16 %v598
      %v1366 = vunpack.c.l.b16 %v599
      %v1367 = vunpack.c.l.b16 %v600
      %v1368 = vunpack.c.l.b16 %v601
      %v1369 = vunpack.c.l.b16 %v602
      %v1370 = vunpack.c.l.b16 %v603
      %v1371 = vunpack.c.l.b16 %v604
      %v1372 = vunpack.c.l.b16 %v605
      %v1373 = vunpack.c.l.b16 %v606
      %v1374 = vunpack.c.l.b16 %v607
      %v1375 = vunpack.c.l.b16 %v608
      %v1376 = vunpack.c.l.b16 %v609
      %v1377 = vunpack.c.l.b16 %v610
      %v1378 = vunpack.c.l.b16 %v611
      %v1379 = vunpack.c.l.b16 %v612
      %v1380 = vunpack.c.l.b16 %v613
      %v1381 = vunpack.c.l.b16 %v614
      %v1382 = vunpack.c.l.b16 %v615
      %v1383 = vunpack.c.l.b16 %v616
      %v1384 = vunpack.c.l.b16 %v617
      %v1385 = vunpack.c.l.b16 %v618
      %v1386 = vunpack.c.l.b16 %v619
      %v1387 = vunpack.c.l.b16 %v620
      %v1388 = vunpack.c.l.b16 %v621
      %v1389 = vunpack.c.l.b16 %v622
      %v1390 = vunpack.c.l.b16 %v623
      %v1391 = vunpack.c.l.b16 %v624
      %v1392 = vunpack.c.l.b16 %v625
      %v1393 = vunpack.c.l.b16 %v626
      %v1394 = vunpack.c.l.b16 %v627
      %v1395 = vunpack.c.l.b16 %v628
      %v1396 = vunpack.c.l.b16 %v629
      %v1397 = vunpack.c.l.b16 %v630
      %v1398 = vunpack.c.l.b16 %v631
      %v1399 = vunpack.c.l.b16 %v632
      %v1400 = vunpack.c.l.b16 %v633
      %v1401 = vunpack.c.l.b16 %v634
      %v1402 = vunpack.c.l.b16 %v635
      %v1403 = vunpack.c.l.b16 %v636
      %v1404 = vunpack.c.l.b16 %v637
      %v1405 = vunpack.c.l.b16 %v638
      %v1406 = vunpack.c.l.b16 %v639
      %v1407 = vunpack.c.l.b16 %v640
      %v1408 = vunpack.c.l.b16 %v641
      %v1409 = vunpack.c.l.b16 %v642
      %v1410 = vunpack.c.l.b16 %v643
      %v1411 = vunpack.c.l.b16 %v644
      %v1412 = vunpack.c.l.b16 %v645
      %v1413 = vunpack.c.l.b16 %v646
      %v1414 = vunpack.c.l.b16 %v647
      %v1415 = vunpack.c.l.b16 %v648
      %v1416 = vunpack.c.l.b16 %v649
      %v1417 = vunpack.c.l.b16 %v650
      %v1418 = vunpack.c.l.b16 %v651
      %v1419 = vunpack.c.l.b16 %v652
      %v1420 = vunpack.c.l.b16 %v653
      %v1421 = vunpack.c.l.b16 %v654
      %v1422 = vunpack.c.l.b16 %v655
      %v1423 = vunpack.c.l.b16 %v656
      %v1424 = vunpack.c.l.b16 %v657
      %v1425 = vpack.c.b16 %v1326, %v1325
      %v1426 = vpack.c.b16 %v1328, %v1327
      %v1427 = vpack.c.b16 %v1330, %v1329
      %v1428 = vpack.c.b16 %v1332, %v1331
      %v1429 = vpack.c.b16 %v1334, %v1333
      %v1430 = vpack.c.b16 %v1336, %v1335
      %v1431 = vpack.c.b16 %v1338, %v1337
      %v1432 = vpack.c.b16 %v1340, %v1339
      %v1433 = vpack.c.b16 %v1342, %v1341
      %v1434 = vpack.c.b16 %v1344, %v1343
      %v1435 = vpack.c.b16 %v1346, %v1345
      %v1436 = vpack.c.b16 %v1348, %v1347
      %v1437 = vpack.c.b16 %v1350, %v1349
      %v1438 = vpack.c.b16 %v1352, %v1351
      %v1439 = vpack.c.b16 %v1354, %v1353
      %v1440 = vpack.c.b16 %v1356, %v1355
      %v1441 = vpack.c.b16 %v1358, %v1357
      %v1442 = vpack.c.b16 %v1360, %v1359
      %v1443 = vpack.c.b16 %v1362, %v1361
      %v1444 = vpack.c.b16 %v1364, %v1363
      %v1445 = vpack.c.b16 %v1366, %v1365
      %v1446 = vpack.c.b16 %v1368, %v1367
      %v1447 = vpack.c.b16 %v1370, %v1369
      %v1448 = vpack.c.b16 %v1372, %v1371
      %v1449 = vpack.c.b16 %v1374, %v1373
      %v1450 = vpack.c.b16 %v1376, %v1375
      %v1451 = vpack.c.b16 %v1378, %v1377
      %v1452 = vpack.c.b16 %v1380, %v1379
      %v1453 = vpack.c.b16 %v1382, %v1381
      %v1454 = vpack.c.b16 %v1384, %v1383
      %v1455 = vpack.c.b16 %v1386, %v1385
      %v1456 = vpack.c.b16 %v1388, %v1387
      %v1457 = vpack.c.b16 %v1390, %v1389
      %v1458 = vpack.c.b16 %v1392, %v1391
      %v1459 = vpack.c.b16 %v1394, %v1393
      %v1460 = vpack.c.b16 %v1396, %v1395
      %v1461 = vpack.c.b16 %v1398, %v1397
      %v1462 = vpack.c.b16 %v1400, %v1399
      %v1463 = vpack.c.b16 %v1402, %v1401
      %v1464 = vpack.c.b16 %v1404, %v1403
      %v1465 = vpack.c.b16 %v1406, %v1405
      %v1466 = vpack.c.b16 %v1408, %v1407
      %v1467 = vpack.c.b16 %v1410, %v1409
      %v1468 = vpack.c.b16 %v1412, %v1411
      %v1469 = vpack.c.b16 %v1414, %v1413
      %v1470 = vpack.c.b16 %v1416, %v1415
      %v1471 = vpack.c.b16 %v1418, %v1417
      %v1472 = vpack.c.b16 %v1420, %v1419
      %v1473 = vpack.c.b16 %v1422, %v1421
      %v1474 = vpack.c.b16 %v1424, %v1423
      %vm1525 = vcmask 261120
      %v1527 = vsel %vm1525, %v1023, 0
      %v1530 = vsel %vm1525, %v1030, 0
      %v1533 = vsel %vm1525, %v1037, 0
      %v1536 = vsel %vm1525, %v1044, 0
      %v1539 = vsel %vm1525, %v1051, 0
      %v1542 = vsel %vm1525, %v1058, 0
      %v1545 = vsel %vm1525, %v1065, 0
      %v1548 = vsel %vm1525, %v1072, 0
      %v1551 = vsel %vm1525, %v1079, 0
      %v1554 = vsel %vm1525, %v1086, 0
      %v1557 = vsel %vm1525, %v1093, 0
      %v1560 = vsel %vm1525, %v1100, 0
      %v1563 = vsel %vm1525, %v1107, 0
      %v1566 = vsel %vm1525, %v1114, 0
      %v1569 = vsel %vm1525, %v1121, 0
      %v1572 = vsel %vm1525, %v1128, 0
      %1574 = vmatprep.subr.bf16.mxu0 0
      %1575 = vmatpush1.bf16.msra.mxu0 %v1425
      %1576 = vmatprep.subr.bf16.mxu0 0
      %1577 = vmatpush1.bf16.msra.mxu0 %v1426
      %1578 = vmatprep.subr.bf16.mxu0 0
      %1579 = vmatpush1.bf16.msra.mxu0 %v1427
      %1580 = vmatprep.subr.bf16.mxu0 0
      %1581 = vmatpush1.bf16.msra.mxu0 %v1428
      %1582 = vmatprep.subr.bf16.mxu0 0
      %1583 = vmatpush1.bf16.msra.mxu0 %v1429
      %1584 = vmatprep.subr.bf16.mxu0 0
      %1585 = vmatpush1.bf16.msra.mxu0 %v1430
      %1586 = vmatprep.subr.bf16.mxu0 0
      %1587 = vmatpush1.bf16.msra.mxu0 %v1431
      %1588 = vmatprep.subr.bf16.mxu0 0
      %1589 = vmatpush1.bf16.msra.mxu0 %v1432
      %1590 = vmatprep.subr.bf16.mxu0 0
      %1591 = vmatpush1.bf16.msra.mxu0 %v1433
      %1592 = vmatprep.subr.bf16.mxu0 0
      %1593 = vmatpush1.bf16.msra.mxu0 %v1434
      %1594 = vmatprep.subr.bf16.mxu0 0
      %1595 = vmatpush1.bf16.msra.mxu0 %v1435
      %1596 = vmatprep.subr.bf16.mxu0 0
      %1597 = vmatpush1.bf16.msra.mxu0 %v1436
      %1598 = vmatprep.subr.bf16.mxu0 0
      %1599 = vmatpush1.bf16.msra.mxu0 %v1437
      %1600 = vmatprep.subr.bf16.mxu0 0
      %1601 = vmatpush1.bf16.msra.mxu0 %v1438
      %1602 = vmatprep.subr.bf16.mxu0 0
      %1603 = vmatpush1.bf16.msra.mxu0 %v1439
      %1604 = vmatprep.subr.bf16.mxu0 0
      %1605 = vmatpush1.bf16.msra.mxu0 %v1440
      %1606 = vmatprep.mubr.bf16.mxu0 %v1018
      %1607 = vmatmul.mubr.bf16.gmra.mrb[0].mxu0 %v1017
      %v1608 = vpop.f32.mrb[0].mxu0
      %v1609 = vadd.f32 %v663, %v1608
      %v1610 = vpop.f32.mrb[0].mxu0
      %v1611 = vpop.f32.mrb[0].mxu0
      %v1612 = vadd.f32 %v663, %v1611
      %v1613 = vpop.f32.mrb[0].mxu0
      %1614 = vmatprep.mubr.bf16.mxu0 %v1025
      %1615 = vmatmul.mubr.bf16.gmra.mrb[0].mxu0 %v1024
      %v1616 = vpop.f32.mrb[0].mxu0
      %v1617 = vadd.f32 %v663, %v1616
      %v1618 = vpop.f32.mrb[0].mxu0
      %v1619 = vpop.f32.mrb[0].mxu0
      %v1620 = vadd.f32 %v663, %v1619
      %v1621 = vpop.f32.mrb[0].mxu0
      %1622 = vmatprep.mubr.bf16.mxu0 %v1032
      %1623 = vmatmul.mubr.bf16.gmra.mrb[0].mxu0 %v1031
      %v1624 = vpop.f32.mrb[0].mxu0
      %v1625 = vadd.f32 %v663, %v1624
      %v1626 = vpop.f32.mrb[0].mxu0
      %v1627 = vpop.f32.mrb[0].mxu0
      %v1628 = vadd.f32 %v663, %v1627
      %v1629 = vpop.f32.mrb[0].mxu0
      %1630 = vmatprep.mubr.bf16.mxu0 %v1039
      %1631 = vmatmul.mubr.bf16.gmra.mrb[0].mxu0 %v1038
      %v1632 = vpop.f32.mrb[0].mxu0
      %v1633 = vadd.f32 %v663, %v1632
      %v1634 = vpop.f32.mrb[0].mxu0
      %v1635 = vpop.f32.mrb[0].mxu0
      %v1636 = vadd.f32 %v663, %v1635
      %v1637 = vpop.f32.mrb[0].mxu0
      %1638 = vmatprep.mubr.bf16.mxu0 %v1046
      %1639 = vmatmul.mubr.bf16.gmra.mrb[0].mxu0 %v1045
      %v1640 = vpop.f32.mrb[0].mxu0
      %v1641 = vadd.f32 %v663, %v1640
      %v1642 = vpop.f32.mrb[0].mxu0
      %v1643 = vpop.f32.mrb[0].mxu0
      %v1644 = vadd.f32 %v663, %v1643
      %v1645 = vpop.f32.mrb[0].mxu0
      %1646 = vmatprep.mubr.bf16.mxu0 %v1053
      %1647 = vmatmul.mubr.bf16.gmra.mrb[0].mxu0 %v1052
      %v1648 = vpop.f32.mrb[0].mxu0
      %v1649 = vadd.f32 %v663, %v1648
      %v1650 = vpop.f32.mrb[0].mxu0
      %v1651 = vpop.f32.mrb[0].mxu0
      %v1652 = vadd.f32 %v663, %v1651
      %v1653 = vpop.f32.mrb[0].mxu0
      %1654 = vmatprep.mubr.bf16.mxu0 %v1060
      %1655 = vmatmul.mubr.bf16.gmra.mrb[0].mxu0 %v1059
      %v1656 = vpop.f32.mrb[0].mxu0
      %v1657 = vadd.f32 %v663, %v1656
      %v1658 = vpop.f32.mrb[0].mxu0
      %v1659 = vpop.f32.mrb[0].mxu0
      %v1660 = vadd.f32 %v663, %v1659
      %v1661 = vpop.f32.mrb[0].mxu0
      %1662 = vmatprep.mubr.bf16.mxu0 %v1067
      %1663 = vmatmul.mubr.bf16.gmra.mrb[0].mxu0 %v1066
      %v1664 = vpop.f32.mrb[0].mxu0
      %v1665 = vadd.f32 %v663, %v1664
      %v1666 = vpop.f32.mrb[0].mxu0
      %v1667 = vpop.f32.mrb[0].mxu0
      %v1668 = vadd.f32 %v663, %v1667
      %v1669 = vpop.f32.mrb[0].mxu0
      %1670 = vmatprep.mubr.bf16.mxu0 %v1074
      %1671 = vmatmul.mubr.bf16.gmra.mrb[0].mxu0 %v1073
      %v1672 = vpop.f32.mrb[0].mxu0
      %v1673 = vadd.f32 %v663, %v1672
      %v1674 = vpop.f32.mrb[0].mxu0
      %v1675 = vpop.f32.mrb[0].mxu0
      %v1676 = vadd.f32 %v663, %v1675
      %v1677 = vpop.f32.mrb[0].mxu0
      %1678 = vmatprep.mubr.bf16.mxu0 %v1081
      %1679 = vmatmul.mubr.bf16.gmra.mrb[0].mxu0 %v1080
      %v1680 = vpop.f32.mrb[0].mxu0
      %v1681 = vadd.f32 %v663, %v1680
      %v1682 = vpop.f32.mrb[0].mxu0
      %v1683 = vpop.f32.mrb[0].mxu0
      %v1684 = vadd.f32 %v663, %v1683
      %v1685 = vpop.f32.mrb[0].mxu0
      %1686 = vmatprep.mubr.bf16.mxu0 %v1088
      %1687 = vmatmul.mubr.bf16.gmra.mrb[0].mxu0 %v1087
      %v1688 = vpop.f32.mrb[0].mxu0
      %v1689 = vadd.f32 %v663, %v1688
      %v1690 = vpop.f32.mrb[0].mxu0
      %v1691 = vpop.f32.mrb[0].mxu0
      %v1692 = vadd.f32 %v663, %v1691
      %v1693 = vpop.f32.mrb[0].mxu0
      %1694 = vmatprep.mubr.bf16.mxu0 %v1095
      %1695 = vmatmul.mubr.bf16.gmra.mrb[0].mxu0 %v1094
      %v1696 = vpop.f32.mrb[0].mxu0
      %v1697 = vadd.f32 %v663, %v1696
      %v1698 = vpop.f32.mrb[0].mxu0
      %v1699 = vpop.f32.mrb[0].mxu0
      %v1700 = vadd.f32 %v663, %v1699
      %v1701 = vpop.f32.mrb[0].mxu0
      %1702 = vmatprep.mubr.bf16.mxu0 %v1102
      %1703 = vmatmul.mubr.bf16.gmra.mrb[0].mxu0 %v1101
      %v1704 = vpop.f32.mrb[0].mxu0
      %v1705 = vadd.f32 %v663, %v1704
      %v1706 = vpop.f32.mrb[0].mxu0
      %v1707 = vpop.f32.mrb[0].mxu0
      %v1708 = vadd.f32 %v663, %v1707
      %v1709 = vpop.f32.mrb[0].mxu0
      %1710 = vmatprep.mubr.bf16.mxu0 %v1109
      %1711 = vmatmul.mubr.bf16.gmra.mrb[0].mxu0 %v1108
      %v1712 = vpop.f32.mrb[0].mxu0
      %v1713 = vadd.f32 %v663, %v1712
      %v1714 = vpop.f32.mrb[0].mxu0
      %v1715 = vpop.f32.mrb[0].mxu0
      %v1716 = vadd.f32 %v663, %v1715
      %v1717 = vpop.f32.mrb[0].mxu0
      %1718 = vmatprep.mubr.bf16.mxu0 %v1116
      %1719 = vmatmul.mubr.bf16.gmra.mrb[0].mxu0 %v1115
      %v1720 = vpop.f32.mrb[0].mxu0
      %v1721 = vadd.f32 %v663, %v1720
      %v1722 = vpop.f32.mrb[0].mxu0
      %v1723 = vpop.f32.mrb[0].mxu0
      %v1724 = vadd.f32 %v663, %v1723
      %v1725 = vpop.f32.mrb[0].mxu0
      %1726 = vmatprep.mubr.bf16.mxu0 %v1123
      %1727 = vmatmul.mubr.bf16.gmra.mrb[0].mxu0 %v1122
      %v1728 = vpop.f32.mrb[0].mxu0
      %v1729 = vadd.f32 %v663, %v1728
      %v1730 = vpop.f32.mrb[0].mxu0
      %v1731 = vpop.f32.mrb[0].mxu0
      %v1732 = vadd.f32 %v663, %v1731
      %v1733 = vpop.f32.mrb[0].mxu0
      %1734 = vdwg.mxu0
      %1735 = vmatprep.subr.bf16.mxu0 0
      %1736 = vmatpush1.bf16.msra.mxu0 %v1441
      %1737 = vmatprep.subr.bf16.mxu0 0
      %1738 = vmatpush1.bf16.msra.mxu0 %v1442
      %1739 = vmatprep.subr.bf16.mxu0 0
      %1740 = vmatpush1.bf16.msra.mxu0 %v1443
      %1741 = vmatprep.subr.bf16.mxu0 0
      %1742 = vmatpush1.bf16.msra.mxu0 %v1444
      %1743 = vmatprep.subr.bf16.mxu0 0
      %1744 = vmatpush1.bf16.msra.mxu0 %v1445
      %1745 = vmatprep.subr.bf16.mxu0 0
      %1746 = vmatpush1.bf16.msra.mxu0 %v1446
      %1747 = vmatprep.subr.bf16.mxu0 0
      %1748 = vmatpush1.bf16.msra.mxu0 %v1447
      %1749 = vmatprep.subr.bf16.mxu0 0
      %1750 = vmatpush1.bf16.msra.mxu0 %v1448
      %1751 = vmatprep.subr.bf16.mxu0 0
      %1752 = vmatpush1.bf16.msra.mxu0 %v1449
      %1753 = vmatprep.subr.bf16.mxu0 0
      %1754 = vmatpush1.bf16.msra.mxu0 %v1450
      %1755 = vmatprep.subr.bf16.mxu0 0
      %1756 = vmatpush1.bf16.msra.mxu0 %v1451
      %1757 = vmatprep.subr.bf16.mxu0 0
      %1758 = vmatpush1.bf16.msra.mxu0 %v1452
      %1759 = vmatprep.subr.bf16.mxu0 0
      %1760 = vmatpush1.bf16.msra.mxu0 %v1453
      %1761 = vmatprep.subr.bf16.mxu0 0
      %1762 = vmatpush1.bf16.msra.mxu0 %v1454
      %1763 = vmatprep.subr.bf16.mxu0 0
      %1764 = vmatpush1.bf16.msra.mxu0 %v1455
      %1765 = vmatprep.subr.bf16.mxu0 0
      %1766 = vmatpush1.bf16.msra.mxu0 %v1456
      %1767 = vmatprep.mubr.bf16.mxu0 %v1020
      %1768 = vmatmul.mubr.bf16.gmra.mrb[0].mxu0 %v1019
      %v1769 = vpop.f32.mrb[0].mxu0
      %v1770 = vadd.f32 %v1609, %v1769
      %v1771 = vpop.f32.mrb[0].mxu0
      %v1772 = vpop.f32.mrb[0].mxu0
      %v1773 = vadd.f32 %v1612, %v1772
      %v1774 = vpop.f32.mrb[0].mxu0
      %1775 = vmatprep.mubr.bf16.mxu0 %v1027
      %1776 = vmatmul.mubr.bf16.gmra.mrb[0].mxu0 %v1026
      %v1777 = vpop.f32.mrb[0].mxu0
      %v1778 = vadd.f32 %v1617, %v1777
      %v1779 = vpop.f32.mrb[0].mxu0
      %v1780 = vpop.f32.mrb[0].mxu0
      %v1781 = vadd.f32 %v1620, %v1780
      %v1782 = vpop.f32.mrb[0].mxu0
      %1783 = vmatprep.mubr.bf16.mxu0 %v1034
      %1784 = vmatmul.mubr.bf16.gmra.mrb[0].mxu0 %v1033
      %v1785 = vpop.f32.mrb[0].mxu0
      %v1786 = vadd.f32 %v1625, %v1785
      %v1787 = vpop.f32.mrb[0].mxu0
      %v1788 = vpop.f32.mrb[0].mxu0
      %v1789 = vadd.f32 %v1628, %v1788
      %v1790 = vpop.f32.mrb[0].mxu0
      %1791 = vmatprep.mubr.bf16.mxu0 %v1041
      %1792 = vmatmul.mubr.bf16.gmra.mrb[0].mxu0 %v1040
      %v1793 = vpop.f32.mrb[0].mxu0
      %v1794 = vadd.f32 %v1633, %v1793
      %v1795 = vpop.f32.mrb[0].mxu0
      %v1796 = vpop.f32.mrb[0].mxu0
      %v1797 = vadd.f32 %v1636, %v1796
      %v1798 = vpop.f32.mrb[0].mxu0
      %1799 = vmatprep.mubr.bf16.mxu0 %v1048
      %1800 = vmatmul.mubr.bf16.gmra.mrb[0].mxu0 %v1047
      %v1801 = vpop.f32.mrb[0].mxu0
      %v1802 = vadd.f32 %v1641, %v1801
      %v1803 = vpop.f32.mrb[0].mxu0
      %v1804 = vpop.f32.mrb[0].mxu0
      %v1805 = vadd.f32 %v1644, %v1804
      %v1806 = vpop.f32.mrb[0].mxu0
      %1807 = vmatprep.mubr.bf16.mxu0 %v1055
      %1808 = vmatmul.mubr.bf16.gmra.mrb[0].mxu0 %v1054
      %v1809 = vpop.f32.mrb[0].mxu0
      %v1810 = vadd.f32 %v1649, %v1809
      %v1811 = vpop.f32.mrb[0].mxu0
      %v1812 = vpop.f32.mrb[0].mxu0
      %v1813 = vadd.f32 %v1652, %v1812
      %v1814 = vpop.f32.mrb[0].mxu0
      %1815 = vmatprep.mubr.bf16.mxu0 %v1062
      %1816 = vmatmul.mubr.bf16.gmra.mrb[0].mxu0 %v1061
      %v1817 = vpop.f32.mrb[0].mxu0
      %v1818 = vadd.f32 %v1657, %v1817
      %v1819 = vpop.f32.mrb[0].mxu0
      %v1820 = vpop.f32.mrb[0].mxu0
      %v1821 = vadd.f32 %v1660, %v1820
      %v1822 = vpop.f32.mrb[0].mxu0
      %1823 = vmatprep.mubr.bf16.mxu0 %v1069
      %1824 = vmatmul.mubr.bf16.gmra.mrb[0].mxu0 %v1068
      %v1825 = vpop.f32.mrb[0].mxu0
      %v1826 = vadd.f32 %v1665, %v1825
      %v1827 = vpop.f32.mrb[0].mxu0
      %v1828 = vpop.f32.mrb[0].mxu0
      %v1829 = vadd.f32 %v1668, %v1828
      %v1830 = vpop.f32.mrb[0].mxu0
      %1831 = vmatprep.mubr.bf16.mxu0 %v1076
      %1832 = vmatmul.mubr.bf16.gmra.mrb[0].mxu0 %v1075
      %v1833 = vpop.f32.mrb[0].mxu0
      %v1834 = vadd.f32 %v1673, %v1833
      %v1835 = vpop.f32.mrb[0].mxu0
      %v1836 = vpop.f32.mrb[0].mxu0
      %v1837 = vadd.f32 %v1676, %v1836
      %v1838 = vpop.f32.mrb[0].mxu0
      %1839 = vmatprep.mubr.bf16.mxu0 %v1083
      %1840 = vmatmul.mubr.bf16.gmra.mrb[0].mxu0 %v1082
      %v1841 = vpop.f32.mrb[0].mxu0
      %v1842 = vadd.f32 %v1681, %v1841
      %v1843 = vpop.f32.mrb[0].mxu0
      %v1844 = vpop.f32.mrb[0].mxu0
      %v1845 = vadd.f32 %v1684, %v1844
      %v1846 = vpop.f32.mrb[0].mxu0
      %1847 = vmatprep.mubr.bf16.mxu0 %v1090
      %1848 = vmatmul.mubr.bf16.gmra.mrb[0].mxu0 %v1089
      %v1849 = vpop.f32.mrb[0].mxu0
      %v1850 = vadd.f32 %v1689, %v1849
      %v1851 = vpop.f32.mrb[0].mxu0
      %v1852 = vpop.f32.mrb[0].mxu0
      %v1853 = vadd.f32 %v1692, %v1852
      %v1854 = vpop.f32.mrb[0].mxu0
      %1855 = vmatprep.mubr.bf16.mxu0 %v1097
      %1856 = vmatmul.mubr.bf16.gmra.mrb[0].mxu0 %v1096
      %v1857 = vpop.f32.mrb[0].mxu0
      %v1858 = vadd.f32 %v1697, %v1857
      %v1859 = vpop.f32.mrb[0].mxu0
      %v1860 = vpop.f32.mrb[0].mxu0
      %v1861 = vadd.f32 %v1700, %v1860
      %v1862 = vpop.f32.mrb[0].mxu0
      %1863 = vmatprep.mubr.bf16.mxu0 %v1104
      %1864 = vmatmul.mubr.bf16.gmra.mrb[0].mxu0 %v1103
      %v1865 = vpop.f32.mrb[0].mxu0
      %v1866 = vadd.f32 %v1705, %v1865
      %v1867 = vpop.f32.mrb[0].mxu0
      %v1868 = vpop.f32.mrb[0].mxu0
      %v1869 = vadd.f32 %v1708, %v1868
      %v1870 = vpop.f32.mrb[0].mxu0
      %1871 = vmatprep.mubr.bf16.mxu0 %v1111
      %1872 = vmatmul.mubr.bf16.gmra.mrb[0].mxu0 %v1110
      %v1873 = vpop.f32.mrb[0].mxu0
      %v1874 = vadd.f32 %v1713, %v1873
      %v1875 = vpop.f32.mrb[0].mxu0
      %v1876 = vpop.f32.mrb[0].mxu0
      %v1877 = vadd.f32 %v1716, %v1876
      %v1878 = vpop.f32.mrb[0].mxu0
      %1879 = vmatprep.mubr.bf16.mxu0 %v1118
      %1880 = vmatmul.mubr.bf16.gmra.mrb[0].mxu0 %v1117
      %v1881 = vpop.f32.mrb[0].mxu0
      %v1882 = vadd.f32 %v1721, %v1881
      %v1883 = vpop.f32.mrb[0].mxu0
      %v1884 = vpop.f32.mrb[0].mxu0
      %v1885 = vadd.f32 %v1724, %v1884
      %v1886 = vpop.f32.mrb[0].mxu0
      %1887 = vmatprep.mubr.bf16.mxu0 %v1125
      %1888 = vmatmul.mubr.bf16.gmra.mrb[0].mxu0 %v1124
      %v1889 = vpop.f32.mrb[0].mxu0
      %v1890 = vadd.f32 %v1729, %v1889
      %v1891 = vpop.f32.mrb[0].mxu0
      %v1892 = vpop.f32.mrb[0].mxu0
      %v1893 = vadd.f32 %v1732, %v1892
      %v1894 = vpop.f32.mrb[0].mxu0
      %1895 = vdwg.mxu0
      %1896 = vmatprep.subr.bf16.mxu0 0
      %1897 = vmatpush1.bf16.msra.mxu0 %v1457
      %1898 = vmatprep.subr.bf16.mxu0 0
      %1899 = vmatpush1.bf16.msra.mxu0 %v1458
      %1900 = vmatprep.subr.bf16.mxu0 0
      %1901 = vmatpush1.bf16.msra.mxu0 %v1459
      %1902 = vmatprep.subr.bf16.mxu0 0
      %1903 = vmatpush1.bf16.msra.mxu0 %v1460
      %1904 = vmatprep.subr.bf16.mxu0 0
      %1905 = vmatpush1.bf16.msra.mxu0 %v1461
      %1906 = vmatprep.subr.bf16.mxu0 0
      %1907 = vmatpush1.bf16.msra.mxu0 %v1462
      %1908 = vmatprep.subr.bf16.mxu0 0
      %1909 = vmatpush1.bf16.msra.mxu0 %v1463
      %1910 = vmatprep.subr.bf16.mxu0 0
      %1911 = vmatpush1.bf16.msra.mxu0 %v1464
      %1912 = vmatprep.subr.bf16.mxu0 0
      %1913 = vmatpush1.bf16.msra.mxu0 %v1465
      %1914 = vmatprep.subr.bf16.mxu0 0
      %1915 = vmatpush1.bf16.msra.mxu0 %v1466
      %1916 = vmatprep.subr.bf16.mxu0 0
      %1917 = vmatpush1.bf16.msra.mxu0 %v1467
      %1918 = vmatprep.subr.bf16.mxu0 0
      %1919 = vmatpush1.bf16.msra.mxu0 %v1468
      %1920 = vmatprep.subr.bf16.mxu0 0
      %1921 = vmatpush1.bf16.msra.mxu0 %v1469
      %1922 = vmatprep.subr.bf16.mxu0 0
      %1923 = vmatpush1.bf16.msra.mxu0 %v1470
      %1924 = vmatprep.subr.bf16.mxu0 0
      %1925 = vmatpush1.bf16.msra.mxu0 %v1471
      %1926 = vmatprep.subr.bf16.mxu0 0
      %1927 = vmatpush1.bf16.msra.mxu0 %v1472
      %1928 = vmatprep.mubr.bf16.mxu0 %v1022
      %1929 = vmatmul.mubr.bf16.gmra.mrb[0].mxu0 %v1021
      %v1930 = vpop.f32.mrb[0].mxu0
      %v1931 = vadd.f32 %v1770, %v1930
      %v1932 = vpop.f32.mrb[0].mxu0
      %v1933 = vpop.f32.mrb[0].mxu0
      %v1934 = vadd.f32 %v1773, %v1933
      %v1935 = vpop.f32.mrb[0].mxu0
      %1936 = vmatprep.mubr.bf16.mxu0 %v1029
      %1937 = vmatmul.mubr.bf16.gmra.mrb[0].mxu0 %v1028
      %v1938 = vpop.f32.mrb[0].mxu0
      %v1939 = vadd.f32 %v1778, %v1938
      %v1940 = vpop.f32.mrb[0].mxu0
      %v1941 = vpop.f32.mrb[0].mxu0
      %v1942 = vadd.f32 %v1781, %v1941
      %v1943 = vpop.f32.mrb[0].mxu0
      %1944 = vmatprep.mubr.bf16.mxu0 %v1036
      %1945 = vmatmul.mubr.bf16.gmra.mrb[0].mxu0 %v1035
      %v1946 = vpop.f32.mrb[0].mxu0
      %v1947 = vadd.f32 %v1786, %v1946
      %v1948 = vpop.f32.mrb[0].mxu0
      %v1949 = vpop.f32.mrb[0].mxu0
      %v1950 = vadd.f32 %v1789, %v1949
      %v1951 = vpop.f32.mrb[0].mxu0
      %1952 = vmatprep.mubr.bf16.mxu0 %v1043
      %1953 = vmatmul.mubr.bf16.gmra.mrb[0].mxu0 %v1042
      %v1954 = vpop.f32.mrb[0].mxu0
      %v1955 = vadd.f32 %v1794, %v1954
      %v1956 = vpop.f32.mrb[0].mxu0
      %v1957 = vpop.f32.mrb[0].mxu0
      %v1958 = vadd.f32 %v1797, %v1957
      %v1959 = vpop.f32.mrb[0].mxu0
      %1960 = vmatprep.mubr.bf16.mxu0 %v1050
      %1961 = vmatmul.mubr.bf16.gmra.mrb[0].mxu0 %v1049
      %v1962 = vpop.f32.mrb[0].mxu0
      %v1963 = vadd.f32 %v1802, %v1962
      %v1964 = vpop.f32.mrb[0].mxu0
      %v1965 = vpop.f32.mrb[0].mxu0
      %v1966 = vadd.f32 %v1805, %v1965
      %v1967 = vpop.f32.mrb[0].mxu0
      %1968 = vmatprep.mubr.bf16.mxu0 %v1057
      %1969 = vmatmul.mubr.bf16.gmra.mrb[0].mxu0 %v1056
      %v1970 = vpop.f32.mrb[0].mxu0
      %v1971 = vadd.f32 %v1810, %v1970
      %v1972 = vpop.f32.mrb[0].mxu0
      %v1973 = vpop.f32.mrb[0].mxu0
      %v1974 = vadd.f32 %v1813, %v1973
      %v1975 = vpop.f32.mrb[0].mxu0
      %1976 = vmatprep.mubr.bf16.mxu0 %v1064
      %1977 = vmatmul.mubr.bf16.gmra.mrb[0].mxu0 %v1063
      %v1978 = vpop.f32.mrb[0].mxu0
      %v1979 = vadd.f32 %v1818, %v1978
      %v1980 = vpop.f32.mrb[0].mxu0
      %v1981 = vpop.f32.mrb[0].mxu0
      %v1982 = vadd.f32 %v1821, %v1981
      %v1983 = vpop.f32.mrb[0].mxu0
      %1984 = vmatprep.mubr.bf16.mxu0 %v1071
      %1985 = vmatmul.mubr.bf16.gmra.mrb[0].mxu0 %v1070
      %v1986 = vpop.f32.mrb[0].mxu0
      %v1987 = vadd.f32 %v1826, %v1986
      %v1988 = vpop.f32.mrb[0].mxu0
      %v1989 = vpop.f32.mrb[0].mxu0
      %v1990 = vadd.f32 %v1829, %v1989
      %v1991 = vpop.f32.mrb[0].mxu0
      %1992 = vmatprep.mubr.bf16.mxu0 %v1078
      %1993 = vmatmul.mubr.bf16.gmra.mrb[0].mxu0 %v1077
      %v1994 = vpop.f32.mrb[0].mxu0
      %v1995 = vadd.f32 %v1834, %v1994
      %v1996 = vpop.f32.mrb[0].mxu0
      %v1997 = vpop.f32.mrb[0].mxu0
      %v1998 = vadd.f32 %v1837, %v1997
      %v1999 = vpop.f32.mrb[0].mxu0
      %2000 = vmatprep.mubr.bf16.mxu0 %v1085
      %2001 = vmatmul.mubr.bf16.gmra.mrb[0].mxu0 %v1084
      %v2002 = vpop.f32.mrb[0].mxu0
      %v2003 = vadd.f32 %v1842, %v2002
      %v2004 = vpop.f32.mrb[0].mxu0
      %v2005 = vpop.f32.mrb[0].mxu0
      %v2006 = vadd.f32 %v1845, %v2005
      %v2007 = vpop.f32.mrb[0].mxu0
      %2008 = vmatprep.mubr.bf16.mxu0 %v1092
      %2009 = vmatmul.mubr.bf16.gmra.mrb[0].mxu0 %v1091
      %v2010 = vpop.f32.mrb[0].mxu0
      %v2011 = vadd.f32 %v1850, %v2010
      %v2012 = vpop.f32.mrb[0].mxu0
      %v2013 = vpop.f32.mrb[0].mxu0
      %v2014 = vadd.f32 %v1853, %v2013
      %v2015 = vpop.f32.mrb[0].mxu0
      %2016 = vmatprep.mubr.bf16.mxu0 %v1099
      %2017 = vmatmul.mubr.bf16.gmra.mrb[0].mxu0 %v1098
      %v2018 = vpop.f32.mrb[0].mxu0
      %v2019 = vadd.f32 %v1858, %v2018
      %v2020 = vpop.f32.mrb[0].mxu0
      %v2021 = vpop.f32.mrb[0].mxu0
      %v2022 = vadd.f32 %v1861, %v2021
      %v2023 = vpop.f32.mrb[0].mxu0
      %2024 = vmatprep.mubr.bf16.mxu0 %v1106
      %2025 = vmatmul.mubr.bf16.gmra.mrb[0].mxu0 %v1105
      %v2026 = vpop.f32.mrb[0].mxu0
      %v2027 = vadd.f32 %v1866, %v2026
      %v2028 = vpop.f32.mrb[0].mxu0
      %v2029 = vpop.f32.mrb[0].mxu0
      %v2030 = vadd.f32 %v1869, %v2029
      %v2031 = vpop.f32.mrb[0].mxu0
      %2032 = vmatprep.mubr.bf16.mxu0 %v1113
      %2033 = vmatmul.mubr.bf16.gmra.mrb[0].mxu0 %v1112
      %v2034 = vpop.f32.mrb[0].mxu0
      %v2035 = vadd.f32 %v1874, %v2034
      %v2036 = vpop.f32.mrb[0].mxu0
      %v2037 = vpop.f32.mrb[0].mxu0
      %v2038 = vadd.f32 %v1877, %v2037
      %v2039 = vpop.f32.mrb[0].mxu0
      %2040 = vmatprep.mubr.bf16.mxu0 %v1120
      %2041 = vmatmul.mubr.bf16.gmra.mrb[0].mxu0 %v1119
      %v2042 = vpop.f32.mrb[0].mxu0
      %v2043 = vadd.f32 %v1882, %v2042
      %v2044 = vpop.f32.mrb[0].mxu0
      %v2045 = vpop.f32.mrb[0].mxu0
      %v2046 = vadd.f32 %v1885, %v2045
      %v2047 = vpop.f32.mrb[0].mxu0
      %2048 = vmatprep.mubr.bf16.mxu0 %v1127
      %2049 = vmatmul.mubr.bf16.gmra.mrb[0].mxu0 %v1126
      %v2050 = vpop.f32.mrb[0].mxu0
      %v2051 = vadd.f32 %v1890, %v2050
      %v2052 = vpop.f32.mrb[0].mxu0
      %v2053 = vpop.f32.mrb[0].mxu0
      %v2054 = vadd.f32 %v1893, %v2053
      %v2055 = vpop.f32.mrb[0].mxu0
      %2056 = vdwg.mxu0
      %2057 = vmatprep.subr.bf16.mxu0 0
      %2058 = vmatpush1.bf16.msra.mxu0 %v1473
      %2059 = vmatprep.subr.bf16.mxu0 0
      %2060 = vmatpush1.bf16.msra.mxu0 %v1474
      %2061 = vmatprep.subr.bf16.mxu0 0
      %2062 = vmatpush1.bf16.msra.mxu0 0
      %2063 = vmatprep.subr.bf16.mxu0 0
      %2064 = vmatpush1.bf16.msra.mxu0 0
      %2065 = vmatprep.subr.bf16.mxu0 0
      %2066 = vmatpush1.bf16.msra.mxu0 0
      %2067 = vmatprep.subr.bf16.mxu0 0
      %2068 = vmatpush1.bf16.msra.mxu0 0
      %2069 = vmatprep.subr.bf16.mxu0 0
      %2070 = vmatpush1.bf16.msra.mxu0 0
      %2071 = vmatprep.subr.bf16.mxu0 0
      %2072 = vmatpush1.bf16.msra.mxu0 0
      %2073 = vmatprep.subr.bf16.mxu0 0
      %2074 = vmatpush1.bf16.msra.mxu0 0
      %2075 = vmatprep.subr.bf16.mxu0 0
      %2076 = vmatpush1.bf16.msra.mxu0 0
      %2077 = vmatprep.subr.bf16.mxu0 0
      %2078 = vmatpush1.bf16.msra.mxu0 0
      %2079 = vmatprep.subr.bf16.mxu0 0
      %2080 = vmatpush1.bf16.msra.mxu0 0
      %2081 = vmatprep.subr.bf16.mxu0 0
      %2082 = vmatpush1.bf16.msra.mxu0 0
      %2083 = vmatprep.subr.bf16.mxu0 0
      %2084 = vmatpush1.bf16.msra.mxu0 0
      %2085 = vmatprep.subr.bf16.mxu0 0
      %2086 = vmatpush1.bf16.msra.mxu0 0
      %2087 = vmatprep.subr.bf16.mxu0 0
      %2088 = vmatpush1.bf16.msra.mxu0 0
      %2089 = vmatprep.mubr.bf16.mxu0 0
      %2090 = vmatmul.mubr.bf16.gmra.mrb[0].mxu0 %v1527
      %v2091 = vpop.f32.mrb[0].mxu0
      %v2092 = vadd.f32 %v1931, %v2091
      %v2093 = vpop.f32.mrb[0].mxu0
      %v2094 = vpop.f32.mrb[0].mxu0
      %v2095 = vadd.f32 %v1934, %v2094
      %v2096 = vpop.f32.mrb[0].mxu0
      %2097 = vmatprep.mubr.bf16.mxu0 0
      %2098 = vmatmul.mubr.bf16.gmra.mrb[0].mxu0 %v1530
      %v2099 = vpop.f32.mrb[0].mxu0
      %v2100 = vadd.f32 %v1939, %v2099
      %v2101 = vpop.f32.mrb[0].mxu0
      %v2102 = vpop.f32.mrb[0].mxu0
      %v2103 = vadd.f32 %v1942, %v2102
      %v2104 = vpop.f32.mrb[0].mxu0
      %2105 = vmatprep.mubr.bf16.mxu0 0
      %2106 = vmatmul.mubr.bf16.gmra.mrb[0].mxu0 %v1533
      %v2107 = vpop.f32.mrb[0].mxu0
      %v2108 = vadd.f32 %v1947, %v2107
      %v2109 = vpop.f32.mrb[0].mxu0
      %v2110 = vpop.f32.mrb[0].mxu0
      %v2111 = vadd.f32 %v1950, %v2110
      %v2112 = vpop.f32.mrb[0].mxu0
      %2113 = vmatprep.mubr.bf16.mxu0 0
      %2114 = vmatmul.mubr.bf16.gmra.mrb[0].mxu0 %v1536
      %v2115 = vpop.f32.mrb[0].mxu0
      %v2116 = vadd.f32 %v1955, %v2115
      %v2117 = vpop.f32.mrb[0].mxu0
      %v2118 = vpop.f32.mrb[0].mxu0
      %v2119 = vadd.f32 %v1958, %v2118
      %v2120 = vpop.f32.mrb[0].mxu0
      %2121 = vmatprep.mubr.bf16.mxu0 0
      %2122 = vmatmul.mubr.bf16.gmra.mrb[0].mxu0 %v1539
      %v2123 = vpop.f32.mrb[0].mxu0
      %v2124 = vadd.f32 %v1963, %v2123
      %v2125 = vpop.f32.mrb[0].mxu0
      %v2126 = vpop.f32.mrb[0].mxu0
      %v2127 = vadd.f32 %v1966, %v2126
      %v2128 = vpop.f32.mrb[0].mxu0
      %2129 = vmatprep.mubr.bf16.mxu0 0
      %2130 = vmatmul.mubr.bf16.gmra.mrb[0].mxu0 %v1542
      %v2131 = vpop.f32.mrb[0].mxu0
      %v2132 = vadd.f32 %v1971, %v2131
      %v2133 = vpop.f32.mrb[0].mxu0
      %v2134 = vpop.f32.mrb[0].mxu0
      %v2135 = vadd.f32 %v1974, %v2134
      %v2136 = vpop.f32.mrb[0].mxu0
      %2137 = vmatprep.mubr.bf16.mxu0 0
      %2138 = vmatmul.mubr.bf16.gmra.mrb[0].mxu0 %v1545
      %v2139 = vpop.f32.mrb[0].mxu0
      %v2140 = vadd.f32 %v1979, %v2139
      %v2141 = vpop.f32.mrb[0].mxu0
      %v2142 = vpop.f32.mrb[0].mxu0
      %v2143 = vadd.f32 %v1982, %v2142
      %v2144 = vpop.f32.mrb[0].mxu0
      %2145 = vmatprep.mubr.bf16.mxu0 0
      %2146 = vmatmul.mubr.bf16.gmra.mrb[0].mxu0 %v1548
      %v2147 = vpop.f32.mrb[0].mxu0
      %v2148 = vadd.f32 %v1987, %v2147
      %v2149 = vpop.f32.mrb[0].mxu0
      %v2150 = vpop.f32.mrb[0].mxu0
      %v2151 = vadd.f32 %v1990, %v2150
      %v2152 = vpop.f32.mrb[0].mxu0
      %2153 = vmatprep.mubr.bf16.mxu0 0
      %2154 = vmatmul.mubr.bf16.gmra.mrb[0].mxu0 %v1551
      %v2155 = vpop.f32.mrb[0].mxu0
      %v2156 = vadd.f32 %v1995, %v2155
      %v2157 = vpop.f32.mrb[0].mxu0
      %v2158 = vpop.f32.mrb[0].mxu0
      %v2159 = vadd.f32 %v1998, %v2158
      %v2160 = vpop.f32.mrb[0].mxu0
      %2161 = vmatprep.mubr.bf16.mxu0 0
      %2162 = vmatmul.mubr.bf16.gmra.mrb[0].mxu0 %v1554
      %v2163 = vpop.f32.mrb[0].mxu0
      %v2164 = vadd.f32 %v2003, %v2163
      %v2165 = vpop.f32.mrb[0].mxu0
      %v2166 = vpop.f32.mrb[0].mxu0
      %v2167 = vadd.f32 %v2006, %v2166
      %v2168 = vpop.f32.mrb[0].mxu0
      %2169 = vmatprep.mubr.bf16.mxu0 0
      %2170 = vmatmul.mubr.bf16.gmra.mrb[0].mxu0 %v1557
      %v2171 = vpop.f32.mrb[0].mxu0
      %v2172 = vadd.f32 %v2011, %v2171
      %v2173 = vpop.f32.mrb[0].mxu0
      %v2174 = vpop.f32.mrb[0].mxu0
      %v2175 = vadd.f32 %v2014, %v2174
      %v2176 = vpop.f32.mrb[0].mxu0
      %2177 = vmatprep.mubr.bf16.mxu0 0
      %2178 = vmatmul.mubr.bf16.gmra.mrb[0].mxu0 %v1560
      %v2179 = vpop.f32.mrb[0].mxu0
      %v2180 = vadd.f32 %v2019, %v2179
      %v2181 = vpop.f32.mrb[0].mxu0
      %v2182 = vpop.f32.mrb[0].mxu0
      %v2183 = vadd.f32 %v2022, %v2182
      %v2184 = vpop.f32.mrb[0].mxu0
      %2185 = vmatprep.mubr.bf16.mxu0 0
      %2186 = vmatmul.mubr.bf16.gmra.mrb[0].mxu0 %v1563
      %v2187 = vpop.f32.mrb[0].mxu0
      %v2188 = vadd.f32 %v2027, %v2187
      %v2189 = vpop.f32.mrb[0].mxu0
      %v2190 = vpop.f32.mrb[0].mxu0
      %v2191 = vadd.f32 %v2030, %v2190
      %v2192 = vpop.f32.mrb[0].mxu0
      %2193 = vmatprep.mubr.bf16.mxu0 0
      %2194 = vmatmul.mubr.bf16.gmra.mrb[0].mxu0 %v1566
      %v2195 = vpop.f32.mrb[0].mxu0
      %v2196 = vadd.f32 %v2035, %v2195
      %v2197 = vpop.f32.mrb[0].mxu0
      %v2198 = vpop.f32.mrb[0].mxu0
      %v2199 = vadd.f32 %v2038, %v2198
      %v2200 = vpop.f32.mrb[0].mxu0
      %2201 = vmatprep.mubr.bf16.mxu0 0
      %2202 = vmatmul.mubr.bf16.gmra.mrb[0].mxu0 %v1569
      %v2203 = vpop.f32.mrb[0].mxu0
      %v2204 = vadd.f32 %v2043, %v2203
      %v2205 = vpop.f32.mrb[0].mxu0
      %v2206 = vpop.f32.mrb[0].mxu0
      %v2207 = vadd.f32 %v2046, %v2206
      %v2208 = vpop.f32.mrb[0].mxu0
      %2209 = vmatprep.mubr.bf16.mxu0 0
      %2210 = vmatmul.mubr.bf16.gmra.mrb[0].mxu0 %v1572
      %v2211 = vpop.f32.mrb[0].mxu0
      %v2212 = vadd.f32 %v2051, %v2211
      %v2213 = vpop.f32.mrb[0].mxu0
      %v2214 = vpop.f32.mrb[0].mxu0
      %v2215 = vadd.f32 %v2054, %v2214
      %v2216 = vpop.f32.mrb[0].mxu0
      %2217 = vdwg.mxu0
      %v2218 = vld [vmem:[%s4] sm:$0xf]
      %v2219 = vld [vmem:[%s4 + $0x4] sm:$0xf]
      %v2220 = vld [vmem:[%s4 + $0x8] sm:$0xf]
      %v2221 = vld [vmem:[%s4 + $0xc] sm:$0xf]
      %v2222 = vld [vmem:[%s4 + $0x10] sm:$0xf]
      %v2223 = vld [vmem:[%s4 + $0x14] sm:$0xf]
      %v2224 = vld [vmem:[%s4 + $0x18] sm:$0xf]
      %v2225 = vld [vmem:[%s4 + $0x1c] sm:$0xf]
      %v2226 = vld [vmem:[%s4 + $0x20] sm:$0xf]
      %v2227 = vld [vmem:[%s4 + $0x24] sm:$0xf]
      %v2228 = vld [vmem:[%s4 + $0x28] sm:$0xf]
      %v2229 = vld [vmem:[%s4 + $0x2c] sm:$0xf]
      %v2230 = vld [vmem:[%s4 + $0x30] sm:$0xf]
      %v2231 = vld [vmem:[%s4 + $0x34] sm:$0xf]
      %v2232 = vld [vmem:[%s4 + $0x38] sm:$0xf]
      %v2233 = vld [vmem:[%s4 + $0x3c] sm:$0xf]
      %v2234 = vld [vmem:[%s5] sm:$0x1]
      %v2235 = vpack.c.bf16 %v2095, %v2092
      %v2236 = vpack.c.bf16 %v2103, %v2100
      %v2237 = vpack.c.bf16 %v2111, %v2108
      %v2238 = vpack.c.bf16 %v2119, %v2116
      %v2239 = vpack.c.bf16 %v2127, %v2124
      %v2240 = vpack.c.bf16 %v2135, %v2132
      %v2241 = vpack.c.bf16 %v2143, %v2140
      %v2242 = vpack.c.bf16 %v2151, %v2148
      %v2243 = vpack.c.bf16 %v2159, %v2156
      %v2244 = vpack.c.bf16 %v2167, %v2164
      %v2245 = vpack.c.bf16 %v2175, %v2172
      %v2246 = vpack.c.bf16 %v2183, %v2180
      %v2247 = vpack.c.bf16 %v2191, %v2188
      %v2248 = vpack.c.bf16 %v2199, %v2196
      %v2249 = vpack.c.bf16 %v2207, %v2204
      %v2250 = vpack.c.bf16 %v2215, %v2212
      %v2252 = vlaneseq
      %v2253 = vshrl.u32 %v2252, 7
      %v2254 = vsub.s32 0, %v2253
      %v2255 = vrot.slane %v2234, %v2254
      %v2273 = vunpack.c.l.b16 %v2218
      %v2274 = vunpack.c.l.b16 %v2219
      %v2275 = vunpack.c.l.b16 %v2220
      %v2276 = vunpack.c.l.b16 %v2221
      %v2277 = vunpack.c.l.b16 %v2222
      %v2278 = vunpack.c.l.b16 %v2223
      %v2279 = vunpack.c.l.b16 %v2224
      %v2280 = vunpack.c.l.b16 %v2225
      %v2281 = vunpack.c.l.b16 %v2226
      %v2282 = vunpack.c.l.b16 %v2227
      %v2283 = vunpack.c.l.b16 %v2228
      %v2284 = vunpack.c.l.b16 %v2229
      %v2285 = vunpack.c.l.b16 %v2230
      %v2286 = vunpack.c.l.b16 %v2231
      %v2287 = vunpack.c.l.b16 %v2232
      %v2288 = vunpack.c.l.b16 %v2233
      %v2289 = vpack.c.b16 %v2274, %v2273
      %v2290 = vpack.c.b16 %v2276, %v2275
      %v2291 = vpack.c.b16 %v2278, %v2277
      %v2292 = vpack.c.b16 %v2280, %v2279
      %v2293 = vpack.c.b16 %v2282, %v2281
      %v2294 = vpack.c.b16 %v2284, %v2283
      %v2295 = vpack.c.b16 %v2286, %v2285
      %v2296 = vpack.c.b16 %v2288, %v2287
      %2305 = vmatprep.subr.bf16.mxu0 0
      %2306 = vmatpush1.bf16.msra.mxu0 %v2289
      %2307 = vmatprep.subr.bf16.mxu0 0
      %2308 = vmatpush1.bf16.msra.mxu0 %v2290
      %2309 = vmatprep.subr.bf16.mxu0 0
      %2310 = vmatpush1.bf16.msra.mxu0 %v2291
      %2311 = vmatprep.subr.bf16.mxu0 0
      %2312 = vmatpush1.bf16.msra.mxu0 %v2292
      %2313 = vmatprep.subr.bf16.mxu0 0
      %2314 = vmatpush1.bf16.msra.mxu0 %v2293
      %2315 = vmatprep.subr.bf16.mxu0 0
      %2316 = vmatpush1.bf16.msra.mxu0 %v2294
      %2317 = vmatprep.subr.bf16.mxu0 0
      %2318 = vmatpush1.bf16.msra.mxu0 %v2295
      %2319 = vmatprep.subr.bf16.mxu0 0
      %2320 = vmatpush1.bf16.msra.mxu0 %v2296
      %2321 = vmatprep.subr.bf16.mxu0 0
      %2322 = vmatpush1.bf16.msra.mxu0 0
      %2323 = vmatprep.subr.bf16.mxu0 0
      %2324 = vmatpush1.bf16.msra.mxu0 0
      %2325 = vmatprep.subr.bf16.mxu0 0
      %2326 = vmatpush1.bf16.msra.mxu0 0
      %2327 = vmatprep.subr.bf16.mxu0 0
      %2328 = vmatpush1.bf16.msra.mxu0 0
      %2329 = vmatprep.subr.bf16.mxu0 0
      %2330 = vmatpush1.bf16.msra.mxu0 0
      %2331 = vmatprep.subr.bf16.mxu0 0
      %2332 = vmatpush1.bf16.msra.mxu0 0
      %2333 = vmatprep.subr.bf16.mxu0 0
      %2334 = vmatpush1.bf16.msra.mxu0 0
      %2335 = vmatprep.subr.bf16.mxu0 0
      %2336 = vmatpush1.bf16.msra.mxu0 0
      %2337 = vmatprep.mubr.bf16.mxu0 0
      %2338 = vmatmul.mubr.bf16.gmra.mrb[0].mxu0 %v2235
      %v2339 = vpop.f32.mrb[0].mxu0
      %v2340 = vadd.f32 %v2255, %v2339
      %v2341 = vpop.f32.mrb[0].mxu0
      %v2342 = vpop.f32.mrb[0].mxu0
      %v2343 = vadd.f32 %v2255, %v2342
      %v2344 = vpop.f32.mrb[0].mxu0
      %2345 = vmatprep.mubr.bf16.mxu0 0
      %2346 = vmatmul.mubr.bf16.gmra.mrb[0].mxu0 %v2236
      %v2347 = vpop.f32.mrb[0].mxu0
      %v2348 = vadd.f32 %v2255, %v2347
      %v2349 = vpop.f32.mrb[0].mxu0
      %v2350 = vpop.f32.mrb[0].mxu0
      %v2351 = vadd.f32 %v2255, %v2350
      %v2352 = vpop.f32.mrb[0].mxu0
      %2353 = vmatprep.mubr.bf16.mxu0 0
      %2354 = vmatmul.mubr.bf16.gmra.mrb[0].mxu0 %v2237
      %v2355 = vpop.f32.mrb[0].mxu0
      %v2356 = vadd.f32 %v2255, %v2355
      %v2357 = vpop.f32.mrb[0].mxu0
      %v2358 = vpop.f32.mrb[0].mxu0
      %v2359 = vadd.f32 %v2255, %v2358
      %v2360 = vpop.f32.mrb[0].mxu0
      %2361 = vmatprep.mubr.bf16.mxu0 0
      %2362 = vmatmul.mubr.bf16.gmra.mrb[0].mxu0 %v2238
      %v2363 = vpop.f32.mrb[0].mxu0
      %v2364 = vadd.f32 %v2255, %v2363
      %v2365 = vpop.f32.mrb[0].mxu0
      %v2366 = vpop.f32.mrb[0].mxu0
      %v2367 = vadd.f32 %v2255, %v2366
      %v2368 = vpop.f32.mrb[0].mxu0
      %2369 = vmatprep.mubr.bf16.mxu0 0
      %2370 = vmatmul.mubr.bf16.gmra.mrb[0].mxu0 %v2239
      %v2371 = vpop.f32.mrb[0].mxu0
      %v2372 = vadd.f32 %v2255, %v2371
      %v2373 = vpop.f32.mrb[0].mxu0
      %v2374 = vpop.f32.mrb[0].mxu0
      %v2375 = vadd.f32 %v2255, %v2374
      %v2376 = vpop.f32.mrb[0].mxu0
      %2377 = vmatprep.mubr.bf16.mxu0 0
      %2378 = vmatmul.mubr.bf16.gmra.mrb[0].mxu0 %v2240
      %v2379 = vpop.f32.mrb[0].mxu0
      %v2380 = vadd.f32 %v2255, %v2379
      %v2381 = vpop.f32.mrb[0].mxu0
      %v2382 = vpop.f32.mrb[0].mxu0
      %v2383 = vadd.f32 %v2255, %v2382
      %v2384 = vpop.f32.mrb[0].mxu0
      %2385 = vmatprep.mubr.bf16.mxu0 0
      %2386 = vmatmul.mubr.bf16.gmra.mrb[0].mxu0 %v2241
      %v2387 = vpop.f32.mrb[0].mxu0
      %v2388 = vadd.f32 %v2255, %v2387
      %v2389 = vpop.f32.mrb[0].mxu0
      %v2390 = vpop.f32.mrb[0].mxu0
      %v2391 = vadd.f32 %v2255, %v2390
      %v2392 = vpop.f32.mrb[0].mxu0
      %2393 = vmatprep.mubr.bf16.mxu0 0
      %2394 = vmatmul.mubr.bf16.gmra.mrb[0].mxu0 %v2242
      %v2395 = vpop.f32.mrb[0].mxu0
      %v2396 = vadd.f32 %v2255, %v2395
      %v2397 = vpop.f32.mrb[0].mxu0
      %v2398 = vpop.f32.mrb[0].mxu0
      %v2399 = vadd.f32 %v2255, %v2398
      %v2400 = vpop.f32.mrb[0].mxu0
      %2401 = vmatprep.mubr.bf16.mxu0 0
      %2402 = vmatmul.mubr.bf16.gmra.mrb[0].mxu0 %v2243
      %v2403 = vpop.f32.mrb[0].mxu0
      %v2404 = vadd.f32 %v2255, %v2403
      %v2405 = vpop.f32.mrb[0].mxu0
      %v2406 = vpop.f32.mrb[0].mxu0
      %v2407 = vadd.f32 %v2255, %v2406
      %v2408 = vpop.f32.mrb[0].mxu0
      %2409 = vmatprep.mubr.bf16.mxu0 0
      %2410 = vmatmul.mubr.bf16.gmra.mrb[0].mxu0 %v2244
      %v2411 = vpop.f32.mrb[0].mxu0
      %v2412 = vadd.f32 %v2255, %v2411
      %v2413 = vpop.f32.mrb[0].mxu0
      %v2414 = vpop.f32.mrb[0].mxu0
      %v2415 = vadd.f32 %v2255, %v2414
      %v2416 = vpop.f32.mrb[0].mxu0
      %2417 = vmatprep.mubr.bf16.mxu0 0
      %2418 = vmatmul.mubr.bf16.gmra.mrb[0].mxu0 %v2245
      %v2419 = vpop.f32.mrb[0].mxu0
      %v2420 = vadd.f32 %v2255, %v2419
      %v2421 = vpop.f32.mrb[0].mxu0
      %v2422 = vpop.f32.mrb[0].mxu0
      %v2423 = vadd.f32 %v2255, %v2422
      %v2424 = vpop.f32.mrb[0].mxu0
      %2425 = vmatprep.mubr.bf16.mxu0 0
      %2426 = vmatmul.mubr.bf16.gmra.mrb[0].mxu0 %v2246
      %v2427 = vpop.f32.mrb[0].mxu0
      %v2428 = vadd.f32 %v2255, %v2427
      %v2429 = vpop.f32.mrb[0].mxu0
      %v2430 = vpop.f32.mrb[0].mxu0
      %v2431 = vadd.f32 %v2255, %v2430
      %v2432 = vpop.f32.mrb[0].mxu0
      %2433 = vmatprep.mubr.bf16.mxu0 0
      %2434 = vmatmul.mubr.bf16.gmra.mrb[0].mxu0 %v2247
      %v2435 = vpop.f32.mrb[0].mxu0
      %v2436 = vadd.f32 %v2255, %v2435
      %v2437 = vpop.f32.mrb[0].mxu0
      %v2438 = vpop.f32.mrb[0].mxu0
      %v2439 = vadd.f32 %v2255, %v2438
      %v2440 = vpop.f32.mrb[0].mxu0
      %2441 = vmatprep.mubr.bf16.mxu0 0
      %2442 = vmatmul.mubr.bf16.gmra.mrb[0].mxu0 %v2248
      %v2443 = vpop.f32.mrb[0].mxu0
      %v2444 = vadd.f32 %v2255, %v2443
      %v2445 = vpop.f32.mrb[0].mxu0
      %v2446 = vpop.f32.mrb[0].mxu0
      %v2447 = vadd.f32 %v2255, %v2446
      %v2448 = vpop.f32.mrb[0].mxu0
      %2449 = vmatprep.mubr.bf16.mxu0 0
      %2450 = vmatmul.mubr.bf16.gmra.mrb[0].mxu0 %v2249
      %v2451 = vpop.f32.mrb[0].mxu0
      %v2452 = vadd.f32 %v2255, %v2451
      %v2453 = vpop.f32.mrb[0].mxu0
      %v2454 = vpop.f32.mrb[0].mxu0
      %v2455 = vadd.f32 %v2255, %v2454
      %v2456 = vpop.f32.mrb[0].mxu0
      %2457 = vmatprep.mubr.bf16.mxu0 0
      %2458 = vmatmul.mubr.bf16.gmra.mrb[0].mxu0 %v2250
      %v2459 = vpop.f32.mrb[0].mxu0
      %v2460 = vadd.f32 %v2255, %v2459
      %v2461 = vpop.f32.mrb[0].mxu0
      %v2462 = vpop.f32.mrb[0].mxu0
      %v2463 = vadd.f32 %v2255, %v2462
      %v2464 = vpop.f32.mrb[0].mxu0
      %2465 = vdwg.mxu0
      %v2466 = vmax.f32 %v2340, 0.0
      %v2467 = vmax.f32 %v2343, 0.0
      %v2468 = vmax.f32 %v2348, 0.0
      %v2469 = vmax.f32 %v2351, 0.0
      %v2470 = vmax.f32 %v2356, 0.0
      %v2471 = vmax.f32 %v2359, 0.0
      %v2472 = vmax.f32 %v2364, 0.0
      %v2473 = vmax.f32 %v2367, 0.0
      %v2474 = vmax.f32 %v2372, 0.0
      %v2475 = vmax.f32 %v2375, 0.0
      %v2476 = vmax.f32 %v2380, 0.0
      %v2477 = vmax.f32 %v2383, 0.0
      %v2478 = vmax.f32 %v2388, 0.0
      %v2479 = vmax.f32 %v2391, 0.0
      %v2480 = vmax.f32 %v2396, 0.0
      %v2481 = vmax.f32 %v2399, 0.0
      %v2482 = vmax.f32 %v2404, 0.0
      %v2483 = vmax.f32 %v2407, 0.0
      %v2484 = vmax.f32 %v2412, 0.0
      %v2485 = vmax.f32 %v2415, 0.0
      %v2486 = vmax.f32 %v2420, 0.0
      %v2487 = vmax.f32 %v2423, 0.0
      %v2488 = vmax.f32 %v2428, 0.0
      %v2489 = vmax.f32 %v2431, 0.0
      %v2490 = vmax.f32 %v2436, 0.0
      %v2491 = vmax.f32 %v2439, 0.0
      %v2492 = vmax.f32 %v2444, 0.0
      %v2493 = vmax.f32 %v2447, 0.0
      %v2494 = vmax.f32 %v2452, 0.0
      %v2495 = vmax.f32 %v2455, 0.0
      %v2496 = vmax.f32 %v2460, 0.0
      %v2497 = vmax.f32 %v2463, 0.0
      %v2498 = vld [vmem:[%s6] sm:$0xf]
      %v2499 = vld [vmem:[%s6 + $0x4] sm:$0xf]
      %v2500 = vld [vmem:[%s6 + $0x8] sm:$0xf]
      %v2501 = vld [vmem:[%s6 + $0xc] sm:$0xf]
      %v2502 = vld [vmem:[%s6 + $0x10] sm:$0xf]
      %v2503 = vld [vmem:[%s6 + $0x14] sm:$0xf]
      %v2504 = vld [vmem:[%s6 + $0x18] sm:$0xf]
      %v2505 = vld [vmem:[%s6 + $0x1c] sm:$0xf]
      %v2506 = vld [vmem:[%s6 + $0x20] sm:$0xf]
      %v2507 = vld [vmem:[%s6 + $0x24] sm:$0xf]
      %v2508 = vld [vmem:[%s6 + $0x28] sm:$0xf]
      %v2509 = vld [vmem:[%s6 + $0x2c] sm:$0xf]
      %v2510 = vld [vmem:[%s6 + $0x30] sm:$0xf]
      %v2511 = vld [vmem:[%s6 + $0x34] sm:$0xf]
      %v2512 = vld [vmem:[%s6 + $0x38] sm:$0xf]
      %v2513 = vld [vmem:[%s6 + $0x3c] sm:$0xf]
      %v2514 = vld [vmem:[%s7] sm:$0x1]
      %v2515 = vpack.c.bf16 %v2467, %v2466
      %v2516 = vpack.c.bf16 %v2469, %v2468
      %v2517 = vpack.c.bf16 %v2471, %v2470
      %v2518 = vpack.c.bf16 %v2473, %v2472
      %v2519 = vpack.c.bf16 %v2475, %v2474
      %v2520 = vpack.c.bf16 %v2477, %v2476
      %v2521 = vpack.c.bf16 %v2479, %v2478
      %v2522 = vpack.c.bf16 %v2481, %v2480
      %v2523 = vpack.c.bf16 %v2483, %v2482
      %v2524 = vpack.c.bf16 %v2485, %v2484
      %v2525 = vpack.c.bf16 %v2487, %v2486
      %v2526 = vpack.c.bf16 %v2489, %v2488
      %v2527 = vpack.c.bf16 %v2491, %v2490
      %v2528 = vpack.c.bf16 %v2493, %v2492
      %v2529 = vpack.c.bf16 %v2495, %v2494
      %v2530 = vpack.c.bf16 %v2497, %v2496
      %v2532 = vlaneseq
      %v2533 = vshrl.u32 %v2532, 7
      %v2534 = vsub.s32 0, %v2533
      %v2535 = vrot.slane %v2514, %v2534
      %v2553 = vunpack.c.l.b16 %v2498
      %v2554 = vunpack.c.l.b16 %v2499
      %v2555 = vunpack.c.l.b16 %v2500
      %v2556 = vunpack.c.l.b16 %v2501
      %v2557 = vunpack.c.l.b16 %v2502
      %v2558 = vunpack.c.l.b16 %v2503
      %v2559 = vunpack.c.l.b16 %v2504
      %v2560 = vunpack.c.l.b16 %v2505
      %v2561 = vunpack.c.l.b16 %v2506
      %v2562 = vunpack.c.l.b16 %v2507
      %v2563 = vunpack.c.l.b16 %v2508
      %v2564 = vunpack.c.l.b16 %v2509
      %v2565 = vunpack.c.l.b16 %v2510
      %v2566 = vunpack.c.l.b16 %v2511
      %v2567 = vunpack.c.l.b16 %v2512
      %v2568 = vunpack.c.l.b16 %v2513
      %v2569 = vpack.c.b16 %v2554, %v2553
      %v2570 = vpack.c.b16 %v2556, %v2555
      %v2571 = vpack.c.b16 %v2558, %v2557
      %v2572 = vpack.c.b16 %v2560, %v2559
      %v2573 = vpack.c.b16 %v2562, %v2561
      %v2574 = vpack.c.b16 %v2564, %v2563
      %v2575 = vpack.c.b16 %v2566, %v2565
      %v2576 = vpack.c.b16 %v2568, %v2567
      %2585 = vmatprep.subr.bf16.mxu0 0
      %2586 = vmatpush1.bf16.msra.mxu0 %v2569
      %2587 = vmatprep.subr.bf16.mxu0 0
      %2588 = vmatpush1.bf16.msra.mxu0 %v2570
      %2589 = vmatprep.subr.bf16.mxu0 0
      %2590 = vmatpush1.bf16.msra.mxu0 %v2571
      %2591 = vmatprep.subr.bf16.mxu0 0
      %2592 = vmatpush1.bf16.msra.mxu0 %v2572
      %2593 = vmatprep.subr.bf16.mxu0 0
      %2594 = vmatpush1.bf16.msra.mxu0 %v2573
      %2595 = vmatprep.subr.bf16.mxu0 0
      %2596 = vmatpush1.bf16.msra.mxu0 %v2574
      %2597 = vmatprep.subr.bf16.mxu0 0
      %2598 = vmatpush1.bf16.msra.mxu0 %v2575
      %2599 = vmatprep.subr.bf16.mxu0 0
      %2600 = vmatpush1.bf16.msra.mxu0 %v2576
      %2601 = vmatprep.subr.bf16.mxu0 0
      %2602 = vmatpush1.bf16.msra.mxu0 0
      %2603 = vmatprep.subr.bf16.mxu0 0
      %2604 = vmatpush1.bf16.msra.mxu0 0
      %2605 = vmatprep.subr.bf16.mxu0 0
      %2606 = vmatpush1.bf16.msra.mxu0 0
      %2607 = vmatprep.subr.bf16.mxu0 0
      %2608 = vmatpush1.bf16.msra.mxu0 0
      %2609 = vmatprep.subr.bf16.mxu0 0
      %2610 = vmatpush1.bf16.msra.mxu0 0
      %2611 = vmatprep.subr.bf16.mxu0 0
      %2612 = vmatpush1.bf16.msra.mxu0 0
      %2613 = vmatprep.subr.bf16.mxu0 0
      %2614 = vmatpush1.bf16.msra.mxu0 0
      %2615 = vmatprep.subr.bf16.mxu0 0
      %2616 = vmatpush1.bf16.msra.mxu0 0
      %2617 = vmatprep.mubr.bf16.mxu0 0
      %2618 = vmatmul.mubr.bf16.gmra.mrb[0].mxu0 %v2515
      %v2619 = vpop.f32.mrb[0].mxu0
      %v2620 = vadd.f32 %v2535, %v2619
      %v2621 = vpop.f32.mrb[0].mxu0
      %v2622 = vpop.f32.mrb[0].mxu0
      %v2623 = vadd.f32 %v2535, %v2622
      %v2624 = vpop.f32.mrb[0].mxu0
      %2625 = vmatprep.mubr.bf16.mxu0 0
      %2626 = vmatmul.mubr.bf16.gmra.mrb[0].mxu0 %v2516
      %v2627 = vpop.f32.mrb[0].mxu0
      %v2628 = vadd.f32 %v2535, %v2627
      %v2629 = vpop.f32.mrb[0].mxu0
      %v2630 = vpop.f32.mrb[0].mxu0
      %v2631 = vadd.f32 %v2535, %v2630
      %v2632 = vpop.f32.mrb[0].mxu0
      %2633 = vmatprep.mubr.bf16.mxu0 0
      %2634 = vmatmul.mubr.bf16.gmra.mrb[0].mxu0 %v2517
      %v2635 = vpop.f32.mrb[0].mxu0
      %v2636 = vadd.f32 %v2535, %v2635
      %v2637 = vpop.f32.mrb[0].mxu0
      %v2638 = vpop.f32.mrb[0].mxu0
      %v2639 = vadd.f32 %v2535, %v2638
      %v2640 = vpop.f32.mrb[0].mxu0
      %2641 = vmatprep.mubr.bf16.mxu0 0
      %2642 = vmatmul.mubr.bf16.gmra.mrb[0].mxu0 %v2518
      %v2643 = vpop.f32.mrb[0].mxu0
      %v2644 = vadd.f32 %v2535, %v2643
      %v2645 = vpop.f32.mrb[0].mxu0
      %v2646 = vpop.f32.mrb[0].mxu0
      %v2647 = vadd.f32 %v2535, %v2646
      %v2648 = vpop.f32.mrb[0].mxu0
      %2649 = vmatprep.mubr.bf16.mxu0 0
      %2650 = vmatmul.mubr.bf16.gmra.mrb[0].mxu0 %v2519
      %v2651 = vpop.f32.mrb[0].mxu0
      %v2652 = vadd.f32 %v2535, %v2651
      %v2653 = vpop.f32.mrb[0].mxu0
      %v2654 = vpop.f32.mrb[0].mxu0
      %v2655 = vadd.f32 %v2535, %v2654
      %v2656 = vpop.f32.mrb[0].mxu0
      %2657 = vmatprep.mubr.bf16.mxu0 0
      %2658 = vmatmul.mubr.bf16.gmra.mrb[0].mxu0 %v2520
      %v2659 = vpop.f32.mrb[0].mxu0
      %v2660 = vadd.f32 %v2535, %v2659
      %v2661 = vpop.f32.mrb[0].mxu0
      %v2662 = vpop.f32.mrb[0].mxu0
      %v2663 = vadd.f32 %v2535, %v2662
      %v2664 = vpop.f32.mrb[0].mxu0
      %2665 = vmatprep.mubr.bf16.mxu0 0
      %2666 = vmatmul.mubr.bf16.gmra.mrb[0].mxu0 %v2521
      %v2667 = vpop.f32.mrb[0].mxu0
      %v2668 = vadd.f32 %v2535, %v2667
      %v2669 = vpop.f32.mrb[0].mxu0
      %v2670 = vpop.f32.mrb[0].mxu0
      %v2671 = vadd.f32 %v2535, %v2670
      %v2672 = vpop.f32.mrb[0].mxu0
      %2673 = vmatprep.mubr.bf16.mxu0 0
      %2674 = vmatmul.mubr.bf16.gmra.mrb[0].mxu0 %v2522
      %v2675 = vpop.f32.mrb[0].mxu0
      %v2676 = vadd.f32 %v2535, %v2675
      %v2677 = vpop.f32.mrb[0].mxu0
      %v2678 = vpop.f32.mrb[0].mxu0
      %v2679 = vadd.f32 %v2535, %v2678
      %v2680 = vpop.f32.mrb[0].mxu0
      %2681 = vmatprep.mubr.bf16.mxu0 0
      %2682 = vmatmul.mubr.bf16.gmra.mrb[0].mxu0 %v2523
      %v2683 = vpop.f32.mrb[0].mxu0
      %v2684 = vadd.f32 %v2535, %v2683
      %v2685 = vpop.f32.mrb[0].mxu0
      %v2686 = vpop.f32.mrb[0].mxu0
      %v2687 = vadd.f32 %v2535, %v2686
      %v2688 = vpop.f32.mrb[0].mxu0
      %2689 = vmatprep.mubr.bf16.mxu0 0
      %2690 = vmatmul.mubr.bf16.gmra.mrb[0].mxu0 %v2524
      %v2691 = vpop.f32.mrb[0].mxu0
      %v2692 = vadd.f32 %v2535, %v2691
      %v2693 = vpop.f32.mrb[0].mxu0
      %v2694 = vpop.f32.mrb[0].mxu0
      %v2695 = vadd.f32 %v2535, %v2694
      %v2696 = vpop.f32.mrb[0].mxu0
      %2697 = vmatprep.mubr.bf16.mxu0 0
      %2698 = vmatmul.mubr.bf16.gmra.mrb[0].mxu0 %v2525
      %v2699 = vpop.f32.mrb[0].mxu0
      %v2700 = vadd.f32 %v2535, %v2699
      %v2701 = vpop.f32.mrb[0].mxu0
      %v2702 = vpop.f32.mrb[0].mxu0
      %v2703 = vadd.f32 %v2535, %v2702
      %v2704 = vpop.f32.mrb[0].mxu0
      %2705 = vmatprep.mubr.bf16.mxu0 0
      %2706 = vmatmul.mubr.bf16.gmra.mrb[0].mxu0 %v2526
      %v2707 = vpop.f32.mrb[0].mxu0
      %v2708 = vadd.f32 %v2535, %v2707
      %v2709 = vpop.f32.mrb[0].mxu0
      %v2710 = vpop.f32.mrb[0].mxu0
      %v2711 = vadd.f32 %v2535, %v2710
      %v2712 = vpop.f32.mrb[0].mxu0
      %2713 = vmatprep.mubr.bf16.mxu0 0
      %2714 = vmatmul.mubr.bf16.gmra.mrb[0].mxu0 %v2527
      %v2715 = vpop.f32.mrb[0].mxu0
      %v2716 = vadd.f32 %v2535, %v2715
      %v2717 = vpop.f32.mrb[0].mxu0
      %v2718 = vpop.f32.mrb[0].mxu0
      %v2719 = vadd.f32 %v2535, %v2718
      %v2720 = vpop.f32.mrb[0].mxu0
      %2721 = vmatprep.mubr.bf16.mxu0 0
      %2722 = vmatmul.mubr.bf16.gmra.mrb[0].mxu0 %v2528
      %v2723 = vpop.f32.mrb[0].mxu0
      %v2724 = vadd.f32 %v2535, %v2723
      %v2725 = vpop.f32.mrb[0].mxu0
      %v2726 = vpop.f32.mrb[0].mxu0
      %v2727 = vadd.f32 %v2535, %v2726
      %v2728 = vpop.f32.mrb[0].mxu0
      %2729 = vmatprep.mubr.bf16.mxu0 0
      %2730 = vmatmul.mubr.bf16.gmra.mrb[0].mxu0 %v2529
      %v2731 = vpop.f32.mrb[0].mxu0
      %v2732 = vadd.f32 %v2535, %v2731
      %v2733 = vpop.f32.mrb[0].mxu0
      %v2734 = vpop.f32.mrb[0].mxu0
      %v2735 = vadd.f32 %v2535, %v2734
      %v2736 = vpop.f32.mrb[0].mxu0
      %2737 = vmatprep.mubr.bf16.mxu0 0
      %2738 = vmatmul.mubr.bf16.gmra.mrb[0].mxu0 %v2530
      %v2739 = vpop.f32.mrb[0].mxu0
      %v2740 = vadd.f32 %v2535, %v2739
      %v2741 = vpop.f32.mrb[0].mxu0
      %v2742 = vpop.f32.mrb[0].mxu0
      %v2743 = vadd.f32 %v2535, %v2742
      %v2744 = vpop.f32.mrb[0].mxu0
      %2745 = vdwg.mxu0
      %v2746 = vmax.f32 %v2620, 0.0
      %v2747 = vmax.f32 %v2623, 0.0
      %v2748 = vmax.f32 %v2628, 0.0
      %v2749 = vmax.f32 %v2631, 0.0
      %v2750 = vmax.f32 %v2636, 0.0
      %v2751 = vmax.f32 %v2639, 0.0
      %v2752 = vmax.f32 %v2644, 0.0
      %v2753 = vmax.f32 %v2647, 0.0
      %v2754 = vmax.f32 %v2652, 0.0
      %v2755 = vmax.f32 %v2655, 0.0
      %v2756 = vmax.f32 %v2660, 0.0
      %v2757 = vmax.f32 %v2663, 0.0
      %v2758 = vmax.f32 %v2668, 0.0
      %v2759 = vmax.f32 %v2671, 0.0
      %v2760 = vmax.f32 %v2676, 0.0
      %v2761 = vmax.f32 %v2679, 0.0
      %v2762 = vmax.f32 %v2684, 0.0
      %v2763 = vmax.f32 %v2687, 0.0
      %v2764 = vmax.f32 %v2692, 0.0
      %v2765 = vmax.f32 %v2695, 0.0
      %v2766 = vmax.f32 %v2700, 0.0
      %v2767 = vmax.f32 %v2703, 0.0
      %v2768 = vmax.f32 %v2708, 0.0
      %v2769 = vmax.f32 %v2711, 0.0
      %v2770 = vmax.f32 %v2716, 0.0
      %v2771 = vmax.f32 %v2719, 0.0
      %v2772 = vmax.f32 %v2724, 0.0
      %v2773 = vmax.f32 %v2727, 0.0
      %v2774 = vmax.f32 %v2732, 0.0
      %v2775 = vmax.f32 %v2735, 0.0
      %v2776 = vmax.f32 %v2740, 0.0
      %v2777 = vmax.f32 %v2743, 0.0
      %v2778 = vpack.c.bf16 %v2747, %v2746
      %v2779 = vpack.c.bf16 %v2749, %v2748
      %v2780 = vpack.c.bf16 %v2751, %v2750
      %v2781 = vpack.c.bf16 %v2753, %v2752
      %v2782 = vpack.c.bf16 %v2755, %v2754
      %v2783 = vpack.c.bf16 %v2757, %v2756
      %v2784 = vpack.c.bf16 %v2759, %v2758
      %v2785 = vpack.c.bf16 %v2761, %v2760
      %v2786 = vpack.c.bf16 %v2763, %v2762
      %v2787 = vpack.c.bf16 %v2765, %v2764
      %v2788 = vpack.c.bf16 %v2767, %v2766
      %v2789 = vpack.c.bf16 %v2769, %v2768
      %v2790 = vpack.c.bf16 %v2771, %v2770
      %v2791 = vpack.c.bf16 %v2773, %v2772
      %v2792 = vpack.c.bf16 %v2775, %v2774
      %v2793 = vpack.c.bf16 %v2777, %v2776
      %v2794 = vld [vmem:[%s8] sm:$0xf]
      %v2795 = vld [vmem:[%s8 + $0x4] sm:$0xf]
      %v2796 = vld [vmem:[%s8 + $0x8] sm:$0xf]
      %v2797 = vld [vmem:[%s8 + $0xc] sm:$0xf]
      %v2798 = vld [vmem:[%s8 + $0x10] sm:$0xf]
      %v2799 = vld [vmem:[%s8 + $0x14] sm:$0xf]
      %v2800 = vld [vmem:[%s8 + $0x18] sm:$0xf]
      %v2801 = vld [vmem:[%s8 + $0x1c] sm:$0xf]
      %v2802 = vld [vmem:[%s8 + $0x20] sm:$0xf]
      %v2803 = vld [vmem:[%s8 + $0x24] sm:$0xf]
      %v2804 = vld [vmem:[%s8 + $0x28] sm:$0xf]
      %v2805 = vld [vmem:[%s8 + $0x2c] sm:$0xf]
      %v2806 = vld [vmem:[%s8 + $0x30] sm:$0xf]
      %v2807 = vld [vmem:[%s8 + $0x34] sm:$0xf]
      %v2808 = vld [vmem:[%s8 + $0x38] sm:$0xf]
      %v2809 = vld [vmem:[%s8 + $0x3c] sm:$0xf]
      %v2810 = vld [vmem:[%s9] sm:$0x1]
      %v2812 = vlaneseq
      %v2813 = vshrl.u32 %v2812, 7
      %v2814 = vsub.s32 0, %v2813
      %v2815 = vrot.slane %v2810, %v2814
      %v2833 = vunpack.c.l.b16 %v2794
      %v2834 = vunpack.c.l.b16 %v2795
      %v2835 = vunpack.c.l.b16 %v2796
      %v2836 = vunpack.c.l.b16 %v2797
      %v2837 = vunpack.c.l.b16 %v2798
      %v2838 = vunpack.c.l.b16 %v2799
      %v2839 = vunpack.c.l.b16 %v2800
      %v2840 = vunpack.c.l.b16 %v2801
      %v2841 = vunpack.c.l.b16 %v2802
      %v2842 = vunpack.c.l.b16 %v2803
      %v2843 = vunpack.c.l.b16 %v2804
      %v2844 = vunpack.c.l.b16 %v2805
      %v2845 = vunpack.c.l.b16 %v2806
      %v2846 = vunpack.c.l.b16 %v2807
      %v2847 = vunpack.c.l.b16 %v2808
      %v2848 = vunpack.c.l.b16 %v2809
      %v2849 = vpack.c.b16 %v2834, %v2833
      %v2850 = vpack.c.b16 %v2836, %v2835
      %v2851 = vpack.c.b16 %v2838, %v2837
      %v2852 = vpack.c.b16 %v2840, %v2839
      %v2853 = vpack.c.b16 %v2842, %v2841
      %v2854 = vpack.c.b16 %v2844, %v2843
      %v2855 = vpack.c.b16 %v2846, %v2845
      %v2856 = vpack.c.b16 %v2848, %v2847
      %2865 = vmatprep.subr.bf16.mxu0 0
      %2866 = vmatpush1.bf16.msra.mxu0 %v2849
      %2867 = vmatprep.subr.bf16.mxu0 0
      %2868 = vmatpush1.bf16.msra.mxu0 %v2850
      %2869 = vmatprep.subr.bf16.mxu0 0
      %2870 = vmatpush1.bf16.msra.mxu0 %v2851
      %2871 = vmatprep.subr.bf16.mxu0 0
      %2872 = vmatpush1.bf16.msra.mxu0 %v2852
      %2873 = vmatprep.subr.bf16.mxu0 0
      %2874 = vmatpush1.bf16.msra.mxu0 %v2853
      %2875 = vmatprep.subr.bf16.mxu0 0
      %2876 = vmatpush1.bf16.msra.mxu0 %v2854
      %2877 = vmatprep.subr.bf16.mxu0 0
      %2878 = vmatpush1.bf16.msra.mxu0 %v2855
      %2879 = vmatprep.subr.bf16.mxu0 0
      %2880 = vmatpush1.bf16.msra.mxu0 %v2856
      %2881 = vmatprep.subr.bf16.mxu0 0
      %2882 = vmatpush1.bf16.msra.mxu0 0
      %2883 = vmatprep.subr.bf16.mxu0 0
      %2884 = vmatpush1.bf16.msra.mxu0 0
      %2885 = vmatprep.subr.bf16.mxu0 0
      %2886 = vmatpush1.bf16.msra.mxu0 0
      %2887 = vmatprep.subr.bf16.mxu0 0
      %2888 = vmatpush1.bf16.msra.mxu0 0
      %2889 = vmatprep.subr.bf16.mxu0 0
      %2890 = vmatpush1.bf16.msra.mxu0 0
      %2891 = vmatprep.subr.bf16.mxu0 0
      %2892 = vmatpush1.bf16.msra.mxu0 0
      %2893 = vmatprep.subr.bf16.mxu0 0
      %2894 = vmatpush1.bf16.msra.mxu0 0
      %2895 = vmatprep.subr.bf16.mxu0 0
      %2896 = vmatpush1.bf16.msra.mxu0 0
      %2897 = vmatprep.mubr.bf16.mxu0 0
      %2898 = vmatmul.mubr.bf16.gmra.mrb[0].mxu0 %v2778
      %v2899 = vpop.f32.mrb[0].mxu0
      %v2900 = vadd.f32 %v2815, %v2899
      %v2901 = vpop.f32.mrb[0].mxu0
      %v2902 = vpop.f32.mrb[0].mxu0
      %v2903 = vadd.f32 %v2815, %v2902
      %v2904 = vpop.f32.mrb[0].mxu0
      %2905 = vmatprep.mubr.bf16.mxu0 0
      %2906 = vmatmul.mubr.bf16.gmra.mrb[0].mxu0 %v2779
      %v2907 = vpop.f32.mrb[0].mxu0
      %v2908 = vadd.f32 %v2815, %v2907
      %v2909 = vpop.f32.mrb[0].mxu0
      %v2910 = vpop.f32.mrb[0].mxu0
      %v2911 = vadd.f32 %v2815, %v2910
      %v2912 = vpop.f32.mrb[0].mxu0
      %2913 = vmatprep.mubr.bf16.mxu0 0
      %2914 = vmatmul.mubr.bf16.gmra.mrb[0].mxu0 %v2780
      %v2915 = vpop.f32.mrb[0].mxu0
      %v2916 = vadd.f32 %v2815, %v2915
      %v2917 = vpop.f32.mrb[0].mxu0
      %v2918 = vpop.f32.mrb[0].mxu0
      %v2919 = vadd.f32 %v2815, %v2918
      %v2920 = vpop.f32.mrb[0].mxu0
      %2921 = vmatprep.mubr.bf16.mxu0 0
      %2922 = vmatmul.mubr.bf16.gmra.mrb[0].mxu0 %v2781
      %v2923 = vpop.f32.mrb[0].mxu0
      %v2924 = vadd.f32 %v2815, %v2923
      %v2925 = vpop.f32.mrb[0].mxu0
      %v2926 = vpop.f32.mrb[0].mxu0
      %v2927 = vadd.f32 %v2815, %v2926
      %v2928 = vpop.f32.mrb[0].mxu0
      %2929 = vmatprep.mubr.bf16.mxu0 0
      %2930 = vmatmul.mubr.bf16.gmra.mrb[0].mxu0 %v2782
      %v2931 = vpop.f32.mrb[0].mxu0
      %v2932 = vadd.f32 %v2815, %v2931
      %v2933 = vpop.f32.mrb[0].mxu0
      %v2934 = vpop.f32.mrb[0].mxu0
      %v2935 = vadd.f32 %v2815, %v2934
      %v2936 = vpop.f32.mrb[0].mxu0
      %2937 = vmatprep.mubr.bf16.mxu0 0
      %2938 = vmatmul.mubr.bf16.gmra.mrb[0].mxu0 %v2783
      %v2939 = vpop.f32.mrb[0].mxu0
      %v2940 = vadd.f32 %v2815, %v2939
      %v2941 = vpop.f32.mrb[0].mxu0
      %v2942 = vpop.f32.mrb[0].mxu0
      %v2943 = vadd.f32 %v2815, %v2942
      %v2944 = vpop.f32.mrb[0].mxu0
      %2945 = vmatprep.mubr.bf16.mxu0 0
      %2946 = vmatmul.mubr.bf16.gmra.mrb[0].mxu0 %v2784
      %v2947 = vpop.f32.mrb[0].mxu0
      %v2948 = vadd.f32 %v2815, %v2947
      %v2949 = vpop.f32.mrb[0].mxu0
      %v2950 = vpop.f32.mrb[0].mxu0
      %v2951 = vadd.f32 %v2815, %v2950
      %v2952 = vpop.f32.mrb[0].mxu0
      %2953 = vmatprep.mubr.bf16.mxu0 0
      %2954 = vmatmul.mubr.bf16.gmra.mrb[0].mxu0 %v2785
      %v2955 = vpop.f32.mrb[0].mxu0
      %v2956 = vadd.f32 %v2815, %v2955
      %v2957 = vpop.f32.mrb[0].mxu0
      %v2958 = vpop.f32.mrb[0].mxu0
      %v2959 = vadd.f32 %v2815, %v2958
      %v2960 = vpop.f32.mrb[0].mxu0
      %2961 = vmatprep.mubr.bf16.mxu0 0
      %2962 = vmatmul.mubr.bf16.gmra.mrb[0].mxu0 %v2786
      %v2963 = vpop.f32.mrb[0].mxu0
      %v2964 = vadd.f32 %v2815, %v2963
      %v2965 = vpop.f32.mrb[0].mxu0
      %v2966 = vpop.f32.mrb[0].mxu0
      %v2967 = vadd.f32 %v2815, %v2966
      %v2968 = vpop.f32.mrb[0].mxu0
      %2969 = vmatprep.mubr.bf16.mxu0 0
      %2970 = vmatmul.mubr.bf16.gmra.mrb[0].mxu0 %v2787
      %v2971 = vpop.f32.mrb[0].mxu0
      %v2972 = vadd.f32 %v2815, %v2971
      %v2973 = vpop.f32.mrb[0].mxu0
      %v2974 = vpop.f32.mrb[0].mxu0
      %v2975 = vadd.f32 %v2815, %v2974
      %v2976 = vpop.f32.mrb[0].mxu0
      %2977 = vmatprep.mubr.bf16.mxu0 0
      %2978 = vmatmul.mubr.bf16.gmra.mrb[0].mxu0 %v2788
      %v2979 = vpop.f32.mrb[0].mxu0
      %v2980 = vadd.f32 %v2815, %v2979
      %v2981 = vpop.f32.mrb[0].mxu0
      %v2982 = vpop.f32.mrb[0].mxu0
      %v2983 = vadd.f32 %v2815, %v2982
      %v2984 = vpop.f32.mrb[0].mxu0
      %2985 = vmatprep.mubr.bf16.mxu0 0
      %2986 = vmatmul.mubr.bf16.gmra.mrb[0].mxu0 %v2789
      %v2987 = vpop.f32.mrb[0].mxu0
      %v2988 = vadd.f32 %v2815, %v2987
      %v2989 = vpop.f32.mrb[0].mxu0
      %v2990 = vpop.f32.mrb[0].mxu0
      %v2991 = vadd.f32 %v2815, %v2990
      %v2992 = vpop.f32.mrb[0].mxu0
      %2993 = vmatprep.mubr.bf16.mxu0 0
      %2994 = vmatmul.mubr.bf16.gmra.mrb[0].mxu0 %v2790
      %v2995 = vpop.f32.mrb[0].mxu0
      %v2996 = vadd.f32 %v2815, %v2995
      %v2997 = vpop.f32.mrb[0].mxu0
      %v2998 = vpop.f32.mrb[0].mxu0
      %v2999 = vadd.f32 %v2815, %v2998
      %v3000 = vpop.f32.mrb[0].mxu0
      %3001 = vmatprep.mubr.bf16.mxu0 0
      %3002 = vmatmul.mubr.bf16.gmra.mrb[0].mxu0 %v2791
      %v3003 = vpop.f32.mrb[0].mxu0
      %v3004 = vadd.f32 %v2815, %v3003
      %v3005 = vpop.f32.mrb[0].mxu0
      %v3006 = vpop.f32.mrb[0].mxu0
      %v3007 = vadd.f32 %v2815, %v3006
      %v3008 = vpop.f32.mrb[0].mxu0
      %3009 = vmatprep.mubr.bf16.mxu0 0
      %3010 = vmatmul.mubr.bf16.gmra.mrb[0].mxu0 %v2792
      %v3011 = vpop.f32.mrb[0].mxu0
      %v3012 = vadd.f32 %v2815, %v3011
      %v3013 = vpop.f32.mrb[0].mxu0
      %v3014 = vpop.f32.mrb[0].mxu0
      %v3015 = vadd.f32 %v2815, %v3014
      %v3016 = vpop.f32.mrb[0].mxu0
      %3017 = vmatprep.mubr.bf16.mxu0 0
      %3018 = vmatmul.mubr.bf16.gmra.mrb[0].mxu0 %v2793
      %v3019 = vpop.f32.mrb[0].mxu0
      %v3020 = vadd.f32 %v2815, %v3019
      %v3021 = vpop.f32.mrb[0].mxu0
      %v3022 = vpop.f32.mrb[0].mxu0
      %v3023 = vadd.f32 %v2815, %v3022
      %v3024 = vpop.f32.mrb[0].mxu0
      %3025 = vdwg.mxu0
      %vm3026 = vcmask 64512
      %3027 = vst.msk [vmem:[%s421] sm:$0xff] %vm3026, %v2900
      %3028 = vst.msk [vmem:[%s421 + $0x8] sm:$0xff] %vm3026, %v2903
      %3029 = vst.msk [vmem:[%s421 + $0x10] sm:$0xff] %vm3026, %v2908
      %3030 = vst.msk [vmem:[%s421 + $0x18] sm:$0xff] %vm3026, %v2911
      %3031 = vst.msk [vmem:[%s421 + $0x20] sm:$0xff] %vm3026, %v2916
      %3032 = vst.msk [vmem:[%s421 + $0x28] sm:$0xff] %vm3026, %v2919
      %3033 = vst.msk [vmem:[%s421 + $0x30] sm:$0xff] %vm3026, %v2924
      %3034 = vst.msk [vmem:[%s421 + $0x38] sm:$0xff] %vm3026, %v2927
      %3035 = vst.msk [vmem:[%s421 + $0x40] sm:$0xff] %vm3026, %v2932
      %3036 = vst.msk [vmem:[%s421 + $0x48] sm:$0xff] %vm3026, %v2935
      %3037 = vst.msk [vmem:[%s421 + $0x50] sm:$0xff] %vm3026, %v2940
      %3038 = vst.msk [vmem:[%s421 + $0x58] sm:$0xff] %vm3026, %v2943
      %3039 = vst.msk [vmem:[%s421 + $0x60] sm:$0xff] %vm3026, %v2948
      %3040 = vst.msk [vmem:[%s421 + $0x68] sm:$0xff] %vm3026, %v2951
      %3041 = vst.msk [vmem:[%s421 + $0x70] sm:$0xff] %vm3026, %v2956
      %3042 = vst.msk [vmem:[%s421 + $0x78] sm:$0xff] %vm3026, %v2959
      %3043 = vst.msk [vmem:[%s421 + $0x80] sm:$0xff] %vm3026, %v2964
      %3044 = vst.msk [vmem:[%s421 + $0x88] sm:$0xff] %vm3026, %v2967
      %3045 = vst.msk [vmem:[%s421 + $0x90] sm:$0xff] %vm3026, %v2972
      %3046 = vst.msk [vmem:[%s421 + $0x98] sm:$0xff] %vm3026, %v2975
      %3047 = vst.msk [vmem:[%s421 + $0xa0] sm:$0xff] %vm3026, %v2980
      %3048 = vst.msk [vmem:[%s421 + $0xa8] sm:$0xff] %vm3026, %v2983
      %3049 = vst.msk [vmem:[%s421 + $0xb0] sm:$0xff] %vm3026, %v2988
      %3050 = vst.msk [vmem:[%s421 + $0xb8] sm:$0xff] %vm3026, %v2991
      %3051 = vst.msk [vmem:[%s421 + $0xc0] sm:$0xff] %vm3026, %v2996
      %3052 = vst.msk [vmem:[%s421 + $0xc8] sm:$0xff] %vm3026, %v2999
      %3053 = vst.msk [vmem:[%s421 + $0xd0] sm:$0xff] %vm3026, %v3004
      %3054 = vst.msk [vmem:[%s421 + $0xd8] sm:$0xff] %vm3026, %v3007
      %3055 = vst.msk [vmem:[%s421 + $0xe0] sm:$0xff] %vm3026, %v3012
      %3056 = vst.msk [vmem:[%s421 + $0xe8] sm:$0xff] %vm3026, %v3015
      %3057 = vst.msk [vmem:[%s421 + $0xf0] sm:$0xff] %vm3026, %v3020
      %3058 = vst.msk [vmem:[%s421 + $0xf8] sm:$0xff] %vm3026, %v3023
      %v3059 = vld [vmem:[%s415] sm:$0xf]
      %v3060 = vld [vmem:[%s415 + $0x4] sm:$0xf]
      %v3061 = vld [vmem:[%s415 + $0x8] sm:$0xf]
      %v3062 = vld [vmem:[%s415 + $0xc] sm:$0xf]
      %v3063 = vld [vmem:[%s415 + $0x10] sm:$0xf]
      %v3064 = vld [vmem:[%s415 + $0x14] sm:$0xf]
      %v3065 = vld [vmem:[%s415 + $0x18] sm:$0xf]
      %v3066 = vld [vmem:[%s415 + $0x1c] sm:$0xf]
      %v3067 = vld [vmem:[%s415 + $0x20] sm:$0xf]
      %v3068 = vld [vmem:[%s415 + $0x24] sm:$0xf]
      %v3069 = vld [vmem:[%s415 + $0x28] sm:$0xf]
      %v3070 = vld [vmem:[%s415 + $0x2c] sm:$0xf]
      %v3071 = vld [vmem:[%s415 + $0x30] sm:$0xf]
      %v3072 = vld [vmem:[%s415 + $0x34] sm:$0xf]
      %v3073 = vld [vmem:[%s415 + $0x38] sm:$0xf]
      %v3074 = vld [vmem:[%s415 + $0x3c] sm:$0xf]
      %v3075 = vld [vmem:[%s415 + $0x40] sm:$0xf]
      %v3076 = vld [vmem:[%s415 + $0x44] sm:$0xf]
      %v3077 = vld [vmem:[%s415 + $0x48] sm:$0xf]
      %v3078 = vld [vmem:[%s415 + $0x4c] sm:$0xf]
      %v3079 = vld [vmem:[%s415 + $0x50] sm:$0xf]
      %v3080 = vld [vmem:[%s415 + $0x54] sm:$0xf]
      %v3081 = vld [vmem:[%s415 + $0x58] sm:$0xf]
      %v3082 = vld [vmem:[%s415 + $0x5c] sm:$0xf]
      %v3083 = vld [vmem:[%s415 + $0x60] sm:$0xf]
      %v3084 = vld [vmem:[%s415 + $0x64] sm:$0xf]
      %v3085 = vld [vmem:[%s415 + $0x68] sm:$0xf]
      %v3086 = vld [vmem:[%s415 + $0x6c] sm:$0xf]
      %v3087 = vld [vmem:[%s415 + $0x70] sm:$0xf]
      %v3088 = vld [vmem:[%s415 + $0x74] sm:$0xf]
      %v3089 = vld [vmem:[%s415 + $0x78] sm:$0xf]
      %v3090 = vld [vmem:[%s415 + $0x7c] sm:$0xf]
      %v3091 = vunpack.c.l.bf16 %v3059
      %v3092 = vunpack.c.l.bf16 %v3060
      %v3093 = vunpack.c.l.bf16 %v3061
      %v3094 = vunpack.c.l.bf16 %v3062
      %v3095 = vunpack.c.l.bf16 %v3063
      %v3096 = vunpack.c.l.bf16 %v3064
      %v3097 = vunpack.c.l.bf16 %v3065
      %v3098 = vunpack.c.l.bf16 %v3066
      %v3099 = vunpack.c.l.bf16 %v3067
      %v3100 = vunpack.c.l.bf16 %v3068
      %v3101 = vunpack.c.l.bf16 %v3069
      %v3102 = vunpack.c.l.bf16 %v3070
      %v3103 = vunpack.c.l.bf16 %v3071
      %v3104 = vunpack.c.l.bf16 %v3072
      %v3105 = vunpack.c.l.bf16 %v3073
      %v3106 = vunpack.c.l.bf16 %v3074
      %v3107 = vunpack.c.l.bf16 %v3075
      %v3108 = vunpack.c.l.bf16 %v3076
      %v3109 = vunpack.c.l.bf16 %v3077
      %v3110 = vunpack.c.l.bf16 %v3078
      %v3111 = vunpack.c.l.bf16 %v3079
      %v3112 = vunpack.c.l.bf16 %v3080
      %v3113 = vunpack.c.l.bf16 %v3081
      %v3114 = vunpack.c.l.bf16 %v3082
      %v3115 = vunpack.c.l.bf16 %v3083
      %v3116 = vunpack.c.l.bf16 %v3084
      %v3117 = vunpack.c.l.bf16 %v3085
      %v3118 = vunpack.c.l.bf16 %v3086
      %v3119 = vunpack.c.l.bf16 %v3087
      %v3120 = vunpack.c.l.bf16 %v3088
      %v3121 = vunpack.c.l.bf16 %v3089
      %v3122 = vunpack.c.l.bf16 %v3090
      %v3123 = vmax.f32 %v2900, 0.0
      %v3124 = vmax.f32 %v2903, 0.0
      %v3125 = vmax.f32 %v2908, 0.0
      %v3126 = vmax.f32 %v2911, 0.0
      %v3127 = vmax.f32 %v2916, 0.0
      %v3128 = vmax.f32 %v2919, 0.0
      %v3129 = vmax.f32 %v2924, 0.0
      %v3130 = vmax.f32 %v2927, 0.0
      %v3131 = vmax.f32 %v2932, 0.0
      %v3132 = vmax.f32 %v2935, 0.0
      %v3133 = vmax.f32 %v2940, 0.0
      %v3134 = vmax.f32 %v2943, 0.0
      %v3135 = vmax.f32 %v2948, 0.0
      %v3136 = vmax.f32 %v2951, 0.0
      %v3137 = vmax.f32 %v2956, 0.0
      %v3138 = vmax.f32 %v2959, 0.0
      %v3139 = vmax.f32 %v2964, 0.0
      %v3140 = vmax.f32 %v2967, 0.0
      %v3141 = vmax.f32 %v2972, 0.0
      %v3142 = vmax.f32 %v2975, 0.0
      %v3143 = vmax.f32 %v2980, 0.0
      %v3144 = vmax.f32 %v2983, 0.0
      %v3145 = vmax.f32 %v2988, 0.0
      %v3146 = vmax.f32 %v2991, 0.0
      %v3147 = vmax.f32 %v2996, 0.0
      %v3148 = vmax.f32 %v2999, 0.0
      %v3149 = vmax.f32 %v3004, 0.0
      %v3150 = vmax.f32 %v3007, 0.0
      %v3151 = vmax.f32 %v3012, 0.0
      %v3152 = vmax.f32 %v3015, 0.0
      %v3153 = vmax.f32 %v3020, 0.0
      %v3154 = vmax.f32 %v3023, 0.0
      %v3155 = vmul.f32 %v2900, %v3091
      %v3156 = vmul.f32 %v2903, %v3092
      %v3157 = vmul.f32 %v2908, %v3093
      %v3158 = vmul.f32 %v2911, %v3094
      %v3159 = vmul.f32 %v2916, %v3095
      %v3160 = vmul.f32 %v2919, %v3096
      %v3161 = vmul.f32 %v2924, %v3097
      %v3162 = vmul.f32 %v2927, %v3098
      %v3163 = vmul.f32 %v2932, %v3099
      %v3164 = vmul.f32 %v2935, %v3100
      %v3165 = vmul.f32 %v2940, %v3101
      %v3166 = vmul.f32 %v2943, %v3102
      %v3167 = vmul.f32 %v2948, %v3103
      %v3168 = vmul.f32 %v2951, %v3104
      %v3169 = vmul.f32 %v2956, %v3105
      %v3170 = vmul.f32 %v2959, %v3106
      %v3171 = vmul.f32 %v2964, %v3107
      %v3172 = vmul.f32 %v2967, %v3108
      %v3173 = vmul.f32 %v2972, %v3109
      %v3174 = vmul.f32 %v2975, %v3110
      %v3175 = vmul.f32 %v2980, %v3111
      %v3176 = vmul.f32 %v2983, %v3112
      %v3177 = vmul.f32 %v2988, %v3113
      %v3178 = vmul.f32 %v2991, %v3114
      %v3179 = vmul.f32 %v2996, %v3115
      %v3180 = vmul.f32 %v2999, %v3116
      %v3181 = vmul.f32 %v3004, %v3117
      %v3182 = vmul.f32 %v3007, %v3118
      %v3183 = vmul.f32 %v3012, %v3119
      %v3184 = vmul.f32 %v3015, %v3120
      %v3185 = vmul.f32 %v3020, %v3121
      %v3186 = vmul.f32 %v3023, %v3122
      %v3187 = vsub.f32 %v3123, %v3155
      %v3188 = vsub.f32 %v3124, %v3156
      %v3189 = vsub.f32 %v3125, %v3157
      %v3190 = vsub.f32 %v3126, %v3158
      %v3191 = vsub.f32 %v3127, %v3159
      %v3192 = vsub.f32 %v3128, %v3160
      %v3193 = vsub.f32 %v3129, %v3161
      %v3194 = vsub.f32 %v3130, %v3162
      %v3195 = vsub.f32 %v3131, %v3163
      %v3196 = vsub.f32 %v3132, %v3164
      %v3197 = vsub.f32 %v3133, %v3165
      %v3198 = vsub.f32 %v3134, %v3166
      %v3199 = vsub.f32 %v3135, %v3167
      %v3200 = vsub.f32 %v3136, %v3168
      %v3201 = vsub.f32 %v3137, %v3169
      %v3202 = vsub.f32 %v3138, %v3170
      %v3203 = vsub.f32 %v3139, %v3171
      %v3204 = vsub.f32 %v3140, %v3172
      %v3205 = vsub.f32 %v3141, %v3173
      %v3206 = vsub.f32 %v3142, %v3174
      %v3207 = vsub.f32 %v3143, %v3175
      %v3208 = vsub.f32 %v3144, %v3176
      %v3209 = vsub.f32 %v3145, %v3177
      %v3210 = vsub.f32 %v3146, %v3178
      %v3211 = vsub.f32 %v3147, %v3179
      %v3212 = vsub.f32 %v3148, %v3180
      %v3213 = vsub.f32 %v3149, %v3181
      %v3214 = vsub.f32 %v3150, %v3182
      %v3215 = vsub.f32 %v3151, %v3183
      %v3216 = vsub.f32 %v3152, %v3184
      %v3217 = vsub.f32 %v3153, %v3185
      %v3218 = vsub.f32 %v3154, %v3186
      %v3219 = vand.u32 2147483647, %v2900
      %v3220 = vand.u32 2147483647, %v2903
      %v3221 = vand.u32 2147483647, %v2908
      %v3222 = vand.u32 2147483647, %v2911
      %v3223 = vand.u32 2147483647, %v2916
      %v3224 = vand.u32 2147483647, %v2919
      %v3225 = vand.u32 2147483647, %v2924
      %v3226 = vand.u32 2147483647, %v2927
      %v3227 = vand.u32 2147483647, %v2932
      %v3228 = vand.u32 2147483647, %v2935
      %v3229 = vand.u32 2147483647, %v2940
      %v3230 = vand.u32 2147483647, %v2943
      %v3231 = vand.u32 2147483647, %v2948
      %v3232 = vand.u32 2147483647, %v2951
      %v3233 = vand.u32 2147483647, %v2956
      %v3234 = vand.u32 2147483647, %v2959
      %v3235 = vand.u32 2147483647, %v2964
      %v3236 = vand.u32 2147483647, %v2967
      %v3237 = vand.u32 2147483647, %v2972
      %v3238 = vand.u32 2147483647, %v2975
      %v3239 = vand.u32 2147483647, %v2980
      %v3240 = vand.u32 2147483647, %v2983
      %v3241 = vand.u32 2147483647, %v2988
      %v3242 = vand.u32 2147483647, %v2991
      %v3243 = vand.u32 2147483647, %v2996
      %v3244 = vand.u32 2147483647, %v2999
      %v3245 = vand.u32 2147483647, %v3004
      %v3246 = vand.u32 2147483647, %v3007
      %v3247 = vand.u32 2147483647, %v3012
      %v3248 = vand.u32 2147483647, %v3015
      %v3249 = vand.u32 2147483647, %v3020
      %v3250 = vand.u32 2147483647, %v3023
      %v3251 = vsub.f32 0.0, %v3219
      %v3252 = vsub.f32 0.0, %v3220
      %v3253 = vsub.f32 0.0, %v3221
      %v3254 = vsub.f32 0.0, %v3222
      %v3255 = vsub.f32 0.0, %v3223
      %v3256 = vsub.f32 0.0, %v3224
      %v3257 = vsub.f32 0.0, %v3225
      %v3258 = vsub.f32 0.0, %v3226
      %v3259 = vsub.f32 0.0, %v3227
      %v3260 = vsub.f32 0.0, %v3228
      %v3261 = vsub.f32 0.0, %v3229
      %v3262 = vsub.f32 0.0, %v3230
      %v3263 = vsub.f32 0.0, %v3231
      %v3264 = vsub.f32 0.0, %v3232
      %v3265 = vsub.f32 0.0, %v3233
      %v3266 = vsub.f32 0.0, %v3234
      %v3267 = vsub.f32 0.0, %v3235
      %v3268 = vsub.f32 0.0, %v3236
      %v3269 = vsub.f32 0.0, %v3237
      %v3270 = vsub.f32 0.0, %v3238
      %v3271 = vsub.f32 0.0, %v3239
      %v3272 = vsub.f32 0.0, %v3240
      %v3273 = vsub.f32 0.0, %v3241
      %v3274 = vsub.f32 0.0, %v3242
      %v3275 = vsub.f32 0.0, %v3243
      %v3276 = vsub.f32 0.0, %v3244
      %v3277 = vsub.f32 0.0, %v3245
      %v3278 = vsub.f32 0.0, %v3246
      %v3279 = vsub.f32 0.0, %v3247
      %v3280 = vsub.f32 0.0, %v3248
      %v3281 = vsub.f32 0.0, %v3249
      %v3282 = vsub.f32 0.0, %v3250
      %v3283 = vmul.f32 %v3251, 1.442695
      %v3284 = vpow.pop %v3283
      %v3285 = vmul.f32 %v3252, 1.442695
      %v3286 = vpow.pop %v3285
      %v3287 = vmul.f32 %v3253, 1.442695
      %v3288 = vpow.pop %v3287
      %v3289 = vmul.f32 %v3254, 1.442695
      %v3290 = vpow.pop %v3289
      %v3291 = vmul.f32 %v3255, 1.442695
      %v3292 = vpow.pop %v3291
      %v3293 = vmul.f32 %v3256, 1.442695
      %v3294 = vpow.pop %v3293
      %v3295 = vmul.f32 %v3257, 1.442695
      %v3296 = vpow.pop %v3295
      %v3297 = vmul.f32 %v3258, 1.442695
      %v3298 = vpow.pop %v3297
      %v3299 = vmul.f32 %v3259, 1.442695
      %v3300 = vpow.pop %v3299
      %v3301 = vmul.f32 %v3260, 1.442695
      %v3302 = vpow.pop %v3301
      %v3303 = vmul.f32 %v3261, 1.442695
      %v3304 = vpow.pop %v3303
      %v3305 = vmul.f32 %v3262, 1.442695
      %v3306 = vpow.pop %v3305
      %v3307 = vmul.f32 %v3263, 1.442695
      %v3308 = vpow.pop %v3307
      %v3309 = vmul.f32 %v3264, 1.442695
      %v3310 = vpow.pop %v3309
      %v3311 = vmul.f32 %v3265, 1.442695
      %v3312 = vpow.pop %v3311
      %v3313 = vmul.f32 %v3266, 1.442695
      %v3314 = vpow.pop %v3313
      %v3315 = vmul.f32 %v3267, 1.442695
      %v3316 = vpow.pop %v3315
      %v3317 = vmul.f32 %v3268, 1.442695
      %v3318 = vpow.pop %v3317
      %v3319 = vmul.f32 %v3269, 1.442695
      %v3320 = vpow.pop %v3319
      %v3321 = vmul.f32 %v3270, 1.442695
      %v3322 = vpow.pop %v3321
      %v3323 = vmul.f32 %v3271, 1.442695
      %v3324 = vpow.pop %v3323
      %v3325 = vmul.f32 %v3272, 1.442695
      %v3326 = vpow.pop %v3325
      %v3327 = vmul.f32 %v3273, 1.442695
      %v3328 = vpow.pop %v3327
      %v3329 = vmul.f32 %v3274, 1.442695
      %v3330 = vpow.pop %v3329
      %v3331 = vmul.f32 %v3275, 1.442695
      %v3332 = vpow.pop %v3331
      %v3333 = vmul.f32 %v3276, 1.442695
      %v3334 = vpow.pop %v3333
      %v3335 = vmul.f32 %v3277, 1.442695
      %v3336 = vpow.pop %v3335
      %v3337 = vmul.f32 %v3278, 1.442695
      %v3338 = vpow.pop %v3337
      %v3339 = vmul.f32 %v3279, 1.442695
      %v3340 = vpow.pop %v3339
      %v3341 = vmul.f32 %v3280, 1.442695
      %v3342 = vpow.pop %v3341
      %v3343 = vmul.f32 %v3281, 1.442695
      %v3344 = vpow.pop %v3343
      %v3345 = vmul.f32 %v3282, 1.442695
      %v3346 = vpow.pop %v3345
      %v3347 = vadd.f32 %v3284, 1.0
      %v3348 = vlog2.pop %v3347
      %v3349 = vmul.f32 %v3348, 0.6931472
      %v3350 = vmul.f32 -0.5, %v3284
      %v3351 = vadd.f32 %v3350, 1.0
      %v3352 = vmul.f32 %v3351, %v3284
      %v3353 = vand.u32 2147483647, %v3284
      %vm3354 = vcmp.lt.f32.partialorder %v3353, 0.0004427343
      %v3355 = vsel %vm3354, %v3352, %v3349
      %v3356 = vadd.f32 %v3286, 1.0
      %v3357 = vlog2.pop %v3356
      %v3358 = vmul.f32 %v3357, 0.6931472
      %v3359 = vmul.f32 -0.5, %v3286
      %v3360 = vadd.f32 %v3359, 1.0
      %v3361 = vmul.f32 %v3360, %v3286
      %v3362 = vand.u32 2147483647, %v3286
      %vm3363 = vcmp.lt.f32.partialorder %v3362, 0.0004427343
      %v3364 = vsel %vm3363, %v3361, %v3358
      %v3365 = vadd.f32 %v3288, 1.0
      %v3366 = vlog2.pop %v3365
      %v3367 = vmul.f32 %v3366, 0.6931472
      %v3368 = vmul.f32 -0.5, %v3288
      %v3369 = vadd.f32 %v3368, 1.0
      %v3370 = vmul.f32 %v3369, %v3288
      %v3371 = vand.u32 2147483647, %v3288
      %vm3372 = vcmp.lt.f32.partialorder %v3371, 0.0004427343
      %v3373 = vsel %vm3372, %v3370, %v3367
      %v3374 = vadd.f32 %v3290, 1.0
      %v3375 = vlog2.pop %v3374
      %v3376 = vmul.f32 %v3375, 0.6931472
      %v3377 = vmul.f32 -0.5, %v3290
      %v3378 = vadd.f32 %v3377, 1.0
      %v3379 = vmul.f32 %v3378, %v3290
      %v3380 = vand.u32 2147483647, %v3290
      %vm3381 = vcmp.lt.f32.partialorder %v3380, 0.0004427343
      %v3382 = vsel %vm3381, %v3379, %v3376
      %v3383 = vadd.f32 %v3292, 1.0
      %v3384 = vlog2.pop %v3383
      %v3385 = vmul.f32 %v3384, 0.6931472
      %v3386 = vmul.f32 -0.5, %v3292
      %v3387 = vadd.f32 %v3386, 1.0
      %v3388 = vmul.f32 %v3387, %v3292
      %v3389 = vand.u32 2147483647, %v3292
      %vm3390 = vcmp.lt.f32.partialorder %v3389, 0.0004427343
      %v3391 = vsel %vm3390, %v3388, %v3385
      %v3392 = vadd.f32 %v3294, 1.0
      %v3393 = vlog2.pop %v3392
      %v3394 = vmul.f32 %v3393, 0.6931472
      %v3395 = vmul.f32 -0.5, %v3294
      %v3396 = vadd.f32 %v3395, 1.0
      %v3397 = vmul.f32 %v3396, %v3294
      %v3398 = vand.u32 2147483647, %v3294
      %vm3399 = vcmp.lt.f32.partialorder %v3398, 0.0004427343
      %v3400 = vsel %vm3399, %v3397, %v3394
      %v3401 = vadd.f32 %v3296, 1.0
      %v3402 = vlog2.pop %v3401
      %v3403 = vmul.f32 %v3402, 0.6931472
      %v3404 = vmul.f32 -0.5, %v3296
      %v3405 = vadd.f32 %v3404, 1.0
      %v3406 = vmul.f32 %v3405, %v3296
      %v3407 = vand.u32 2147483647, %v3296
      %vm3408 = vcmp.lt.f32.partialorder %v3407, 0.0004427343
      %v3409 = vsel %vm3408, %v3406, %v3403
      %v3410 = vadd.f32 %v3298, 1.0
      %v3411 = vlog2.pop %v3410
      %v3412 = vmul.f32 %v3411, 0.6931472
      %v3413 = vmul.f32 -0.5, %v3298
      %v3414 = vadd.f32 %v3413, 1.0
      %v3415 = vmul.f32 %v3414, %v3298
      %v3416 = vand.u32 2147483647, %v3298
      %vm3417 = vcmp.lt.f32.partialorder %v3416, 0.0004427343
      %v3418 = vsel %vm3417, %v3415, %v3412
      %v3419 = vadd.f32 %v3300, 1.0
      %v3420 = vlog2.pop %v3419
      %v3421 = vmul.f32 %v3420, 0.6931472
      %v3422 = vmul.f32 -0.5, %v3300
      %v3423 = vadd.f32 %v3422, 1.0
      %v3424 = vmul.f32 %v3423, %v3300
      %v3425 = vand.u32 2147483647, %v3300
      %vm3426 = vcmp.lt.f32.partialorder %v3425, 0.0004427343
      %v3427 = vsel %vm3426, %v3424, %v3421
      %v3428 = vadd.f32 %v3302, 1.0
      %v3429 = vlog2.pop %v3428
      %v3430 = vmul.f32 %v3429, 0.6931472
      %v3431 = vmul.f32 -0.5, %v3302
      %v3432 = vadd.f32 %v3431, 1.0
      %v3433 = vmul.f32 %v3432, %v3302
      %v3434 = vand.u32 2147483647, %v3302
      %vm3435 = vcmp.lt.f32.partialorder %v3434, 0.0004427343
      %v3436 = vsel %vm3435, %v3433, %v3430
      %v3437 = vadd.f32 %v3304, 1.0
      %v3438 = vlog2.pop %v3437
      %v3439 = vmul.f32 %v3438, 0.6931472
      %v3440 = vmul.f32 -0.5, %v3304
      %v3441 = vadd.f32 %v3440, 1.0
      %v3442 = vmul.f32 %v3441, %v3304
      %v3443 = vand.u32 2147483647, %v3304
      %vm3444 = vcmp.lt.f32.partialorder %v3443, 0.0004427343
      %v3445 = vsel %vm3444, %v3442, %v3439
      %v3446 = vadd.f32 %v3306, 1.0
      %v3447 = vlog2.pop %v3446
      %v3448 = vmul.f32 %v3447, 0.6931472
      %v3449 = vmul.f32 -0.5, %v3306
      %v3450 = vadd.f32 %v3449, 1.0
      %v3451 = vmul.f32 %v3450, %v3306
      %v3452 = vand.u32 2147483647, %v3306
      %vm3453 = vcmp.lt.f32.partialorder %v3452, 0.0004427343
      %v3454 = vsel %vm3453, %v3451, %v3448
      %v3455 = vadd.f32 %v3308, 1.0
      %v3456 = vlog2.pop %v3455
      %v3457 = vmul.f32 %v3456, 0.6931472
      %v3458 = vmul.f32 -0.5, %v3308
      %v3459 = vadd.f32 %v3458, 1.0
      %v3460 = vmul.f32 %v3459, %v3308
      %v3461 = vand.u32 2147483647, %v3308
      %vm3462 = vcmp.lt.f32.partialorder %v3461, 0.0004427343
      %v3463 = vsel %vm3462, %v3460, %v3457
      %v3464 = vadd.f32 %v3310, 1.0
      %v3465 = vlog2.pop %v3464
      %v3466 = vmul.f32 %v3465, 0.6931472
      %v3467 = vmul.f32 -0.5, %v3310
      %v3468 = vadd.f32 %v3467, 1.0
      %v3469 = vmul.f32 %v3468, %v3310
      %v3470 = vand.u32 2147483647, %v3310
      %vm3471 = vcmp.lt.f32.partialorder %v3470, 0.0004427343
      %v3472 = vsel %vm3471, %v3469, %v3466
      %v3473 = vadd.f32 %v3312, 1.0
      %v3474 = vlog2.pop %v3473
      %v3475 = vmul.f32 %v3474, 0.6931472
      %v3476 = vmul.f32 -0.5, %v3312
      %v3477 = vadd.f32 %v3476, 1.0
      %v3478 = vmul.f32 %v3477, %v3312
      %v3479 = vand.u32 2147483647, %v3312
      %vm3480 = vcmp.lt.f32.partialorder %v3479, 0.0004427343
      %v3481 = vsel %vm3480, %v3478, %v3475
      %v3482 = vadd.f32 %v3314, 1.0
      %v3483 = vlog2.pop %v3482
      %v3484 = vmul.f32 %v3483, 0.6931472
      %v3485 = vmul.f32 -0.5, %v3314
      %v3486 = vadd.f32 %v3485, 1.0
      %v3487 = vmul.f32 %v3486, %v3314
      %v3488 = vand.u32 2147483647, %v3314
      %vm3489 = vcmp.lt.f32.partialorder %v3488, 0.0004427343
      %v3490 = vsel %vm3489, %v3487, %v3484
      %v3491 = vadd.f32 %v3316, 1.0
      %v3492 = vlog2.pop %v3491
      %v3493 = vmul.f32 %v3492, 0.6931472
      %v3494 = vmul.f32 -0.5, %v3316
      %v3495 = vadd.f32 %v3494, 1.0
      %v3496 = vmul.f32 %v3495, %v3316
      %v3497 = vand.u32 2147483647, %v3316
      %vm3498 = vcmp.lt.f32.partialorder %v3497, 0.0004427343
      %v3499 = vsel %vm3498, %v3496, %v3493
      %v3500 = vadd.f32 %v3318, 1.0
      %v3501 = vlog2.pop %v3500
      %v3502 = vmul.f32 %v3501, 0.6931472
      %v3503 = vmul.f32 -0.5, %v3318
      %v3504 = vadd.f32 %v3503, 1.0
      %v3505 = vmul.f32 %v3504, %v3318
      %v3506 = vand.u32 2147483647, %v3318
      %vm3507 = vcmp.lt.f32.partialorder %v3506, 0.0004427343
      %v3508 = vsel %vm3507, %v3505, %v3502
      %v3509 = vadd.f32 %v3320, 1.0
      %v3510 = vlog2.pop %v3509
      %v3511 = vmul.f32 %v3510, 0.6931472
      %v3512 = vmul.f32 -0.5, %v3320
      %v3513 = vadd.f32 %v3512, 1.0
      %v3514 = vmul.f32 %v3513, %v3320
      %v3515 = vand.u32 2147483647, %v3320
      %vm3516 = vcmp.lt.f32.partialorder %v3515, 0.0004427343
      %v3517 = vsel %vm3516, %v3514, %v3511
      %v3518 = vadd.f32 %v3322, 1.0
      %v3519 = vlog2.pop %v3518
      %v3520 = vmul.f32 %v3519, 0.6931472
      %v3521 = vmul.f32 -0.5, %v3322
      %v3522 = vadd.f32 %v3521, 1.0
      %v3523 = vmul.f32 %v3522, %v3322
      %v3524 = vand.u32 2147483647, %v3322
      %vm3525 = vcmp.lt.f32.partialorder %v3524, 0.0004427343
      %v3526 = vsel %vm3525, %v3523, %v3520
      %v3527 = vadd.f32 %v3324, 1.0
      %v3528 = vlog2.pop %v3527
      %v3529 = vmul.f32 %v3528, 0.6931472
      %v3530 = vmul.f32 -0.5, %v3324
      %v3531 = vadd.f32 %v3530, 1.0
      %v3532 = vmul.f32 %v3531, %v3324
      %v3533 = vand.u32 2147483647, %v3324
      %vm3534 = vcmp.lt.f32.partialorder %v3533, 0.0004427343
      %v3535 = vsel %vm3534, %v3532, %v3529
      %v3536 = vadd.f32 %v3326, 1.0
      %v3537 = vlog2.pop %v3536
      %v3538 = vmul.f32 %v3537, 0.6931472
      %v3539 = vmul.f32 -0.5, %v3326
      %v3540 = vadd.f32 %v3539, 1.0
      %v3541 = vmul.f32 %v3540, %v3326
      %v3542 = vand.u32 2147483647, %v3326
      %vm3543 = vcmp.lt.f32.partialorder %v3542, 0.0004427343
      %v3544 = vsel %vm3543, %v3541, %v3538
      %v3545 = vadd.f32 %v3328, 1.0
      %v3546 = vlog2.pop %v3545
      %v3547 = vmul.f32 %v3546, 0.6931472
      %v3548 = vmul.f32 -0.5, %v3328
      %v3549 = vadd.f32 %v3548, 1.0
      %v3550 = vmul.f32 %v3549, %v3328
      %v3551 = vand.u32 2147483647, %v3328
      %vm3552 = vcmp.lt.f32.partialorder %v3551, 0.0004427343
      %v3553 = vsel %vm3552, %v3550, %v3547
      %v3554 = vadd.f32 %v3330, 1.0
      %v3555 = vlog2.pop %v3554
      %v3556 = vmul.f32 %v3555, 0.6931472
      %v3557 = vmul.f32 -0.5, %v3330
      %v3558 = vadd.f32 %v3557, 1.0
      %v3559 = vmul.f32 %v3558, %v3330
      %v3560 = vand.u32 2147483647, %v3330
      %vm3561 = vcmp.lt.f32.partialorder %v3560, 0.0004427343
      %v3562 = vsel %vm3561, %v3559, %v3556
      %v3563 = vadd.f32 %v3332, 1.0
      %v3564 = vlog2.pop %v3563
      %v3565 = vmul.f32 %v3564, 0.6931472
      %v3566 = vmul.f32 -0.5, %v3332
      %v3567 = vadd.f32 %v3566, 1.0
      %v3568 = vmul.f32 %v3567, %v3332
      %v3569 = vand.u32 2147483647, %v3332
      %vm3570 = vcmp.lt.f32.partialorder %v3569, 0.0004427343
      %v3571 = vsel %vm3570, %v3568, %v3565
      %v3572 = vadd.f32 %v3334, 1.0
      %v3573 = vlog2.pop %v3572
      %v3574 = vmul.f32 %v3573, 0.6931472
      %v3575 = vmul.f32 -0.5, %v3334
      %v3576 = vadd.f32 %v3575, 1.0
      %v3577 = vmul.f32 %v3576, %v3334
      %v3578 = vand.u32 2147483647, %v3334
      %vm3579 = vcmp.lt.f32.partialorder %v3578, 0.0004427343
      %v3580 = vsel %vm3579, %v3577, %v3574
      %v3581 = vadd.f32 %v3336, 1.0
      %v3582 = vlog2.pop %v3581
      %v3583 = vmul.f32 %v3582, 0.6931472
      %v3584 = vmul.f32 -0.5, %v3336
      %v3585 = vadd.f32 %v3584, 1.0
      %v3586 = vmul.f32 %v3585, %v3336
      %v3587 = vand.u32 2147483647, %v3336
      %vm3588 = vcmp.lt.f32.partialorder %v3587, 0.0004427343
      %v3589 = vsel %vm3588, %v3586, %v3583
      %v3590 = vadd.f32 %v3338, 1.0
      %v3591 = vlog2.pop %v3590
      %v3592 = vmul.f32 %v3591, 0.6931472
      %v3593 = vmul.f32 -0.5, %v3338
      %v3594 = vadd.f32 %v3593, 1.0
      %v3595 = vmul.f32 %v3594, %v3338
      %v3596 = vand.u32 2147483647, %v3338
      %vm3597 = vcmp.lt.f32.partialorder %v3596, 0.0004427343
      %v3598 = vsel %vm3597, %v3595, %v3592
      %v3599 = vadd.f32 %v3340, 1.0
      %v3600 = vlog2.pop %v3599
      %v3601 = vmul.f32 %v3600, 0.6931472
      %v3602 = vmul.f32 -0.5, %v3340
      %v3603 = vadd.f32 %v3602, 1.0
      %v3604 = vmul.f32 %v3603, %v3340
      %v3605 = vand.u32 2147483647, %v3340
      %vm3606 = vcmp.lt.f32.partialorder %v3605, 0.0004427343
      %v3607 = vsel %vm3606, %v3604, %v3601
      %v3608 = vadd.f32 %v3342, 1.0
      %v3609 = vlog2.pop %v3608
      %v3610 = vmul.f32 %v3609, 0.6931472
      %v3611 = vmul.f32 -0.5, %v3342
      %v3612 = vadd.f32 %v3611, 1.0
      %v3613 = vmul.f32 %v3612, %v3342
      %v3614 = vand.u32 2147483647, %v3342
      %vm3615 = vcmp.lt.f32.partialorder %v3614, 0.0004427343
      %v3616 = vsel %vm3615, %v3613, %v3610
      %v3617 = vadd.f32 %v3344, 1.0
      %v3618 = vlog2.pop %v3617
      %v3619 = vmul.f32 %v3618, 0.6931472
      %v3620 = vmul.f32 -0.5, %v3344
      %v3621 = vadd.f32 %v3620, 1.0
      %v3622 = vmul.f32 %v3621, %v3344
      %v3623 = vand.u32 2147483647, %v3344
      %vm3624 = vcmp.lt.f32.partialorder %v3623, 0.0004427343
      %v3625 = vsel %vm3624, %v3622, %v3619
      %v3626 = vadd.f32 %v3346, 1.0
      %v3627 = vlog2.pop %v3626
      %v3628 = vmul.f32 %v3627, 0.6931472
      %v3629 = vmul.f32 -0.5, %v3346
      %v3630 = vadd.f32 %v3629, 1.0
      %v3631 = vmul.f32 %v3630, %v3346
      %v3632 = vand.u32 2147483647, %v3346
      %vm3633 = vcmp.lt.f32.partialorder %v3632, 0.0004427343
      %v3634 = vsel %vm3633, %v3631, %v3628
      %v3635 = vadd.f32 %v3187, %v3355
      %v3636 = vadd.f32 %v3188, %v3364
      %v3637 = vadd.f32 %v3189, %v3373
      %v3638 = vadd.f32 %v3190, %v3382
      %v3639 = vadd.f32 %v3191, %v3391
      %v3640 = vadd.f32 %v3192, %v3400
      %v3641 = vadd.f32 %v3193, %v3409
      %v3642 = vadd.f32 %v3194, %v3418
      %v3643 = vadd.f32 %v3195, %v3427
      %v3644 = vadd.f32 %v3196, %v3436
      %v3645 = vadd.f32 %v3197, %v3445
      %v3646 = vadd.f32 %v3198, %v3454
      %v3647 = vadd.f32 %v3199, %v3463
      %v3648 = vadd.f32 %v3200, %v3472
      %v3649 = vadd.f32 %v3201, %v3481
      %v3650 = vadd.f32 %v3202, %v3490
      %v3651 = vadd.f32 %v3203, %v3499
      %v3652 = vadd.f32 %v3204, %v3508
      %v3653 = vadd.f32 %v3205, %v3517
      %v3654 = vadd.f32 %v3206, %v3526
      %v3655 = vadd.f32 %v3207, %v3535
      %v3656 = vadd.f32 %v3208, %v3544
      %v3657 = vadd.f32 %v3209, %v3553
      %v3658 = vadd.f32 %v3210, %v3562
      %v3659 = vadd.f32 %v3211, %v3571
      %v3660 = vadd.f32 %v3212, %v3580
      %v3661 = vadd.f32 %v3213, %v3589
      %v3662 = vadd.f32 %v3214, %v3598
      %v3663 = vadd.f32 %v3215, %v3607
      %v3664 = vadd.f32 %v3216, %v3616
      %v3665 = vadd.f32 %v3217, %v3625
      %v3666 = vadd.f32 %v3218, %v3634
      %v3667 = vlaneseq
      %v3668 = vshrl.u32 %v3667, 7
      %v3669 = vadd.s32 %v3668, 8
      %v3670 = vadd.s32 %v3668, 16
      %v3671 = vadd.s32 %v3668, 24
      %v3672 = vadd.s32 %v3668, 32
      %v3673 = vadd.s32 %v3668, 40
      %v3674 = vadd.s32 %v3668, 48
      %v3675 = vadd.s32 %v3668, 56
      %v3676 = vadd.s32 %v3668, 64
      %v3677 = vadd.s32 %v3668, 72
      %v3678 = vadd.s32 %v3668, 80
      %v3679 = vadd.s32 %v3668, 88
      %v3680 = vadd.s32 %v3668, 96
      %v3681 = vadd.s32 %v3668, 104
      %v3682 = vadd.s32 %v3668, 112
      %v3683 = vadd.s32 %v3668, 120
      %v3684 = vadd.s32 %v3668, 128
      %v3685 = vadd.s32 %v3668, 136
      %v3686 = vadd.s32 %v3668, 144
      %v3687 = vadd.s32 %v3668, 152
      %v3688 = vadd.s32 %v3668, 160
      %v3689 = vadd.s32 %v3668, 168
      %v3690 = vadd.s32 %v3668, 176
      %v3691 = vadd.s32 %v3668, 184
      %v3692 = vadd.s32 %v3668, 192
      %v3693 = vadd.s32 %v3668, 200
      %v3694 = vadd.s32 %v3668, 208
      %v3695 = vadd.s32 %v3668, 216
      %v3696 = vadd.s32 %v3668, 224
      %v3697 = vadd.s32 %v3668, 232
      %v3698 = vadd.s32 %v3668, 240
      %v3699 = vadd.s32 %v3668, 248
      %s3700 = smul.u32 %s23, 256
      %v3701 = vstv %s3700
      %v3702 = vadd.s32 %v3668, %v3701
      %v3703 = vadd.s32 %v3669, %v3701
      %v3704 = vadd.s32 %v3670, %v3701
      %v3705 = vadd.s32 %v3671, %v3701
      %v3706 = vadd.s32 %v3672, %v3701
      %v3707 = vadd.s32 %v3673, %v3701
      %v3708 = vadd.s32 %v3674, %v3701
      %v3709 = vadd.s32 %v3675, %v3701
      %v3710 = vadd.s32 %v3676, %v3701
      %v3711 = vadd.s32 %v3677, %v3701
      %v3712 = vadd.s32 %v3678, %v3701
      %v3713 = vadd.s32 %v3679, %v3701
      %v3714 = vadd.s32 %v3680, %v3701
      %v3715 = vadd.s32 %v3681, %v3701
      %v3716 = vadd.s32 %v3682, %v3701
      %v3717 = vadd.s32 %v3683, %v3701
      %v3718 = vadd.s32 %v3684, %v3701
      %v3719 = vadd.s32 %v3685, %v3701
      %v3720 = vadd.s32 %v3686, %v3701
      %v3721 = vadd.s32 %v3687, %v3701
      %v3722 = vadd.s32 %v3688, %v3701
      %v3723 = vadd.s32 %v3689, %v3701
      %v3724 = vadd.s32 %v3690, %v3701
      %v3725 = vadd.s32 %v3691, %v3701
      %v3726 = vadd.s32 %v3692, %v3701
      %v3727 = vadd.s32 %v3693, %v3701
      %v3728 = vadd.s32 %v3694, %v3701
      %v3729 = vadd.s32 %v3695, %v3701
      %v3730 = vadd.s32 %v3696, %v3701
      %v3731 = vadd.s32 %v3697, %v3701
      %v3732 = vadd.s32 %v3698, %v3701
      %v3733 = vadd.s32 %v3699, %v3701
      %vm3734 = vcmp.lt.s32.totalorder %v3702, 512
      %vm3735 = vcmp.lt.s32.totalorder %v3703, 512
      %vm3736 = vcmp.lt.s32.totalorder %v3704, 512
      %vm3737 = vcmp.lt.s32.totalorder %v3705, 512
      %vm3738 = vcmp.lt.s32.totalorder %v3706, 512
      %vm3739 = vcmp.lt.s32.totalorder %v3707, 512
      %vm3740 = vcmp.lt.s32.totalorder %v3708, 512
      %vm3741 = vcmp.lt.s32.totalorder %v3709, 512
      %vm3742 = vcmp.lt.s32.totalorder %v3710, 512
      %vm3743 = vcmp.lt.s32.totalorder %v3711, 512
      %vm3744 = vcmp.lt.s32.totalorder %v3712, 512
      %vm3745 = vcmp.lt.s32.totalorder %v3713, 512
      %vm3746 = vcmp.lt.s32.totalorder %v3714, 512
      %vm3747 = vcmp.lt.s32.totalorder %v3715, 512
      %vm3748 = vcmp.lt.s32.totalorder %v3716, 512
      %vm3749 = vcmp.lt.s32.totalorder %v3717, 512
      %vm3750 = vcmp.lt.s32.totalorder %v3718, 512
      %vm3751 = vcmp.lt.s32.totalorder %v3719, 512
      %vm3752 = vcmp.lt.s32.totalorder %v3720, 512
      %vm3753 = vcmp.lt.s32.totalorder %v3721, 512
      %vm3754 = vcmp.lt.s32.totalorder %v3722, 512
      %vm3755 = vcmp.lt.s32.totalorder %v3723, 512
      %vm3756 = vcmp.lt.s32.totalorder %v3724, 512
      %vm3757 = vcmp.lt.s32.totalorder %v3725, 512
      %vm3758 = vcmp.lt.s32.totalorder %v3726, 512
      %vm3759 = vcmp.lt.s32.totalorder %v3727, 512
      %vm3760 = vcmp.lt.s32.totalorder %v3728, 512
      %vm3761 = vcmp.lt.s32.totalorder %v3729, 512
      %vm3762 = vcmp.lt.s32.totalorder %v3730, 512
      %vm3763 = vcmp.lt.s32.totalorder %v3731, 512
      %vm3764 = vcmp.lt.s32.totalorder %v3732, 512
      %vm3765 = vcmp.lt.s32.totalorder %v3733, 512
      %v3766 = vsel %vm3734, %v3635, 0.0
      %v3767 = vsel %vm3735, %v3636, 0.0
      %v3768 = vsel %vm3736, %v3637, 0.0
      %v3769 = vsel %vm3737, %v3638, 0.0
      %v3770 = vsel %vm3738, %v3639, 0.0
      %v3771 = vsel %vm3739, %v3640, 0.0
      %v3772 = vsel %vm3740, %v3641, 0.0
      %v3773 = vsel %vm3741, %v3642, 0.0
      %v3774 = vsel %vm3742, %v3643, 0.0
      %v3775 = vsel %vm3743, %v3644, 0.0
      %v3776 = vsel %vm3744, %v3645, 0.0
      %v3777 = vsel %vm3745, %v3646, 0.0
      %v3778 = vsel %vm3746, %v3647, 0.0
      %v3779 = vsel %vm3747, %v3648, 0.0
      %v3780 = vsel %vm3748, %v3649, 0.0
      %v3781 = vsel %vm3749, %v3650, 0.0
      %v3782 = vsel %vm3750, %v3651, 0.0
      %v3783 = vsel %vm3751, %v3652, 0.0
      %v3784 = vsel %vm3752, %v3653, 0.0
      %v3785 = vsel %vm3753, %v3654, 0.0
      %v3786 = vsel %vm3754, %v3655, 0.0
      %v3787 = vsel %vm3755, %v3656, 0.0
      %v3788 = vsel %vm3756, %v3657, 0.0
      %v3789 = vsel %vm3757, %v3658, 0.0
      %v3790 = vsel %vm3758, %v3659, 0.0
      %v3791 = vsel %vm3759, %v3660, 0.0
      %v3792 = vsel %vm3760, %v3661, 0.0
      %v3793 = vsel %vm3761, %v3662, 0.0
      %v3794 = vsel %vm3762, %v3663, 0.0
      %v3795 = vsel %vm3763, %v3664, 0.0
      %v3796 = vsel %vm3764, %v3665, 0.0
      %v3797 = vsel %vm3765, %v3666, 0.0
      %v3798 = vsel %vm3026, %v3766, 0.0
      %3799 = vadd.xlane.f32.xlu0 %v3798
      %v3800 = vpop.xlane.xlu0 %3799
      %v3801 = vsel %vm3026, %v3767, 0.0
      %3802 = vadd.xlane.f32.xlu0 %v3801
      %v3803 = vpop.xlane.xlu0 %3802
      %v3804 = vsel %vm3026, %v3768, 0.0
      %3805 = vadd.xlane.f32.xlu0 %v3804
      %v3806 = vpop.xlane.xlu0 %3805
      %v3807 = vsel %vm3026, %v3769, 0.0
      %3808 = vadd.xlane.f32.xlu0 %v3807
      %v3809 = vpop.xlane.xlu0 %3808
      %v3810 = vsel %vm3026, %v3770, 0.0
      %3811 = vadd.xlane.f32.xlu0 %v3810
      %v3812 = vpop.xlane.xlu0 %3811
      %v3813 = vsel %vm3026, %v3771, 0.0
      %3814 = vadd.xlane.f32.xlu0 %v3813
      %v3815 = vpop.xlane.xlu0 %3814
      %v3816 = vsel %vm3026, %v3772, 0.0
      %3817 = vadd.xlane.f32.xlu0 %v3816
      %v3818 = vpop.xlane.xlu0 %3817
      %v3819 = vsel %vm3026, %v3773, 0.0
      %3820 = vadd.xlane.f32.xlu0 %v3819
      %v3821 = vpop.xlane.xlu0 %3820
      %v3822 = vsel %vm3026, %v3774, 0.0
      %3823 = vadd.xlane.f32.xlu0 %v3822
      %v3824 = vpop.xlane.xlu0 %3823
      %v3825 = vsel %vm3026, %v3775, 0.0
      %3826 = vadd.xlane.f32.xlu0 %v3825
      %v3827 = vpop.xlane.xlu0 %3826
      %v3828 = vsel %vm3026, %v3776, 0.0
      %3829 = vadd.xlane.f32.xlu0 %v3828
      %v3830 = vpop.xlane.xlu0 %3829
      %v3831 = vsel %vm3026, %v3777, 0.0
      %3832 = vadd.xlane.f32.xlu0 %v3831
      %v3833 = vpop.xlane.xlu0 %3832
      %v3834 = vsel %vm3026, %v3778, 0.0
      %3835 = vadd.xlane.f32.xlu0 %v3834
      %v3836 = vpop.xlane.xlu0 %3835
      %v3837 = vsel %vm3026, %v3779, 0.0
      %3838 = vadd.xlane.f32.xlu0 %v3837
      %v3839 = vpop.xlane.xlu0 %3838
      %v3840 = vsel %vm3026, %v3780, 0.0
      %3841 = vadd.xlane.f32.xlu0 %v3840
      %v3842 = vpop.xlane.xlu0 %3841
      %v3843 = vsel %vm3026, %v3781, 0.0
      %3844 = vadd.xlane.f32.xlu0 %v3843
      %v3845 = vpop.xlane.xlu0 %3844
      %v3846 = vsel %vm3026, %v3782, 0.0
      %3847 = vadd.xlane.f32.xlu0 %v3846
      %v3848 = vpop.xlane.xlu0 %3847
      %v3849 = vsel %vm3026, %v3783, 0.0
      %3850 = vadd.xlane.f32.xlu0 %v3849
      %v3851 = vpop.xlane.xlu0 %3850
      %v3852 = vsel %vm3026, %v3784, 0.0
      %3853 = vadd.xlane.f32.xlu0 %v3852
      %v3854 = vpop.xlane.xlu0 %3853
      %v3855 = vsel %vm3026, %v3785, 0.0
      %3856 = vadd.xlane.f32.xlu0 %v3855
      %v3857 = vpop.xlane.xlu0 %3856
      %v3858 = vsel %vm3026, %v3786, 0.0
      %3859 = vadd.xlane.f32.xlu0 %v3858
      %v3860 = vpop.xlane.xlu0 %3859
      %v3861 = vsel %vm3026, %v3787, 0.0
      %3862 = vadd.xlane.f32.xlu0 %v3861
      %v3863 = vpop.xlane.xlu0 %3862
      %v3864 = vsel %vm3026, %v3788, 0.0
      %3865 = vadd.xlane.f32.xlu0 %v3864
      %v3866 = vpop.xlane.xlu0 %3865
      %v3867 = vsel %vm3026, %v3789, 0.0
      %3868 = vadd.xlane.f32.xlu0 %v3867
      %v3869 = vpop.xlane.xlu0 %3868
      %v3870 = vsel %vm3026, %v3790, 0.0
      %3871 = vadd.xlane.f32.xlu0 %v3870
      %v3872 = vpop.xlane.xlu0 %3871
      %v3873 = vsel %vm3026, %v3791, 0.0
      %3874 = vadd.xlane.f32.xlu0 %v3873
      %v3875 = vpop.xlane.xlu0 %3874
      %v3876 = vsel %vm3026, %v3792, 0.0
      %3877 = vadd.xlane.f32.xlu0 %v3876
      %v3878 = vpop.xlane.xlu0 %3877
      %v3879 = vsel %vm3026, %v3793, 0.0
      %3880 = vadd.xlane.f32.xlu0 %v3879
      %v3881 = vpop.xlane.xlu0 %3880
      %v3882 = vsel %vm3026, %v3794, 0.0
      %3883 = vadd.xlane.f32.xlu0 %v3882
      %v3884 = vpop.xlane.xlu0 %3883
      %v3885 = vsel %vm3026, %v3795, 0.0
      %3886 = vadd.xlane.f32.xlu0 %v3885
      %v3887 = vpop.xlane.xlu0 %3886
      %v3888 = vsel %vm3026, %v3796, 0.0
      %3889 = vadd.xlane.f32.xlu0 %v3888
      %v3890 = vpop.xlane.xlu0 %3889
      %v3891 = vsel %vm3026, %v3797, 0.0
      %3892 = vadd.xlane.f32.xlu0 %v3891
      %v3893 = vpop.xlane.xlu0 %3892
      %vm3894 = vcmask 7168
      %3895 = vst.msk [vmem:[%s427] sm:$0xff] %vm3894, %v3800
      %3896 = vst.msk [vmem:[%s427 + $0x8] sm:$0xff] %vm3894, %v3803
      %3897 = vst.msk [vmem:[%s427 + $0x10] sm:$0xff] %vm3894, %v3806
      %3898 = vst.msk [vmem:[%s427 + $0x18] sm:$0xff] %vm3894, %v3809
      %3899 = vst.msk [vmem:[%s427 + $0x20] sm:$0xff] %vm3894, %v3812
      %3900 = vst.msk [vmem:[%s427 + $0x28] sm:$0xff] %vm3894, %v3815
      %3901 = vst.msk [vmem:[%s427 + $0x30] sm:$0xff] %vm3894, %v3818
      %3902 = vst.msk [vmem:[%s427 + $0x38] sm:$0xff] %vm3894, %v3821
      %3903 = vst.msk [vmem:[%s427 + $0x40] sm:$0xff] %vm3894, %v3824
      %3904 = vst.msk [vmem:[%s427 + $0x48] sm:$0xff] %vm3894, %v3827
      %3905 = vst.msk [vmem:[%s427 + $0x50] sm:$0xff] %vm3894, %v3830
      %3906 = vst.msk [vmem:[%s427 + $0x58] sm:$0xff] %vm3894, %v3833
      %3907 = vst.msk [vmem:[%s427 + $0x60] sm:$0xff] %vm3894, %v3836
      %3908 = vst.msk [vmem:[%s427 + $0x68] sm:$0xff] %vm3894, %v3839
      %3909 = vst.msk [vmem:[%s427 + $0x70] sm:$0xff] %vm3894, %v3842
      %3910 = vst.msk [vmem:[%s427 + $0x78] sm:$0xff] %vm3894, %v3845
      %3911 = vst.msk [vmem:[%s427 + $0x80] sm:$0xff] %vm3894, %v3848
      %3912 = vst.msk [vmem:[%s427 + $0x88] sm:$0xff] %vm3894, %v3851
      %3913 = vst.msk [vmem:[%s427 + $0x90] sm:$0xff] %vm3894, %v3854
      %3914 = vst.msk [vmem:[%s427 + $0x98] sm:$0xff] %vm3894, %v3857
      %3915 = vst.msk [vmem:[%s427 + $0xa0] sm:$0xff] %vm3894, %v3860
      %3916 = vst.msk [vmem:[%s427 + $0xa8] sm:$0xff] %vm3894, %v3863
      %3917 = vst.msk [vmem:[%s427 + $0xb0] sm:$0xff] %vm3894, %v3866
      %3918 = vst.msk [vmem:[%s427 + $0xb8] sm:$0xff] %vm3894, %v3869
      %3919 = vst.msk [vmem:[%s427 + $0xc0] sm:$0xff] %vm3894, %v3872
      %3920 = vst.msk [vmem:[%s427 + $0xc8] sm:$0xff] %vm3894, %v3875
      %3921 = vst.msk [vmem:[%s427 + $0xd0] sm:$0xff] %vm3894, %v3878
      %3922 = vst.msk [vmem:[%s427 + $0xd8] sm:$0xff] %vm3894, %v3881
      %3923 = vst.msk [vmem:[%s427 + $0xe0] sm:$0xff] %vm3894, %v3884
      %3924 = vst.msk [vmem:[%s427 + $0xe8] sm:$0xff] %vm3894, %v3887
      %3925 = vst.msk [vmem:[%s427 + $0xf0] sm:$0xff] %vm3894, %v3890
      %3926 = vst.msk [vmem:[%s427 + $0xf8] sm:$0xff] %vm3894, %v3893
      %s3927 = smul.u32 32, %s23
      %p3928 = scmp.lt.s32.totalorder %s3927, 63
      %s3929 = scalar_select %p3928, %s3927, 63
      %s3930 = smul.addr %s3929, 8
      %s3931 = scalar_lea.vmem %s10, %s3930
      %s3932 = smul.u32 32, %s23
      %p3933 = scmp.lt.s32.totalorder %s3932, 63
      %s3934 = scalar_select %p3933, %s3932, 63
      %s3935 = smul.addr %s3934, 8
      %s3936 = scalar_lea.vmem %s11, %s3935
      // Predicated region
      $region61: #{tpu_custom_call.1} parent=59 // pred_check
        %p3937 = pneg %p261
      $region62: #{tpu_custom_call.1} parent=59 // pred_check_branch
        %3939 = sbr.rel (%p3937) target = $region64
      $region63: #{tpu_custom_call.1} parent=59 // pred_region
        %s3940 = smul.u32 32, %s23
      $region64: #{tpu_custom_call.1} parent=59 // pred_fallthru
        _
      // Predicated region
      $region65: #{tpu_custom_call.1} parent=59 // pred_check
        %p3941 = pneg %p287
      $region66: #{tpu_custom_call.1} parent=59 // pred_check_branch
        %3943 = sbr.rel (%p3941) target = $region68
      $region67: #{tpu_custom_call.1} parent=59 // pred_region
        %s3944 = smul.u32 32, %s23
      $region68: #{tpu_custom_call.1} parent=59 // pred_fallthru
        _
    $region60: #{tpu_custom_call.1} parent=5 // pred_fallthru
      _
    %p3945 = scmp.le.s32.totalorder 2, %s18
    // Predicated region
    $region69: #{tpu_custom_call.1} parent=5 // pred_check
      %p3946 = pneg %p3945
    $region70: #{tpu_custom_call.1} parent=5 // pred_check_branch
      %3948 = sbr.rel (%p3946) target = $region72
    $region71: #{tpu_custom_call.1} parent=5 // pred_region
      %s3949 = ssub.s32 %s18, 2
      // Predicated region
      $region73: #{tpu_custom_call.1} parent=71 // pred_check
        %p3950 = pneg %p267
      $region74: #{tpu_custom_call.1} parent=71 // pred_check_branch
        %3952 = sbr.rel (%p3950) target = $region76
      $region75: #{tpu_custom_call.1} parent=71 // pred_region
        %s3953 = smul.u32 32, %s24
        %p3954 = scmp.lt.s32.totalorder %s3953, 63
        %s3955 = scalar_select %p3954, %s3953, 63
        %s3956 = smul.addr %s3955, 8
        %s3957 = scalar_lea.vmem %s10, %s3956
      $region76: #{tpu_custom_call.1} parent=71 // pred_fallthru
        _
      // Predicated region
      $region77: #{tpu_custom_call.1} parent=71 // pred_check
        %p3958 = pneg %p293
      $region78: #{tpu_custom_call.1} parent=71 // pred_check_branch
        %3960 = sbr.rel (%p3958) target = $region80
      $region79: #{tpu_custom_call.1} parent=71 // pred_region
        %s3961 = smul.u32 32, %s24
        %p3962 = scmp.lt.s32.totalorder %s3961, 63
        %s3963 = scalar_select %p3962, %s3961, 63
        %s3964 = smul.addr %s3963, 8
        %s3965 = scalar_lea.vmem %s11, %s3964
      $region80: #{tpu_custom_call.1} parent=71 // pred_fallthru
        _
    $region72: #{tpu_custom_call.1} parent=5 // pred_fallthru
      _
  $region6: #{tpu_custom_call.1} parent=0 // loop_footer
    %s22 = sadd.s32 1, %s18
  $region7: #{tpu_custom_call.1} parent=0 // loop_footer_branch
    %17 = sbr.rel target = $region3
  $region8: #{tpu_custom_call.1} parent=0 // loop_exit
    _

</llo_original>
